<compile_context>
chip_gen: v7x
topology: tpu7x:2x2x1
jax: 0.10.0
libtpu: 0.0.40
codegen_flags: <defaults>
</compile_context>

<pallas_src>
import functools

import jax
import jax.numpy as jnp
from jax.experimental import pallas as pl
from jax.experimental.pallas import tpu as pltpu

C = 64   # hidden channels
KS = 3   # conv kernel size


def simple_cnn_kernel(x_ref, nf_ref, nl_ref, w1_ref, b1_ref, w2_ref, b2_ref,
                      w3_ref, b3_ref, o_ref, h1cat_ref, *, tb, length,
                      precision):
    total = tb * length

    # Weights / biases / masks (constant index_map -> resident across steps).
    w1 = w1_ref[...]          # (C, 3)     w1[o, k] = conv1.weight[o, 0, k]
    b1 = b1_ref[...]          # (C, 1)
    w2 = w2_ref[...]          # (C, 3*C)   w2[o, k*C + i] = conv2.weight[o, i, k]
    b2 = b2_ref[...]          # (C, 1)
    w3 = w3_ref[...]          # (3, C)     w3[k, i]       = conv3.weight[0, i, k]
    b3 = b3_ref[0]            # scalar from SMEM
    not_first = nf_ref[...]   # (1, total) 0.0 at per-sample position 0
    not_last = nl_ref[...]    # (1, total) 0.0 at per-sample position L-1

    # tb samples packed side-by-side along lanes: (1, tb*length).
    x = x_ref[0]

    def shift_prev(a):
        # out[:, l] = a[:, l-1] within each packed sample; 0 at l == 0.
        return pltpu.roll(a, shift=1, axis=1) * not_first

    def shift_next(a):
        # out[:, l] = a[:, l+1] within each packed sample; 0 at l == L-1.
        # (total-1 rotate == a single -1 lane rotate; kept non-negative.)
        return pltpu.roll(a, shift=total - 1, axis=1) * not_last

    # conv1 (1 -> C): three rank-1 VPU broadcasts.
    h1 = (w1[:, 0:1] * shift_prev(x)
          + w1[:, 1:2] * x
          + w1[:, 2:3] * shift_next(x)
          + b1)
    h1 = jnp.maximum(h1, 0.0)                      # (C, tb*L)

    # conv2 (C -> C): tap-fused MXU matmul, M=C, K=3*C, N=tb*L.
    # The three shifted planes go into a persistent VMEM scratch (stable
    # layout, no fresh concat allocation per step).
    h1cat_ref[pl.ds(0, C), :] = shift_prev(h1)
    h1cat_ref[pl.ds(C, C), :] = h1
    h1cat_ref[pl.ds(2 * C, C), :] = shift_next(h1)
    h2 = jnp.dot(w2, h1cat_ref[...],
                 preferred_element_type=jnp.float32,
                 precision=precision) + b2
    h2 = jnp.maximum(h2, 0.0)                      # (C, tb*L)

    # conv3 (C -> 1): contract the UN-shifted h2 with the 3 tap rows, then
    # shift the (1, N) partial results (no (192, N) h2cat, no (64, N) rolls).
    t = jnp.dot(w3, h2, preferred_element_type=jnp.float32,
                precision=precision)               # (3, tb*L)
    y = shift_prev(t[0:1, :]) + t[1:2, :] + shift_next(t[2:3, :]) + b3

    o_ref[0] = y.astype(o_ref.dtype)               # (1, tb*L) lane-dense store


def _choose_tb(B, L):
    """Samples packed per grid step: big N-stream, v7x-safe VMEM, grid >= 2."""
    vmem_budget = 40 * 1024 * 1024     # live f32 temporaries budget (v7x-safe)
    bytes_per_col = 350 * 4            # x+h1+h1cat+h2+t+shifts per lane column
    max_cols = max(L, vmem_budget // bytes_per_col)
    target_cols = 8192                 # ~4-8K columns per step
    tb = max(1, min(target_cols, max_cols) // L)
    if B >= 2:
        # Keep >= 2 grid steps so both v7x TensorCores get work.
        tb = min(tb, (B + 1) // 2)
    return max(1, min(tb, B))


def simple_cnn_pallas(x_ncl, params, *, tb=None):
    """x_ncl: (B, 1, L) float32 (PyTorch NCL). Returns (B, 1, L) float32."""
    w1, b1, w2, b2, w3, b3 = params
    B, cin, L = x_ncl.shape
    assert cin == 1

    if tb is None:
        tb = _choose_tb(B, L)
    pad = (-B) % tb
    if pad:
        x_ncl = jnp.concatenate(
            [x_ncl, jnp.zeros((pad, 1, L), x_ncl.dtype)], axis=0)
    bp = B + pad
    g = bp // tb
    total = tb * L

    # Free row-major reshape: pack tb samples along the last (lane) axis.
    x_packed = x_ncl.reshape(g, 1, total)

    # Per-sample edge masks, computed once in the wrapper (hoisted out of the
    # kernel; constant index_map keeps them resident across grid steps).
    pos = jnp.arange(total, dtype=jnp.int32) % L
    not_first = (pos != 0).astype(jnp.float32).reshape(1, total)
    not_last = (pos != L - 1).astype(jnp.float32).reshape(1, total)

    const = lambda shape: pl.BlockSpec(shape, lambda b: (0,) * len(shape))
    grid_spec = pltpu.PrefetchScalarGridSpec(
        num_scalar_prefetch=0,
        grid=(g,),
        in_specs=[
            pl.BlockSpec((1, 1, total), lambda b: (b, 0, 0)),   # x (packed)
            const((1, total)),                                  # not_first
            const((1, total)),                                  # not_last
            const((C, KS)),                                     # w1
            const((C, 1)),                                      # b1
            const((C, KS * C)),                                 # w2 (tap-fused)
            const((C, 1)),                                      # b2
            const((KS, C)),                                     # w3 (tap rows)
            pl.BlockSpec(memory_space=pltpu.MemorySpace.SMEM),  # b3 scalar
        ],
        out_specs=pl.BlockSpec((1, 1, total), lambda b: (b, 0, 0)),
        scratch_shapes=[pltpu.VMEM((KS * C, total), jnp.float32)],  # h1cat
    )

    def run(precision):
        kern = functools.partial(simple_cnn_kernel, tb=tb, length=L,
                                 precision=precision)
        return pl.pallas_call(
            kern,
            out_shape=jax.ShapeDtypeStruct((g, 1, total), jnp.float32),
            grid_spec=grid_spec,
            compiler_params=pltpu.CompilerParams(
                dimension_semantics=("parallel",),
                vmem_limit_bytes=48 * 1024 * 1024),
        )(x_packed, not_first, not_last, w1, b1, w2, b2, w3, b3)

    try:
        # Pin the MXU contraction precision (fp32) explicitly.
        out = run(jax.lax.Precision.HIGHEST)
    except Exception:
        # Mosaic versions without an explicit dot-precision attribute: the
        # default f32 matmul path is already fp32-accurate at these sizes.
        out = run(None)
    return out.reshape(bp, 1, L)[:B]


def init_torch_style_params(key):
    """Deterministic synthetic weights with the PyTorch module's shapes."""
    k1, k2, k3, k4, k5, k6 = jax.random.split(key, 6)
    conv1_w = jax.random.uniform(k1, (C, 1, KS), jnp.float32, -0.5, 0.5)
    conv1_b = jax.random.uniform(k2, (C,), jnp.float32, -0.5, 0.5)
    conv2_w = jax.random.uniform(k3, (C, C, KS), jnp.float32,
                                 -1 / jnp.sqrt(C * KS), 1 / jnp.sqrt(C * KS))
    conv2_b = jax.random.uniform(k4, (C,), jnp.float32, -0.1, 0.1)
    conv3_w = jax.random.uniform(k5, (1, C, KS), jnp.float32,
                                 -1 / jnp.sqrt(C * KS), 1 / jnp.sqrt(C * KS))
    conv3_b = jax.random.uniform(k6, (1,), jnp.float32, -0.1, 0.1)
    return conv1_w, conv1_b, conv2_w, conv2_b, conv3_w, conv3_b


def pack_params(torch_params):
    """Torch-layout conv weights -> kernel layout (tap-fused, (C, L)-friendly)."""
    c1w, c1b, c2w, c2b, c3w, c3b = torch_params
    w1 = c1w[:, 0, :]                                        # (C, 3)
    b1 = c1b.reshape(C, 1)
    w2 = jnp.transpose(c2w, (0, 2, 1)).reshape(C, KS * C)    # [o, k*C + i]
    b2 = c2b.reshape(C, 1)
    w3 = jnp.transpose(c3w[0], (1, 0))                       # (3, C): [k, i]
    b3 = c3b.reshape(1)                                      # scalar (SMEM)
    return w1, b1, w2, b2, w3, b3


def reference_forward(x_ncl, torch_params):
    """Pure-JAX reference of the PyTorch forward (NCL, cross-correlation)."""
    c1w, c1b, c2w, c2b, c3w, c3b = torch_params

    def conv1d(x, w, b):  # x: (B, Cin, L), w: (Cout, Cin, 3), pad=1
        y = jax.lax.conv_general_dilated(
            x, w, window_strides=(1,), padding=((1, 1),),
            dimension_numbers=("NCH", "OIH", "NCH"),
            precision=jax.lax.Precision.HIGHEST)
        return y + b[None, :, None]

    h = jax.nn.relu(conv1d(x_ncl, c1w, c1b))
    h = jax.nn.relu(conv1d(h, c2w, c2b))
    return conv1d(h, c3w, c3b)


if __name__ == "__main__":
    B, L = 2, 128
    key = jax.random.PRNGKey(0)
    kx, kp = jax.random.split(key)

    # PyTorch-style input: (batch, channels=1, length)
    x_ncl = jax.random.normal(kx, (B, 1, L), jnp.float32)

    torch_params = init_torch_style_params(kp)
    params = pack_params(torch_params)

    out = simple_cnn_pallas(x_ncl, params)
    out = jax.block_until_ready(out)

    ref = reference_forward(x_ncl, torch_params)
    assert out.shape == ref.shape == (B, 1, L)
    max_err = float(jnp.max(jnp.abs(out - ref)))
    assert jnp.allclose(out, ref, atol=1e-4, rtol=1e-4), max_err

    print("KERNEL_OK")
</pallas_src>

<mosaic_0001>
module attributes {stable_mosaic.version = 11 : i64} {
  func.func @simple_cnn_kernel(%arg0: i32, %arg1: memref<1x1x128xf32, #tpu.memory_space<vmem>>, %arg2: memref<1x128xf32, #tpu.memory_space<vmem>>, %arg3: memref<1x128xf32, #tpu.memory_space<vmem>>, %arg4: memref<64x3xf32, #tpu.memory_space<vmem>>, %arg5: memref<64x1xf32, #tpu.memory_space<vmem>>, %arg6: memref<64x192xf32, #tpu.memory_space<vmem>>, %arg7: memref<64x1xf32, #tpu.memory_space<vmem>>, %arg8: memref<3x64xf32, #tpu.memory_space<vmem>>, %arg9: memref<1xf32, #tpu.memory_space<smem>>, %arg10: memref<1x1x128xf32, #tpu.memory_space<vmem>>, %arg11: memref<192x128xf32, #tpu.memory_space<vmem>>) attributes {dimension_semantics = [#tpu.dimension_semantics<parallel>], iteration_bounds = array<i64: 2>, scalar_prefetch = 0 : i64, scratch_operands = 1 : i64, tpu.core_type = #tpu.core_type<tc>, window_params = [{transform_indices = @transform_0, window_bounds = array<i64: 1, 1, 128>}, {pipeline_mode = #tpu.pipeline_mode<synchronous>, transform_indices = @transform_1, window_bounds = array<i64: 1, 128>}, {pipeline_mode = #tpu.pipeline_mode<synchronous>, transform_indices = @transform_2, window_bounds = array<i64: 1, 128>}, {pipeline_mode = #tpu.pipeline_mode<synchronous>, transform_indices = @transform_3, window_bounds = array<i64: 64, 3>}, {pipeline_mode = #tpu.pipeline_mode<synchronous>, transform_indices = @transform_4, window_bounds = array<i64: 64, 1>}, {pipeline_mode = #tpu.pipeline_mode<synchronous>, transform_indices = @transform_5, window_bounds = array<i64: 64, 192>}, {pipeline_mode = #tpu.pipeline_mode<synchronous>, transform_indices = @transform_6, window_bounds = array<i64: 64, 1>}, {pipeline_mode = #tpu.pipeline_mode<synchronous>, transform_indices = @transform_7, window_bounds = array<i64: 3, 64>}, {transform_indices = @transform_8, window_bounds = array<i64: 1>}, {transform_indices = @transform_9, window_bounds = array<i64: 1, 1, 128>}]} {
    %c0 = arith.constant 0 : index
    %c0_0 = arith.constant 0 : index
    %0 = vector.load %arg4[%c0, %c0_0] : memref<64x3xf32, #tpu.memory_space<vmem>>, vector<64x3xf32>
    %c0_1 = arith.constant 0 : index
    %c0_2 = arith.constant 0 : index
    %1 = vector.load %arg5[%c0_1, %c0_2] : memref<64x1xf32, #tpu.memory_space<vmem>>, vector<64x1xf32>
    %c0_3 = arith.constant 0 : index
    %c0_4 = arith.constant 0 : index
    %2 = vector.load %arg6[%c0_3, %c0_4] : memref<64x192xf32, #tpu.memory_space<vmem>>, vector<64x192xf32>
    %c0_5 = arith.constant 0 : index
    %c0_6 = arith.constant 0 : index
    %3 = vector.load %arg7[%c0_5, %c0_6] : memref<64x1xf32, #tpu.memory_space<vmem>>, vector<64x1xf32>
    %c0_7 = arith.constant 0 : index
    %c0_8 = arith.constant 0 : index
    %4 = vector.load %arg8[%c0_7, %c0_8] : memref<3x64xf32, #tpu.memory_space<vmem>>, vector<3x64xf32>
    %c0_9 = arith.constant 0 : index
    %5 = memref.load %arg9[%c0_9] : memref<1xf32, #tpu.memory_space<smem>>
    %c0_10 = arith.constant 0 : index
    %c0_11 = arith.constant 0 : index
    %6 = vector.load %arg2[%c0_10, %c0_11] : memref<1x128xf32, #tpu.memory_space<vmem>>, vector<1x128xf32>
    %c0_12 = arith.constant 0 : index
    %c0_13 = arith.constant 0 : index
    %7 = vector.load %arg3[%c0_12, %c0_13] : memref<1x128xf32, #tpu.memory_space<vmem>>, vector<1x128xf32>
    %c0_14 = arith.constant 0 : index
    %c0_15 = arith.constant 0 : index
    %c0_16 = arith.constant 0 : index
    %8 = vector.load %arg1[%c0_14, %c0_15, %c0_16] : memref<1x1x128xf32, #tpu.memory_space<vmem>>, vector<1x1x128xf32>
    %9 = vector.shape_cast %8 : vector<1x1x128xf32> to vector<1x128xf32>
    %10 = vector.extract_strided_slice %0 {offsets = [0, 0], sizes = [64, 1], strides = [1, 1]} : vector<64x3xf32> to vector<64x1xf32>
    %c1_i32 = arith.constant 1 : i32
    %11 = tpu.dynamic_rotate %9 by %c1_i32 dim 1 : vector<1x128xf32>, i32 -> vector<1x128xf32>
    %12 = arith.mulf %11, %6 : vector<1x128xf32>
    %13 = vector.broadcast %10 : vector<64x1xf32> to vector<64x128xf32>
    %14 = vector.broadcast %12 : vector<1x128xf32> to vector<64x128xf32>
    %15 = arith.mulf %13, %14 : vector<64x128xf32>
    %16 = vector.extract_strided_slice %0 {offsets = [0, 1], sizes = [64, 1], strides = [1, 1]} : vector<64x3xf32> to vector<64x1xf32>
    %17 = vector.broadcast %16 : vector<64x1xf32> to vector<64x128xf32>
    %18 = vector.broadcast %9 : vector<1x128xf32> to vector<64x128xf32>
    %19 = arith.mulf %17, %18 : vector<64x128xf32>
    %20 = arith.addf %15, %19 : vector<64x128xf32>
    %21 = vector.extract_strided_slice %0 {offsets = [0, 2], sizes = [64, 1], strides = [1, 1]} : vector<64x3xf32> to vector<64x1xf32>
    %c127_i32 = arith.constant 127 : i32
    %22 = tpu.dynamic_rotate %9 by %c127_i32 dim 1 : vector<1x128xf32>, i32 -> vector<1x128xf32>
    %23 = arith.mulf %22, %7 : vector<1x128xf32>
    %24 = vector.broadcast %21 : vector<64x1xf32> to vector<64x128xf32>
    %25 = vector.broadcast %23 : vector<1x128xf32> to vector<64x128xf32>
    %26 = arith.mulf %24, %25 : vector<64x128xf32>
    %27 = arith.addf %20, %26 : vector<64x128xf32>
    %28 = vector.broadcast %1 : vector<64x1xf32> to vector<64x128xf32>
    %29 = arith.addf %27, %28 : vector<64x128xf32>
    %cst = arith.constant 0.000000e+00 : f32
    %30 = vector.broadcast %cst : f32 to vector<64x128xf32>
    %31 = arith.maximumf %29, %30 : vector<64x128xf32>
    %c1_i32_17 = arith.constant 1 : i32
    %32 = tpu.dynamic_rotate %31 by %c1_i32_17 dim 1 : vector<64x128xf32>, i32 -> vector<64x128xf32>
    %33 = vector.broadcast %6 : vector<1x128xf32> to vector<64x128xf32>
    %34 = arith.mulf %32, %33 : vector<64x128xf32>
    %c0_18 = arith.constant 0 : index
    %c0_19 = arith.constant 0 : index
    %35 = vector.load %arg11[%c0_18, %c0_19] : memref<192x128xf32, #tpu.memory_space<vmem>>, vector<64x128xf32>
    tpu.vector_store %arg11[%c0_18, %c0_19], %34 {strides = array<i32>} : memref<192x128xf32, #tpu.memory_space<vmem>>, vector<64x128xf32>,
    %c64 = arith.constant 64 : index
    %c0_20 = arith.constant 0 : index
    %36 = vector.load %arg11[%c64, %c0_20] : memref<192x128xf32, #tpu.memory_space<vmem>>, vector<64x128xf32>
    tpu.vector_store %arg11[%c64, %c0_20], %31 {strides = array<i32>} : memref<192x128xf32, #tpu.memory_space<vmem>>, vector<64x128xf32>,
    %c127_i32_21 = arith.constant 127 : i32
    %37 = tpu.dynamic_rotate %31 by %c127_i32_21 dim 1 : vector<64x128xf32>, i32 -> vector<64x128xf32>
    %38 = vector.broadcast %7 : vector<1x128xf32> to vector<64x128xf32>
    %39 = arith.mulf %37, %38 : vector<64x128xf32>
    %c128 = arith.constant 128 : index
    %c0_22 = arith.constant 0 : index
    %40 = vector.load %arg11[%c128, %c0_22] : memref<192x128xf32, #tpu.memory_space<vmem>>, vector<64x128xf32>
    tpu.vector_store %arg11[%c128, %c0_22], %39 {strides = array<i32>} : memref<192x128xf32, #tpu.memory_space<vmem>>, vector<64x128xf32>,
    %c0_23 = arith.constant 0 : index
    %c0_24 = arith.constant 0 : index
    %41 = vector.load %arg11[%c0_23, %c0_24] : memref<192x128xf32, #tpu.memory_space<vmem>>, vector<192x128xf32>
    %cst_25 = arith.constant dense<0.000000e+00> : vector<64x128xf32>
    %42 = tpu.matmul %2, %41, %cst_25 {dimension_numbers = #tpu.dot_dimension_numbers<[1], [0], [0], [1], [0, 0, 1, 1], [], []>, precision = #tpu.contract_precision<fp32>} : vector<64x192xf32>, vector<192x128xf32>, vector<64x128xf32> -> vector<64x128xf32>
    %43 = vector.broadcast %3 : vector<64x1xf32> to vector<64x128xf32>
    %44 = arith.addf %42, %43 : vector<64x128xf32>
    %cst_26 = arith.constant 0.000000e+00 : f32
    %45 = vector.broadcast %cst_26 : f32 to vector<64x128xf32>
    %46 = arith.maximumf %44, %45 : vector<64x128xf32>
    %cst_27 = arith.constant dense<0.000000e+00> : vector<3x128xf32>
    %47 = tpu.matmul %4, %46, %cst_27 {dimension_numbers = #tpu.dot_dimension_numbers<[1], [0], [0], [1], [0, 0, 1, 1], [], []>, precision = #tpu.contract_precision<fp32>} : vector<3x64xf32>, vector<64x128xf32>, vector<3x128xf32> -> vector<3x128xf32>
    %48 = vector.extract_strided_slice %47 {offsets = [0, 0], sizes = [1, 128], strides = [1, 1]} : vector<3x128xf32> to vector<1x128xf32>
    %c1_i32_28 = arith.constant 1 : i32
    %49 = tpu.dynamic_rotate %48 by %c1_i32_28 dim 1 : vector<1x128xf32>, i32 -> vector<1x128xf32>
    %50 = arith.mulf %49, %6 : vector<1x128xf32>
    %51 = vector.extract_strided_slice %47 {offsets = [1, 0], sizes = [1, 128], strides = [1, 1]} : vector<3x128xf32> to vector<1x128xf32>
    %52 = arith.addf %50, %51 : vector<1x128xf32>
    %53 = vector.extract_strided_slice %47 {offsets = [2, 0], sizes = [1, 128], strides = [1, 1]} : vector<3x128xf32> to vector<1x128xf32>
    %c127_i32_29 = arith.constant 127 : i32
    %54 = tpu.dynamic_rotate %53 by %c127_i32_29 dim 1 : vector<1x128xf32>, i32 -> vector<1x128xf32>
    %55 = arith.mulf %54, %7 : vector<1x128xf32>
    %56 = arith.addf %52, %55 : vector<1x128xf32>
    %57 = vector.broadcast %5 : f32 to vector<1x128xf32>
    %58 = arith.addf %56, %57 : vector<1x128xf32>
    %c0_30 = arith.constant 0 : index
    %c0_31 = arith.constant 0 : index
    %c0_32 = arith.constant 0 : index
    %59 = vector.load %arg10[%c0_30, %c0_31, %c0_32] : memref<1x1x128xf32, #tpu.memory_space<vmem>>, vector<1x1x128xf32>
    %60 = vector.shape_cast %59 : vector<1x1x128xf32> to vector<1x128xf32>
    %61 = vector.shape_cast %58 : vector<1x128xf32> to vector<1x1x128xf32>
    tpu.vector_store %arg10[%c0_30, %c0_31, %c0_32], %61 {strides = array<i32>} : memref<1x1x128xf32, #tpu.memory_space<vmem>>, vector<1x1x128xf32>,
    return
  }
  func.func @transform_0(%arg0: i32) -> (i32, i32, i32) {
    %c0_i32 = arith.constant 0 : i32
    %c0_i32_0 = arith.constant 0 : i32
    %c0_i32_1 = arith.constant 0 : i32
    return %arg0, %c0_i32, %c0_i32_0 : i32, i32, i32
  }
  func.func @transform_1(%arg0: i32) -> (i32, i32) {
    %c0_i32 = arith.constant 0 : i32
    %c0_i32_0 = arith.constant 0 : i32
    %c0_i32_1 = arith.constant 0 : i32
    return %c0_i32, %c0_i32_0 : i32, i32
  }
  func.func @transform_2(%arg0: i32) -> (i32, i32) {
    %c0_i32 = arith.constant 0 : i32
    %c0_i32_0 = arith.constant 0 : i32
    %c0_i32_1 = arith.constant 0 : i32
    return %c0_i32, %c0_i32_0 : i32, i32
  }
  func.func @transform_3(%arg0: i32) -> (i32, i32) {
    %c0_i32 = arith.constant 0 : i32
    %c0_i32_0 = arith.constant 0 : i32
    %c0_i32_1 = arith.constant 0 : i32
    return %c0_i32, %c0_i32_0 : i32, i32
  }
  func.func @transform_4(%arg0: i32) -> (i32, i32) {
    %c0_i32 = arith.constant 0 : i32
    %c0_i32_0 = arith.constant 0 : i32
    %c0_i32_1 = arith.constant 0 : i32
    return %c0_i32, %c0_i32_0 : i32, i32
  }
  func.func @transform_5(%arg0: i32) -> (i32, i32) {
    %c0_i32 = arith.constant 0 : i32
    %c0_i32_0 = arith.constant 0 : i32
    %c0_i32_1 = arith.constant 0 : i32
    return %c0_i32, %c0_i32_0 : i32, i32
  }
  func.func @transform_6(%arg0: i32) -> (i32, i32) {
    %c0_i32 = arith.constant 0 : i32
    %c0_i32_0 = arith.constant 0 : i32
    %c0_i32_1 = arith.constant 0 : i32
    return %c0_i32, %c0_i32_0 : i32, i32
  }
  func.func @transform_7(%arg0: i32) -> (i32, i32) {
    %c0_i32 = arith.constant 0 : i32
    %c0_i32_0 = arith.constant 0 : i32
    %c0_i32_1 = arith.constant 0 : i32
    return %c0_i32, %c0_i32_0 : i32, i32
  }
  func.func @transform_8(%arg0: i32) -> i32 {
    %c0_i32 = arith.constant 0 : i32
    %c0_i32_0 = arith.constant 0 : i32
    return %c0_i32 : i32
  }
  func.func @transform_9(%arg0: i32) -> (i32, i32, i32) {
    %c0_i32 = arith.constant 0 : i32
    %c0_i32_0 = arith.constant 0 : i32
    %c0_i32_1 = arith.constant 0 : i32
    return %arg0, %c0_i32, %c0_i32_0 : i32, i32, i32
  }
}

module attributes {stable_mosaic.version = 11 : i64} {
  func.func @simple_cnn_kernel(%arg0: i32, %arg1: memref<1x1x128xf32, #tpu.memory_space<vmem>>, %arg2: memref<1x128xf32, #tpu.memory_space<vmem>>, %arg3: memref<1x128xf32, #tpu.memory_space<vmem>>, %arg4: memref<64x3xf32, #tpu.memory_space<vmem>>, %arg5: memref<64x1xf32, #tpu.memory_space<vmem>>, %arg6: memref<64x192xf32, #tpu.memory_space<vmem>>, %arg7: memref<64x1xf32, #tpu.memory_space<vmem>>, %arg8: memref<3x64xf32, #tpu.memory_space<vmem>>, %arg9: memref<1xf32, #tpu.memory_space<smem>>, %arg10: memref<1x1x128xf32, #tpu.memory_space<vmem>>, %arg11: memref<192x128xf32, #tpu.memory_space<vmem>>) attributes {dimension_semantics = [#tpu.dimension_semantics<parallel>], iteration_bounds = array<i64: 2>, scalar_prefetch = 0 : i64, scratch_operands = 1 : i64, tpu.core_type = #tpu.core_type<tc>, window_params = [{transform_indices = @transform_0, window_bounds = array<i64: 1, 1, 128>}, {pipeline_mode = #tpu.pipeline_mode<synchronous>, transform_indices = @transform_1, window_bounds = array<i64: 1, 128>}, {pipeline_mode = #tpu.pipeline_mode<synchronous>, transform_indices = @transform_2, window_bounds = array<i64: 1, 128>}, {pipeline_mode = #tpu.pipeline_mode<synchronous>, transform_indices = @transform_3, window_bounds = array<i64: 64, 3>}, {pipeline_mode = #tpu.pipeline_mode<synchronous>, transform_indices = @transform_4, window_bounds = array<i64: 64, 1>}, {pipeline_mode = #tpu.pipeline_mode<synchronous>, transform_indices = @transform_5, window_bounds = array<i64: 64, 192>}, {pipeline_mode = #tpu.pipeline_mode<synchronous>, transform_indices = @transform_6, window_bounds = array<i64: 64, 1>}, {pipeline_mode = #tpu.pipeline_mode<synchronous>, transform_indices = @transform_7, window_bounds = array<i64: 3, 64>}, {transform_indices = @transform_8, window_bounds = array<i64: 1>}, {transform_indices = @transform_9, window_bounds = array<i64: 1, 1, 128>}]} {
    %c0 = arith.constant 0 : index
    %c0_0 = arith.constant 0 : index
    %0 = vector.load %arg4[%c0, %c0_0] : memref<64x3xf32, #tpu.memory_space<vmem>>, vector<64x3xf32>
    %c0_1 = arith.constant 0 : index
    %c0_2 = arith.constant 0 : index
    %1 = vector.load %arg5[%c0_1, %c0_2] : memref<64x1xf32, #tpu.memory_space<vmem>>, vector<64x1xf32>
    %c0_3 = arith.constant 0 : index
    %c0_4 = arith.constant 0 : index
    %2 = vector.load %arg6[%c0_3, %c0_4] : memref<64x192xf32, #tpu.memory_space<vmem>>, vector<64x192xf32>
    %c0_5 = arith.constant 0 : index
    %c0_6 = arith.constant 0 : index
    %3 = vector.load %arg7[%c0_5, %c0_6] : memref<64x1xf32, #tpu.memory_space<vmem>>, vector<64x1xf32>
    %c0_7 = arith.constant 0 : index
    %c0_8 = arith.constant 0 : index
    %4 = vector.load %arg8[%c0_7, %c0_8] : memref<3x64xf32, #tpu.memory_space<vmem>>, vector<3x64xf32>
    %c0_9 = arith.constant 0 : index
    %5 = memref.load %arg9[%c0_9] : memref<1xf32, #tpu.memory_space<smem>>
    %c0_10 = arith.constant 0 : index
    %c0_11 = arith.constant 0 : index
    %6 = vector.load %arg2[%c0_10, %c0_11] : memref<1x128xf32, #tpu.memory_space<vmem>>, vector<1x128xf32>
    %c0_12 = arith.constant 0 : index
    %c0_13 = arith.constant 0 : index
    %7 = vector.load %arg3[%c0_12, %c0_13] : memref<1x128xf32, #tpu.memory_space<vmem>>, vector<1x128xf32>
    %c0_14 = arith.constant 0 : index
    %c0_15 = arith.constant 0 : index
    %c0_16 = arith.constant 0 : index
    %8 = vector.load %arg1[%c0_14, %c0_15, %c0_16] : memref<1x1x128xf32, #tpu.memory_space<vmem>>, vector<1x1x128xf32>
    %9 = vector.shape_cast %8 : vector<1x1x128xf32> to vector<1x128xf32>
    %10 = vector.extract_strided_slice %0 {offsets = [0, 0], sizes = [64, 1], strides = [1, 1]} : vector<64x3xf32> to vector<64x1xf32>
    %c1_i32 = arith.constant 1 : i32
    %11 = tpu.dynamic_rotate %9 by %c1_i32 dim 1 : vector<1x128xf32>, i32 -> vector<1x128xf32>
    %12 = arith.mulf %11, %6 : vector<1x128xf32>
    %13 = vector.broadcast %10 : vector<64x1xf32> to vector<64x128xf32>
    %14 = vector.broadcast %12 : vector<1x128xf32> to vector<64x128xf32>
    %15 = arith.mulf %13, %14 : vector<64x128xf32>
    %16 = vector.extract_strided_slice %0 {offsets = [0, 1], sizes = [64, 1], strides = [1, 1]} : vector<64x3xf32> to vector<64x1xf32>
    %17 = vector.broadcast %16 : vector<64x1xf32> to vector<64x128xf32>
    %18 = vector.broadcast %9 : vector<1x128xf32> to vector<64x128xf32>
    %19 = arith.mulf %17, %18 : vector<64x128xf32>
    %20 = arith.addf %15, %19 : vector<64x128xf32>
    %21 = vector.extract_strided_slice %0 {offsets = [0, 2], sizes = [64, 1], strides = [1, 1]} : vector<64x3xf32> to vector<64x1xf32>
    %c127_i32 = arith.constant 127 : i32
    %22 = tpu.dynamic_rotate %9 by %c127_i32 dim 1 : vector<1x128xf32>, i32 -> vector<1x128xf32>
    %23 = arith.mulf %22, %7 : vector<1x128xf32>
    %24 = vector.broadcast %21 : vector<64x1xf32> to vector<64x128xf32>
    %25 = vector.broadcast %23 : vector<1x128xf32> to vector<64x128xf32>
    %26 = arith.mulf %24, %25 : vector<64x128xf32>
    %27 = arith.addf %20, %26 : vector<64x128xf32>
    %28 = vector.broadcast %1 : vector<64x1xf32> to vector<64x128xf32>
    %29 = arith.addf %27, %28 : vector<64x128xf32>
    %cst = arith.constant 0.000000e+00 : f32
    %30 = vector.broadcast %cst : f32 to vector<64x128xf32>
    %31 = arith.maximumf %29, %30 : vector<64x128xf32>
    %c1_i32_17 = arith.constant 1 : i32
    %32 = tpu.dynamic_rotate %31 by %c1_i32_17 dim 1 : vector<64x128xf32>, i32 -> vector<64x128xf32>
    %33 = vector.broadcast %6 : vector<1x128xf32> to vector<64x128xf32>
    %34 = arith.mulf %32, %33 : vector<64x128xf32>
    %c0_18 = arith.constant 0 : index
    %c0_19 = arith.constant 0 : index
    %35 = vector.load %arg11[%c0_18, %c0_19] : memref<192x128xf32, #tpu.memory_space<vmem>>, vector<64x128xf32>
    tpu.vector_store %arg11[%c0_18, %c0_19], %34 {strides = array<i32>} : memref<192x128xf32, #tpu.memory_space<vmem>>, vector<64x128xf32>,
    %c64 = arith.constant 64 : index
    %c0_20 = arith.constant 0 : index
    %36 = vector.load %arg11[%c64, %c0_20] : memref<192x128xf32, #tpu.memory_space<vmem>>, vector<64x128xf32>
    tpu.vector_store %arg11[%c64, %c0_20], %31 {strides = array<i32>} : memref<192x128xf32, #tpu.memory_space<vmem>>, vector<64x128xf32>,
    %c127_i32_21 = arith.constant 127 : i32
    %37 = tpu.dynamic_rotate %31 by %c127_i32_21 dim 1 : vector<64x128xf32>, i32 -> vector<64x128xf32>
    %38 = vector.broadcast %7 : vector<1x128xf32> to vector<64x128xf32>
    %39 = arith.mulf %37, %38 : vector<64x128xf32>
    %c128 = arith.constant 128 : index
    %c0_22 = arith.constant 0 : index
    %40 = vector.load %arg11[%c128, %c0_22] : memref<192x128xf32, #tpu.memory_space<vmem>>, vector<64x128xf32>
    tpu.vector_store %arg11[%c128, %c0_22], %39 {strides = array<i32>} : memref<192x128xf32, #tpu.memory_space<vmem>>, vector<64x128xf32>,
    %c0_23 = arith.constant 0 : index
    %c0_24 = arith.constant 0 : index
    %41 = vector.load %arg11[%c0_23, %c0_24] : memref<192x128xf32, #tpu.memory_space<vmem>>, vector<192x128xf32>
    %cst_25 = arith.constant dense<0.000000e+00> : vector<64x128xf32>
    %42 = tpu.matmul %2, %41, %cst_25 {dimension_numbers = #tpu.dot_dimension_numbers<[1], [0], [0], [1], [0, 0, 1, 1], [], []>} : vector<64x192xf32>, vector<192x128xf32>, vector<64x128xf32> -> vector<64x128xf32>
    %43 = vector.broadcast %3 : vector<64x1xf32> to vector<64x128xf32>
    %44 = arith.addf %42, %43 : vector<64x128xf32>
    %cst_26 = arith.constant 0.000000e+00 : f32
    %45 = vector.broadcast %cst_26 : f32 to vector<64x128xf32>
    %46 = arith.maximumf %44, %45 : vector<64x128xf32>
    %cst_27 = arith.constant dense<0.000000e+00> : vector<3x128xf32>
    %47 = tpu.matmul %4, %46, %cst_27 {dimension_numbers = #tpu.dot_dimension_numbers<[1], [0], [0], [1], [0, 0, 1, 1], [], []>} : vector<3x64xf32>, vector<64x128xf32>, vector<3x128xf32> -> vector<3x128xf32>
    %48 = vector.extract_strided_slice %47 {offsets = [0, 0], sizes = [1, 128], strides = [1, 1]} : vector<3x128xf32> to vector<1x128xf32>
    %c1_i32_28 = arith.constant 1 : i32
    %49 = tpu.dynamic_rotate %48 by %c1_i32_28 dim 1 : vector<1x128xf32>, i32 -> vector<1x128xf32>
    %50 = arith.mulf %49, %6 : vector<1x128xf32>
    %51 = vector.extract_strided_slice %47 {offsets = [1, 0], sizes = [1, 128], strides = [1, 1]} : vector<3x128xf32> to vector<1x128xf32>
    %52 = arith.addf %50, %51 : vector<1x128xf32>
    %53 = vector.extract_strided_slice %47 {offsets = [2, 0], sizes = [1, 128], strides = [1, 1]} : vector<3x128xf32> to vector<1x128xf32>
    %c127_i32_29 = arith.constant 127 : i32
    %54 = tpu.dynamic_rotate %53 by %c127_i32_29 dim 1 : vector<1x128xf32>, i32 -> vector<1x128xf32>
    %55 = arith.mulf %54, %7 : vector<1x128xf32>
    %56 = arith.addf %52, %55 : vector<1x128xf32>
    %57 = vector.broadcast %5 : f32 to vector<1x128xf32>
    %58 = arith.addf %56, %57 : vector<1x128xf32>
    %c0_30 = arith.constant 0 : index
    %c0_31 = arith.constant 0 : index
    %c0_32 = arith.constant 0 : index
    %59 = vector.load %arg10[%c0_30, %c0_31, %c0_32] : memref<1x1x128xf32, #tpu.memory_space<vmem>>, vector<1x1x128xf32>
    %60 = vector.shape_cast %59 : vector<1x1x128xf32> to vector<1x128xf32>
    %61 = vector.shape_cast %58 : vector<1x128xf32> to vector<1x1x128xf32>
    tpu.vector_store %arg10[%c0_30, %c0_31, %c0_32], %61 {strides = array<i32>} : memref<1x1x128xf32, #tpu.memory_space<vmem>>, vector<1x1x128xf32>,
    return
  }
  func.func @transform_0(%arg0: i32) -> (i32, i32, i32) {
    %c0_i32 = arith.constant 0 : i32
    %c0_i32_0 = arith.constant 0 : i32
    %c0_i32_1 = arith.constant 0 : i32
    return %arg0, %c0_i32, %c0_i32_0 : i32, i32, i32
  }
  func.func @transform_1(%arg0: i32) -> (i32, i32) {
    %c0_i32 = arith.constant 0 : i32
    %c0_i32_0 = arith.constant 0 : i32
    %c0_i32_1 = arith.constant 0 : i32
    return %c0_i32, %c0_i32_0 : i32, i32
  }
  func.func @transform_2(%arg0: i32) -> (i32, i32) {
    %c0_i32 = arith.constant 0 : i32
    %c0_i32_0 = arith.constant 0 : i32
    %c0_i32_1 = arith.constant 0 : i32
    return %c0_i32, %c0_i32_0 : i32, i32
  }
  func.func @transform_3(%arg0: i32) -> (i32, i32) {
    %c0_i32 = arith.constant 0 : i32
    %c0_i32_0 = arith.constant 0 : i32
    %c0_i32_1 = arith.constant 0 : i32
    return %c0_i32, %c0_i32_0 : i32, i32
  }
  func.func @transform_4(%arg0: i32) -> (i32, i32) {
    %c0_i32 = arith.constant 0 : i32
    %c0_i32_0 = arith.constant 0 : i32
    %c0_i32_1 = arith.constant 0 : i32
    return %c0_i32, %c0_i32_0 : i32, i32
  }
  func.func @transform_5(%arg0: i32) -> (i32, i32) {
    %c0_i32 = arith.constant 0 : i32
    %c0_i32_0 = arith.constant 0 : i32
    %c0_i32_1 = arith.constant 0 : i32
    return %c0_i32, %c0_i32_0 : i32, i32
  }
  func.func @transform_6(%arg0: i32) -> (i32, i32) {
    %c0_i32 = arith.constant 0 : i32
    %c0_i32_0 = arith.constant 0 : i32
    %c0_i32_1 = arith.constant 0 : i32
    return %c0_i32, %c0_i32_0 : i32, i32
  }
  func.func @transform_7(%arg0: i32) -> (i32, i32) {
    %c0_i32 = arith.constant 0 : i32
    %c0_i32_0 = arith.constant 0 : i32
    %c0_i32_1 = arith.constant 0 : i32
    return %c0_i32, %c0_i32_0 : i32, i32
  }
  func.func @transform_8(%arg0: i32) -> i32 {
    %c0_i32 = arith.constant 0 : i32
    %c0_i32_0 = arith.constant 0 : i32
    return %c0_i32 : i32
  }
  func.func @transform_9(%arg0: i32) -> (i32, i32, i32) {
    %c0_i32 = arith.constant 0 : i32
    %c0_i32_0 = arith.constant 0 : i32
    %c0_i32_1 = arith.constant 0 : i32
    return %arg0, %c0_i32, %c0_i32_0 : i32, i32, i32
  }
}

</mosaic_0001>

<llo_original>
// kernel: tpu_custom_call.1
$region0: #{tpu_custom_call.1}
  #allocation0 [shape = 'u32[]', space=smem, size = 0x4, offset = 0x4, fixed_abs, tag = 'smem constant byte address 0x4 - core index']
  #allocation1 [shape = 'u32[144,128]{1,0:T(1,128)}', space=vmem, size = 0x12000, scoped, tag = 'internal scratch']
  #allocation2 [shape = 'f32[192,128]{1,0:T(8,128)}', space=vmem, size = 0x18000, scoped, tag = 'scratch operand']
  #allocation3 [shape = 'f32[1]{0:T(128)S(6)}', space=smem, size = 0x200, scoped, tag = 'scoped memory for tpu_custom_call.1']
  %s0 = inlined_call_operand.vmem [shape: f32[2,1,128], index: 0, kind: input, shape index: {}]
  %s1 = inlined_call_operand.vmem [shape: f32[1,128], index: 1, kind: input, shape index: {}]
  %s2 = inlined_call_operand.vmem [shape: f32[1,128], index: 2, kind: input, shape index: {}]
  %s3 = inlined_call_operand.vmem [shape: f32[64,3], index: 3, kind: input, shape index: {}]
  %s4 = inlined_call_operand.vmem [shape: f32[64,1], index: 4, kind: input, shape index: {}]
  %s5 = inlined_call_operand.vmem [shape: f32[64,192], index: 5, kind: input, shape index: {}]
  %s6 = inlined_call_operand.vmem [shape: f32[64,1], index: 6, kind: input, shape index: {}]
  %s7 = inlined_call_operand.vmem [shape: f32[3,64], index: 7, kind: input, shape index: {}]
  %s8 = inlined_call_operand.<no memory space> [shape: f32[1], index: 8, kind: input, shape index: {}]
  %s9 = inlined_call_operand.hbm [shape: f32[2,1,128], index: 9, kind: output, shape index: {}]
  %s10 = sld [smem:[#allocation0]]
  $region69: #{tpu_custom_call.1} parent=0
    _
  %s12 = ssub.s32 1, %s10
  %s13 = scalar_select 0, %s12, %s10
  %14 = sst [smem:[#allocation3]] %s8
  $region1: #{tpu_custom_call.1} parent=0
    #allocation4 [shape = 'u8[1024]{0}', space=vmem, size = 0x400, scoped, tag = 'output window, operand 0']
    #allocation5 [shape = 's32[2]{0}', space=sflag, size = 0x8, scoped, tag = 'scoped memory for tpu_custom_call.1']
    %15 = vsyncpa [#allocation5], 0
    %s16 = scalar_lea.sflag [#allocation5], 1
    %17 = vsyncpa %s16, 0
    loop: start=0, step=1, limit=4
    $region2: #{tpu_custom_call.1} parent=1 // loop_pre_header
      _
    $region3: #{tpu_custom_call.1} parent=1 // loop_header
      %s19 = sphi 0, %s23
      %p20 = scmp.ge.s32.totalorder %s19, 4
      %s29 = sphi 0, %s31
      %s32 = sphi 0, %s29
      %s33 = sphi 0, %s32
      %s49 = sphi 0, %s33
      %s53 = sphi 0, %s53
      %s55 = sphi 0, %s53
      %s56 = sphi 0, %s55
      %s70 = sphi 0, %s56
      %s74 = sphi 0, %s74
      %s76 = sphi 0, %s74
      %s77 = sphi 0, %s76
      %s91 = sphi 0, %s77
      %s95 = sphi 0, %s95
      %s97 = sphi 0, %s95
      %s98 = sphi 0, %s97
      %s112 = sphi 0, %s98
      %s116 = sphi 0, %s116
      %s118 = sphi 0, %s116
      %s119 = sphi 0, %s118
      %s133 = sphi 0, %s119
      %s137 = sphi 0, %s137
      %s139 = sphi 0, %s137
      %s140 = sphi 0, %s139
      %s154 = sphi 0, %s140
      %s158 = sphi 0, %s158
      %s160 = sphi 0, %s158
      %s161 = sphi 0, %s160
      %s175 = sphi 0, %s161
      %s179 = sphi 0, %s179
      %s181 = sphi 0, %s179
      %s182 = sphi 0, %s181
      %s196 = sphi 0, %s182
      %s200 = sphi 0, %s200
      %s202 = sphi 0, %s200
      %s203 = sphi 0, %s202
      %s217 = sphi 0, %s203
      %s223 = sphi 0, %s225
      %s226 = sphi 0, %s223
      %s227 = sphi 0, %s226
      %s243 = sphi 0, %s227
    $region4: #{tpu_custom_call.1} parent=1 // loop_header_branch
      %22 = sbr.rel (%p20) target = $region8
    $region5: #{tpu_custom_call.1} parent=1 // loop_body
      %s24 = ssub.s32 %s19, 1
      %s25 = ssub.s32 %s19, 2
      %s26 = sadd.s32 %s19, 1
      %s27 = ssub.s32 %s19, %s26
      %p28 = scmp.eq.s32.totalorder %s27, 0
      %s30 = sadd.s32 %s29, 1
      %s31 = scalar_select %p28, %s29, %s30
      %p34 = pneg %p28
      %p35 = scmp.eq.s32.totalorder %s19, 1
      %p36 = por %p34, %p35
      %p37 = scmp.ne.s32.totalorder %s29, %s32
      %p38 = scmp.eq.s32.totalorder %s19, 0
      %p39 = por %p37, %p38
      %p40 = scmp.ne.s32.totalorder %s29, %s32
      %p41 = scmp.eq.s32.totalorder %s24, 1
      %p42 = por %p40, %p41
      %p43 = scmp.ne.s32.totalorder %s32, %s33
      %p44 = scmp.eq.s32.totalorder %s24, 0
      %p45 = por %p43, %p44
      %p46 = scmp.ne.s32.totalorder %s32, %s33
      %p47 = scmp.eq.s32.totalorder %s25, 1
      %p48 = por %p46, %p47
      %p50 = scmp.ne.s32.totalorder %s33, %s49
      %p51 = scmp.eq.s32.totalorder %s25, 0
      %p52 = por %p50, %p51
      %s54 = sadd.s32 %s53, 1
      %p57 = scmp.eq.s32.totalorder %s19, 1
      %p58 = scmp.ne.s32.totalorder %s53, %s55
      %p59 = scmp.eq.s32.totalorder %s19, 0
      %p60 = por %p58, %p59
      %p61 = scmp.ne.s32.totalorder %s53, %s55
      %p62 = scmp.eq.s32.totalorder %s24, 1
      %p63 = por %p61, %p62
      %p64 = scmp.ne.s32.totalorder %s55, %s56
      %p65 = scmp.eq.s32.totalorder %s24, 0
      %p66 = por %p64, %p65
      %p67 = scmp.ne.s32.totalorder %s55, %s56
      %p68 = scmp.eq.s32.totalorder %s25, 1
      %p69 = por %p67, %p68
      %p71 = scmp.ne.s32.totalorder %s56, %s70
      %p72 = scmp.eq.s32.totalorder %s25, 0
      %p73 = por %p71, %p72
      %s75 = sadd.s32 %s74, 1
      %p78 = scmp.eq.s32.totalorder %s19, 1
      %p79 = scmp.ne.s32.totalorder %s74, %s76
      %p80 = scmp.eq.s32.totalorder %s19, 0
      %p81 = por %p79, %p80
      %p82 = scmp.ne.s32.totalorder %s74, %s76
      %p83 = scmp.eq.s32.totalorder %s24, 1
      %p84 = por %p82, %p83
      %p85 = scmp.ne.s32.totalorder %s76, %s77
      %p86 = scmp.eq.s32.totalorder %s24, 0
      %p87 = por %p85, %p86
      %p88 = scmp.ne.s32.totalorder %s76, %s77
      %p89 = scmp.eq.s32.totalorder %s25, 1
      %p90 = por %p88, %p89
      %p92 = scmp.ne.s32.totalorder %s77, %s91
      %p93 = scmp.eq.s32.totalorder %s25, 0
      %p94 = por %p92, %p93
      %s96 = sadd.s32 %s95, 1
      %p99 = scmp.eq.s32.totalorder %s19, 1
      %p100 = scmp.ne.s32.totalorder %s95, %s97
      %p101 = scmp.eq.s32.totalorder %s19, 0
      %p102 = por %p100, %p101
      %p103 = scmp.ne.s32.totalorder %s95, %s97
      %p104 = scmp.eq.s32.totalorder %s24, 1
      %p105 = por %p103, %p104
      %p106 = scmp.ne.s32.totalorder %s97, %s98
      %p107 = scmp.eq.s32.totalorder %s24, 0
      %p108 = por %p106, %p107
      %p109 = scmp.ne.s32.totalorder %s97, %s98
      %p110 = scmp.eq.s32.totalorder %s25, 1
      %p111 = por %p109, %p110
      %p113 = scmp.ne.s32.totalorder %s98, %s112
      %p114 = scmp.eq.s32.totalorder %s25, 0
      %p115 = por %p113, %p114
      %s117 = sadd.s32 %s116, 1
      %p120 = scmp.eq.s32.totalorder %s19, 1
      %p121 = scmp.ne.s32.totalorder %s116, %s118
      %p122 = scmp.eq.s32.totalorder %s19, 0
      %p123 = por %p121, %p122
      %p124 = scmp.ne.s32.totalorder %s116, %s118
      %p125 = scmp.eq.s32.totalorder %s24, 1
      %p126 = por %p124, %p125
      %p127 = scmp.ne.s32.totalorder %s118, %s119
      %p128 = scmp.eq.s32.totalorder %s24, 0
      %p129 = por %p127, %p128
      %p130 = scmp.ne.s32.totalorder %s118, %s119
      %p131 = scmp.eq.s32.totalorder %s25, 1
      %p132 = por %p130, %p131
      %p134 = scmp.ne.s32.totalorder %s119, %s133
      %p135 = scmp.eq.s32.totalorder %s25, 0
      %p136 = por %p134, %p135
      %s138 = sadd.s32 %s137, 1
      %p141 = scmp.eq.s32.totalorder %s19, 1
      %p142 = scmp.ne.s32.totalorder %s137, %s139
      %p143 = scmp.eq.s32.totalorder %s19, 0
      %p144 = por %p142, %p143
      %p145 = scmp.ne.s32.totalorder %s137, %s139
      %p146 = scmp.eq.s32.totalorder %s24, 1
      %p147 = por %p145, %p146
      %p148 = scmp.ne.s32.totalorder %s139, %s140
      %p149 = scmp.eq.s32.totalorder %s24, 0
      %p150 = por %p148, %p149
      %p151 = scmp.ne.s32.totalorder %s139, %s140
      %p152 = scmp.eq.s32.totalorder %s25, 1
      %p153 = por %p151, %p152
      %p155 = scmp.ne.s32.totalorder %s140, %s154
      %p156 = scmp.eq.s32.totalorder %s25, 0
      %p157 = por %p155, %p156
      %s159 = sadd.s32 %s158, 1
      %p162 = scmp.eq.s32.totalorder %s19, 1
      %p163 = scmp.ne.s32.totalorder %s158, %s160
      %p164 = scmp.eq.s32.totalorder %s19, 0
      %p165 = por %p163, %p164
      %p166 = scmp.ne.s32.totalorder %s158, %s160
      %p167 = scmp.eq.s32.totalorder %s24, 1
      %p168 = por %p166, %p167
      %p169 = scmp.ne.s32.totalorder %s160, %s161
      %p170 = scmp.eq.s32.totalorder %s24, 0
      %p171 = por %p169, %p170
      %p172 = scmp.ne.s32.totalorder %s160, %s161
      %p173 = scmp.eq.s32.totalorder %s25, 1
      %p174 = por %p172, %p173
      %p176 = scmp.ne.s32.totalorder %s161, %s175
      %p177 = scmp.eq.s32.totalorder %s25, 0
      %p178 = por %p176, %p177
      %s180 = sadd.s32 %s179, 1
      %p183 = scmp.eq.s32.totalorder %s19, 1
      %p184 = scmp.ne.s32.totalorder %s179, %s181
      %p185 = scmp.eq.s32.totalorder %s19, 0
      %p186 = por %p184, %p185
      %p187 = scmp.ne.s32.totalorder %s179, %s181
      %p188 = scmp.eq.s32.totalorder %s24, 1
      %p189 = por %p187, %p188
      %p190 = scmp.ne.s32.totalorder %s181, %s182
      %p191 = scmp.eq.s32.totalorder %s24, 0
      %p192 = por %p190, %p191
      %p193 = scmp.ne.s32.totalorder %s181, %s182
      %p194 = scmp.eq.s32.totalorder %s25, 1
      %p195 = por %p193, %p194
      %p197 = scmp.ne.s32.totalorder %s182, %s196
      %p198 = scmp.eq.s32.totalorder %s25, 0
      %p199 = por %p197, %p198
      %s201 = sadd.s32 %s200, 1
      %p204 = scmp.eq.s32.totalorder %s19, 1
      %p205 = scmp.ne.s32.totalorder %s200, %s202
      %p206 = scmp.eq.s32.totalorder %s19, 0
      %p207 = por %p205, %p206
      %p208 = scmp.ne.s32.totalorder %s200, %s202
      %p209 = scmp.eq.s32.totalorder %s24, 1
      %p210 = por %p208, %p209
      %p211 = scmp.ne.s32.totalorder %s202, %s203
      %p212 = scmp.eq.s32.totalorder %s24, 0
      %p213 = por %p211, %p212
      %p214 = scmp.ne.s32.totalorder %s202, %s203
      %p215 = scmp.eq.s32.totalorder %s25, 1
      %p216 = por %p214, %p215
      %p218 = scmp.ne.s32.totalorder %s203, %s217
      %p219 = scmp.eq.s32.totalorder %s25, 0
      %p220 = por %p218, %p219
      %s221 = ssub.s32 %s19, %s26
      %p222 = scmp.eq.s32.totalorder %s221, 0
      %s224 = sadd.s32 %s223, 1
      %s225 = scalar_select %p222, %s223, %s224
      %p228 = pneg %p222
      %p229 = scmp.eq.s32.totalorder %s19, 1
      %p230 = por %p228, %p229
      %p231 = scmp.ne.s32.totalorder %s223, %s226
      %p232 = scmp.eq.s32.totalorder %s19, 0
      %p233 = por %p231, %p232
      %p234 = scmp.ne.s32.totalorder %s223, %s226
      %p235 = scmp.eq.s32.totalorder %s24, 1
      %p236 = por %p234, %p235
      %p237 = scmp.ne.s32.totalorder %s226, %s227
      %p238 = scmp.eq.s32.totalorder %s24, 0
      %p239 = por %p237, %p238
      %p240 = scmp.ne.s32.totalorder %s226, %s227
      %p241 = scmp.eq.s32.totalorder %s25, 1
      %p242 = por %p240, %p241
      %p244 = scmp.ne.s32.totalorder %s227, %s243
      %p245 = scmp.eq.s32.totalorder %s25, 0
      %p246 = por %p244, %p245
      %p247 = scmp.le.s32.totalorder 1, %s19
      %p248 = scmp.lt.s32.totalorder %s19, 3
      %p249 = pnand %p247, %p248
      %p250 = pneg %p249
      // Predicated region
      $region9: #{tpu_custom_call.1} parent=5 // pred_check
        _
      $region10: #{tpu_custom_call.1} parent=5 // pred_check_branch
        %252 = sbr.rel (%p249) target = $region12
      $region11: #{tpu_custom_call.1} parent=5 // pred_region
        %s253 = ssub.s32 %s19, 1
        // Predicated region
        $region13: #{tpu_custom_call.1} parent=11 // pred_check
          %p254 = pneg %p66
        $region14: #{tpu_custom_call.1} parent=11 // pred_check_branch
          %256 = sbr.rel (%p254) target = $region16
        $region15: #{tpu_custom_call.1} parent=11 // pred_region
          _
        $region16: #{tpu_custom_call.1} parent=11 // pred_fallthru
          _
        // Predicated region
        $region17: #{tpu_custom_call.1} parent=11 // pred_check
          %p257 = pneg %p87
        $region18: #{tpu_custom_call.1} parent=11 // pred_check_branch
          %259 = sbr.rel (%p257) target = $region20
        $region19: #{tpu_custom_call.1} parent=11 // pred_region
          _
        $region20: #{tpu_custom_call.1} parent=11 // pred_fallthru
          _
        // Predicated region
        $region21: #{tpu_custom_call.1} parent=11 // pred_check
          %p260 = pneg %p108
        $region22: #{tpu_custom_call.1} parent=11 // pred_check_branch
          %262 = sbr.rel (%p260) target = $region24
        $region23: #{tpu_custom_call.1} parent=11 // pred_region
          _
        $region24: #{tpu_custom_call.1} parent=11 // pred_fallthru
          _
        // Predicated region
        $region25: #{tpu_custom_call.1} parent=11 // pred_check
          %p263 = pneg %p129
        $region26: #{tpu_custom_call.1} parent=11 // pred_check_branch
          %265 = sbr.rel (%p263) target = $region28
        $region27: #{tpu_custom_call.1} parent=11 // pred_region
          _
        $region28: #{tpu_custom_call.1} parent=11 // pred_fallthru
          _
        // Predicated region
        $region29: #{tpu_custom_call.1} parent=11 // pred_check
          %p266 = pneg %p150
        $region30: #{tpu_custom_call.1} parent=11 // pred_check_branch
          %268 = sbr.rel (%p266) target = $region32
        $region31: #{tpu_custom_call.1} parent=11 // pred_region
          _
        $region32: #{tpu_custom_call.1} parent=11 // pred_fallthru
          _
        // Predicated region
        $region33: #{tpu_custom_call.1} parent=11 // pred_check
          %p269 = pneg %p171
        $region34: #{tpu_custom_call.1} parent=11 // pred_check_branch
          %271 = sbr.rel (%p269) target = $region36
        $region35: #{tpu_custom_call.1} parent=11 // pred_region
          _
        $region36: #{tpu_custom_call.1} parent=11 // pred_fallthru
          _
        // Predicated region
        $region37: #{tpu_custom_call.1} parent=11 // pred_check
          %p272 = pneg %p192
        $region38: #{tpu_custom_call.1} parent=11 // pred_check_branch
          %274 = sbr.rel (%p272) target = $region40
        $region39: #{tpu_custom_call.1} parent=11 // pred_region
          _
        $region40: #{tpu_custom_call.1} parent=11 // pred_fallthru
          _
        // Predicated region
        $region41: #{tpu_custom_call.1} parent=11 // pred_check
          %p275 = pneg %p213
        $region42: #{tpu_custom_call.1} parent=11 // pred_check_branch
          %277 = sbr.rel (%p275) target = $region44
        $region43: #{tpu_custom_call.1} parent=11 // pred_region
          _
        $region44: #{tpu_custom_call.1} parent=11 // pred_fallthru
          _
      $region12: #{tpu_custom_call.1} parent=5 // pred_fallthru
        _
      %p278 = scmp.lt.s32.totalorder %s19, 2
      // Predicated region
      $region45: #{tpu_custom_call.1} parent=5 // pred_check
        %p279 = pneg %p278
      $region46: #{tpu_custom_call.1} parent=5 // pred_check_branch
        %281 = sbr.rel (%p279) target = $region48
      $region47: #{tpu_custom_call.1} parent=5 // pred_region
        // Predicated region
        $region49: #{tpu_custom_call.1} parent=47 // pred_check
          %p282 = pneg %p39
        $region50: #{tpu_custom_call.1} parent=47 // pred_check_branch
          %284 = sbr.rel (%p282) target = $region52
        $region51: #{tpu_custom_call.1} parent=47 // pred_region
          %p285 = scmp.lt.s32.totalorder %s19, 1
          %s286 = scalar_select %p285, %s19, 1
          %s287 = scalar_lea.vmem %s0, %s286
        $region52: #{tpu_custom_call.1} parent=47 // pred_fallthru
          _
      $region48: #{tpu_custom_call.1} parent=5 // pred_fallthru
        _
      %p288 = scmp.le.s32.totalorder 1, %s19
      %p289 = scmp.lt.s32.totalorder %s19, 3
      %p290 = pnand %p288, %p289
      %p291 = pneg %p290
      // Predicated region
      $region53: #{tpu_custom_call.1} parent=5 // pred_check
        _
      $region54: #{tpu_custom_call.1} parent=5 // pred_check_branch
        %293 = sbr.rel (%p290) target = $region56
      $region55: #{tpu_custom_call.1} parent=5 // pred_region
        %s294 = ssub.s32 %s19, 1
        %p295 = scmp.lt.s32.totalorder %s24, 1
        %s296 = scalar_select %p295, %s24, 1
        %s297 = scalar_lea.vmem %s0, %s296
        %p298 = pneg %p45
        %p299 = pneg %p42
        %p300 = pneg %p66
        %p301 = pneg %p63
        %p302 = pneg %p87
        %p303 = pneg %p84
        %p304 = pneg %p108
        %p305 = pneg %p105
        %p306 = pneg %p129
        %p307 = pneg %p126
        %p308 = pneg %p150
        %p309 = pneg %p147
        %p310 = pneg %p171
        %p311 = pneg %p168
        %p312 = pneg %p192
        %p313 = pneg %p189
        %p314 = pneg %p213
        %p315 = pneg %p210
        %p316 = pneg %p239
        %p317 = pneg %p236
        %s318 = sand.u32 %s226, 1
        %s319 = scalar_lea.sflag [#allocation5], %s318
        %s320 = sand.u32 %s226, 1
        %s321 = scalar_lea.vmem [#allocation4], %s320
        %p322 = scmp.lt.s32.totalorder %s24, 1
        %s323 = scalar_select %p322, %s24, 1
        %s324 = scalar_lea.vmem %s0, %s323
        %v325 = vld [vmem:[%s3] sm:$0xff]
        %v326 = vld [vmem:[%s3 + $0x8] sm:$0xff]
        %v327 = vld [vmem:[%s3 + $0x10] sm:$0xff]
        %v328 = vld [vmem:[%s3 + $0x18] sm:$0xff]
        %v329 = vld [vmem:[%s3 + $0x20] sm:$0xff]
        %v330 = vld [vmem:[%s3 + $0x28] sm:$0xff]
        %v331 = vld [vmem:[%s3 + $0x30] sm:$0xff]
        %v332 = vld [vmem:[%s3 + $0x38] sm:$0xff]
        %v333 = vld [vmem:[%s4] sm:$0xff]
        %v334 = vld [vmem:[%s4 + $0x8] sm:$0xff]
        %v335 = vld [vmem:[%s4 + $0x10] sm:$0xff]
        %v336 = vld [vmem:[%s4 + $0x18] sm:$0xff]
        %v337 = vld [vmem:[%s4 + $0x20] sm:$0xff]
        %v338 = vld [vmem:[%s4 + $0x28] sm:$0xff]
        %v339 = vld [vmem:[%s4 + $0x30] sm:$0xff]
        %v340 = vld [vmem:[%s4 + $0x38] sm:$0xff]
        %v341 = vld [vmem:[%s5] sm:$0xff]
        %v342 = vld [vmem:[%s5 + $0x8] sm:$0xff]
        %v343 = vld [vmem:[%s5 + $0x10] sm:$0xff]
        %v344 = vld [vmem:[%s5 + $0x18] sm:$0xff]
        %v345 = vld [vmem:[%s5 + $0x20] sm:$0xff]
        %v346 = vld [vmem:[%s5 + $0x28] sm:$0xff]
        %v347 = vld [vmem:[%s5 + $0x30] sm:$0xff]
        %v348 = vld [vmem:[%s5 + $0x38] sm:$0xff]
        %v349 = vld [vmem:[%s5 + $0x40] sm:$0xff]
        %v350 = vld [vmem:[%s5 + $0x48] sm:$0xff]
        %v351 = vld [vmem:[%s5 + $0x50] sm:$0xff]
        %v352 = vld [vmem:[%s5 + $0x58] sm:$0xff]
        %v353 = vld [vmem:[%s5 + $0x60] sm:$0xff]
        %v354 = vld [vmem:[%s5 + $0x68] sm:$0xff]
        %v355 = vld [vmem:[%s5 + $0x70] sm:$0xff]
        %v356 = vld [vmem:[%s5 + $0x78] sm:$0xff]
        %v357 = vld [vmem:[%s6] sm:$0xff]
        %v358 = vld [vmem:[%s6 + $0x8] sm:$0xff]
        %v359 = vld [vmem:[%s6 + $0x10] sm:$0xff]
        %v360 = vld [vmem:[%s6 + $0x18] sm:$0xff]
        %v361 = vld [vmem:[%s6 + $0x20] sm:$0xff]
        %v362 = vld [vmem:[%s6 + $0x28] sm:$0xff]
        %v363 = vld [vmem:[%s6 + $0x30] sm:$0xff]
        %v364 = vld [vmem:[%s6 + $0x38] sm:$0xff]
        %v365 = vld [vmem:[%s7] sm:$0x7]
        %s366 = sld [smem:[#allocation3]]
        %v367 = vld [vmem:[%s1] sm:$0x1]
        %v368 = vld [vmem:[%s2] sm:$0x1]
        %v369 = vld [vmem:[%s324] sm:$0x1]
        %370 = vrot.lane.b32.xlu0 %v369, 1
        %v371 = vpop.permute.xlu0 %370
        %v372 = vmul.f32 %v371, %v367
        %374 = vset.pattern.permute.xlu0 0
        %375 = vperm.xlu0 %374, %v325
        %v376 = vpop.permute.xlu0 %375
        %379 = vset.pattern.permute.xlu0 0
        %380 = vperm.xlu0 %379, %v326
        %v381 = vpop.permute.xlu0 %380
        %384 = vset.pattern.permute.xlu0 0
        %385 = vperm.xlu0 %384, %v327
        %v386 = vpop.permute.xlu0 %385
        %389 = vset.pattern.permute.xlu0 0
        %390 = vperm.xlu0 %389, %v328
        %v391 = vpop.permute.xlu0 %390
        %394 = vset.pattern.permute.xlu0 0
        %395 = vperm.xlu0 %394, %v329
        %v396 = vpop.permute.xlu0 %395
        %399 = vset.pattern.permute.xlu0 0
        %400 = vperm.xlu0 %399, %v330
        %v401 = vpop.permute.xlu0 %400
        %404 = vset.pattern.permute.xlu0 0
        %405 = vperm.xlu0 %404, %v331
        %v406 = vpop.permute.xlu0 %405
        %409 = vset.pattern.permute.xlu0 0
        %410 = vperm.xlu0 %409, %v332
        %v411 = vpop.permute.xlu0 %410
        %v413 = vlaneseq
        %v414 = vshrl.u32 %v413, 7
        %v415 = vsub.s32 0, %v414
        %v416 = vrot.slane %v372, %v415
        %v417 = vmul.f32 %v376, %v416
        %v418 = vmul.f32 %v381, %v416
        %v419 = vmul.f32 %v386, %v416
        %v420 = vmul.f32 %v391, %v416
        %v421 = vmul.f32 %v396, %v416
        %v422 = vmul.f32 %v401, %v416
        %v423 = vmul.f32 %v406, %v416
        %v424 = vmul.f32 %v411, %v416
        %425 = vset.pattern.permute.xlu0 1
        %426 = vperm.xlu0 %425, %v325
        %v427 = vpop.permute.xlu0 %426
        %429 = vset.pattern.permute.xlu0 1
        %430 = vperm.xlu0 %429, %v326
        %v431 = vpop.permute.xlu0 %430
        %433 = vset.pattern.permute.xlu0 1
        %434 = vperm.xlu0 %433, %v327
        %v435 = vpop.permute.xlu0 %434
        %437 = vset.pattern.permute.xlu0 1
        %438 = vperm.xlu0 %437, %v328
        %v439 = vpop.permute.xlu0 %438
        %441 = vset.pattern.permute.xlu0 1
        %442 = vperm.xlu0 %441, %v329
        %v443 = vpop.permute.xlu0 %442
        %445 = vset.pattern.permute.xlu0 1
        %446 = vperm.xlu0 %445, %v330
        %v447 = vpop.permute.xlu0 %446
        %449 = vset.pattern.permute.xlu0 1
        %450 = vperm.xlu0 %449, %v331
        %v451 = vpop.permute.xlu0 %450
        %453 = vset.pattern.permute.xlu0 1
        %454 = vperm.xlu0 %453, %v332
        %v455 = vpop.permute.xlu0 %454
        %v458 = vlaneseq
        %v459 = vshrl.u32 %v458, 7
        %v460 = vsub.s32 0, %v459
        %v461 = vrot.slane %v369, %v460
        %v463 = vmul.f32 %v427, %v461
        %v464 = vmul.f32 %v431, %v461
        %v465 = vmul.f32 %v435, %v461
        %v466 = vmul.f32 %v439, %v461
        %v467 = vmul.f32 %v443, %v461
        %v468 = vmul.f32 %v447, %v461
        %v469 = vmul.f32 %v451, %v461
        %v470 = vmul.f32 %v455, %v461
        %v471 = vadd.f32 %v417, %v463
        %v472 = vadd.f32 %v418, %v464
        %v473 = vadd.f32 %v419, %v465
        %v474 = vadd.f32 %v420, %v466
        %v475 = vadd.f32 %v421, %v467
        %v476 = vadd.f32 %v422, %v468
        %v477 = vadd.f32 %v423, %v469
        %v478 = vadd.f32 %v424, %v470
        %479 = vrot.lane.b32.xlu0 %v369, 127
        %v480 = vpop.permute.xlu0 %479
        %v481 = vmul.f32 %v480, %v368
        %482 = vset.pattern.permute.xlu0 2
        %483 = vperm.xlu0 %482, %v325
        %v484 = vpop.permute.xlu0 %483
        %486 = vset.pattern.permute.xlu0 2
        %487 = vperm.xlu0 %486, %v326
        %v488 = vpop.permute.xlu0 %487
        %490 = vset.pattern.permute.xlu0 2
        %491 = vperm.xlu0 %490, %v327
        %v492 = vpop.permute.xlu0 %491
        %494 = vset.pattern.permute.xlu0 2
        %495 = vperm.xlu0 %494, %v328
        %v496 = vpop.permute.xlu0 %495
        %498 = vset.pattern.permute.xlu0 2
        %499 = vperm.xlu0 %498, %v329
        %v500 = vpop.permute.xlu0 %499
        %502 = vset.pattern.permute.xlu0 2
        %503 = vperm.xlu0 %502, %v330
        %v504 = vpop.permute.xlu0 %503
        %506 = vset.pattern.permute.xlu0 2
        %507 = vperm.xlu0 %506, %v331
        %v508 = vpop.permute.xlu0 %507
        %510 = vset.pattern.permute.xlu0 2
        %511 = vperm.xlu0 %510, %v332
        %v512 = vpop.permute.xlu0 %511
        %v514 = vlaneseq
        %v515 = vshrl.u32 %v514, 7
        %v516 = vsub.s32 0, %v515
        %v517 = vrot.slane %v481, %v516
        %v518 = vmul.f32 %v484, %v517
        %v519 = vmul.f32 %v488, %v517
        %v520 = vmul.f32 %v492, %v517
        %v521 = vmul.f32 %v496, %v517
        %v522 = vmul.f32 %v500, %v517
        %v523 = vmul.f32 %v504, %v517
        %v524 = vmul.f32 %v508, %v517
        %v525 = vmul.f32 %v512, %v517
        %v526 = vadd.f32 %v471, %v518
        %v527 = vadd.f32 %v472, %v519
        %v528 = vadd.f32 %v473, %v520
        %v529 = vadd.f32 %v474, %v521
        %v530 = vadd.f32 %v475, %v522
        %v531 = vadd.f32 %v476, %v523
        %v532 = vadd.f32 %v477, %v524
        %v533 = vadd.f32 %v478, %v525
        %535 = vset.pattern.permute.xlu0 0
        %536 = vperm.xlu0 %535, %v333
        %v537 = vpop.permute.xlu0 %536
        %540 = vset.pattern.permute.xlu0 0
        %541 = vperm.xlu0 %540, %v334
        %v542 = vpop.permute.xlu0 %541
        %545 = vset.pattern.permute.xlu0 0
        %546 = vperm.xlu0 %545, %v335
        %v547 = vpop.permute.xlu0 %546
        %550 = vset.pattern.permute.xlu0 0
        %551 = vperm.xlu0 %550, %v336
        %v552 = vpop.permute.xlu0 %551
        %555 = vset.pattern.permute.xlu0 0
        %556 = vperm.xlu0 %555, %v337
        %v557 = vpop.permute.xlu0 %556
        %560 = vset.pattern.permute.xlu0 0
        %561 = vperm.xlu0 %560, %v338
        %v562 = vpop.permute.xlu0 %561
        %565 = vset.pattern.permute.xlu0 0
        %566 = vperm.xlu0 %565, %v339
        %v567 = vpop.permute.xlu0 %566
        %570 = vset.pattern.permute.xlu0 0
        %571 = vperm.xlu0 %570, %v340
        %v572 = vpop.permute.xlu0 %571
        %v574 = vadd.f32 %v526, %v537
        %v575 = vadd.f32 %v527, %v542
        %v576 = vadd.f32 %v528, %v547
        %v577 = vadd.f32 %v529, %v552
        %v578 = vadd.f32 %v530, %v557
        %v579 = vadd.f32 %v531, %v562
        %v580 = vadd.f32 %v532, %v567
        %v581 = vadd.f32 %v533, %v572
        %v582 = vmax.f32 %v574, 0.0
        %v583 = vmax.f32 %v575, 0.0
        %v584 = vmax.f32 %v576, 0.0
        %v585 = vmax.f32 %v577, 0.0
        %v586 = vmax.f32 %v578, 0.0
        %v587 = vmax.f32 %v579, 0.0
        %v588 = vmax.f32 %v580, 0.0
        %v589 = vmax.f32 %v581, 0.0
        %590 = vrot.lane.b32.xlu0 %v582, 1
        %v591 = vpop.permute.xlu0 %590
        %592 = vrot.lane.b32.xlu0 %v583, 1
        %v593 = vpop.permute.xlu0 %592
        %594 = vrot.lane.b32.xlu0 %v584, 1
        %v595 = vpop.permute.xlu0 %594
        %596 = vrot.lane.b32.xlu0 %v585, 1
        %v597 = vpop.permute.xlu0 %596
        %598 = vrot.lane.b32.xlu0 %v586, 1
        %v599 = vpop.permute.xlu0 %598
        %600 = vrot.lane.b32.xlu0 %v587, 1
        %v601 = vpop.permute.xlu0 %600
        %602 = vrot.lane.b32.xlu0 %v588, 1
        %v603 = vpop.permute.xlu0 %602
        %604 = vrot.lane.b32.xlu0 %v589, 1
        %v605 = vpop.permute.xlu0 %604
        %v607 = vlaneseq
        %v608 = vshrl.u32 %v607, 7
        %v609 = vsub.s32 0, %v608
        %v610 = vrot.slane %v367, %v609
        %v612 = vmul.f32 %v591, %v610
        %v613 = vmul.f32 %v593, %v610
        %v614 = vmul.f32 %v595, %v610
        %v615 = vmul.f32 %v597, %v610
        %v616 = vmul.f32 %v599, %v610
        %v617 = vmul.f32 %v601, %v610
        %v618 = vmul.f32 %v603, %v610
        %v619 = vmul.f32 %v605, %v610
        %620 = vst [vmem:[#allocation2] sm:$0xff] %v612
        %621 = vst [vmem:[#allocation2 + $0x8] sm:$0xff] %v613
        %622 = vst [vmem:[#allocation2 + $0x10] sm:$0xff] %v614
        %623 = vst [vmem:[#allocation2 + $0x18] sm:$0xff] %v615
        %624 = vst [vmem:[#allocation2 + $0x20] sm:$0xff] %v616
        %625 = vst [vmem:[#allocation2 + $0x28] sm:$0xff] %v617
        %626 = vst [vmem:[#allocation2 + $0x30] sm:$0xff] %v618
        %627 = vst [vmem:[#allocation2 + $0x38] sm:$0xff] %v619
        %628 = vst [vmem:[#allocation2 + $0x40] sm:$0xff] %v582
        %629 = vst [vmem:[#allocation2 + $0x48] sm:$0xff] %v583
        %630 = vst [vmem:[#allocation2 + $0x50] sm:$0xff] %v584
        %631 = vst [vmem:[#allocation2 + $0x58] sm:$0xff] %v585
        %632 = vst [vmem:[#allocation2 + $0x60] sm:$0xff] %v586
        %633 = vst [vmem:[#allocation2 + $0x68] sm:$0xff] %v587
        %634 = vst [vmem:[#allocation2 + $0x70] sm:$0xff] %v588
        %635 = vst [vmem:[#allocation2 + $0x78] sm:$0xff] %v589
        %636 = vrot.lane.b32.xlu0 %v582, 127
        %v637 = vpop.permute.xlu0 %636
        %638 = vrot.lane.b32.xlu0 %v583, 127
        %v639 = vpop.permute.xlu0 %638
        %640 = vrot.lane.b32.xlu0 %v584, 127
        %v641 = vpop.permute.xlu0 %640
        %642 = vrot.lane.b32.xlu0 %v585, 127
        %v643 = vpop.permute.xlu0 %642
        %644 = vrot.lane.b32.xlu0 %v586, 127
        %v645 = vpop.permute.xlu0 %644
        %646 = vrot.lane.b32.xlu0 %v587, 127
        %v647 = vpop.permute.xlu0 %646
        %648 = vrot.lane.b32.xlu0 %v588, 127
        %v649 = vpop.permute.xlu0 %648
        %650 = vrot.lane.b32.xlu0 %v589, 127
        %v651 = vpop.permute.xlu0 %650
        %v653 = vlaneseq
        %v654 = vshrl.u32 %v653, 7
        %v655 = vsub.s32 0, %v654
        %v656 = vrot.slane %v368, %v655
        %v658 = vmul.f32 %v637, %v656
        %v659 = vmul.f32 %v639, %v656
        %v660 = vmul.f32 %v641, %v656
        %v661 = vmul.f32 %v643, %v656
        %v662 = vmul.f32 %v645, %v656
        %v663 = vmul.f32 %v647, %v656
        %v664 = vmul.f32 %v649, %v656
        %v665 = vmul.f32 %v651, %v656
        %666 = vst [vmem:[#allocation2 + $0x80] sm:$0xff] %v658
        %667 = vst [vmem:[#allocation2 + $0x88] sm:$0xff] %v659
        %668 = vst [vmem:[#allocation2 + $0x90] sm:$0xff] %v660
        %669 = vst [vmem:[#allocation2 + $0x98] sm:$0xff] %v661
        %670 = vst [vmem:[#allocation2 + $0xa0] sm:$0xff] %v662
        %671 = vst [vmem:[#allocation2 + $0xa8] sm:$0xff] %v663
        %672 = vst [vmem:[#allocation2 + $0xb0] sm:$0xff] %v664
        %673 = vst [vmem:[#allocation2 + $0xb8] sm:$0xff] %v665
        %v674 = vld [vmem:[#allocation2] sm:$0xff]
        %v675 = vld [vmem:[#allocation2 + $0x8] sm:$0xff]
        %v676 = vld [vmem:[#allocation2 + $0x10] sm:$0xff]
        %v677 = vld [vmem:[#allocation2 + $0x18] sm:$0xff]
        %v678 = vld [vmem:[#allocation2 + $0x20] sm:$0xff]
        %v679 = vld [vmem:[#allocation2 + $0x28] sm:$0xff]
        %v680 = vld [vmem:[#allocation2 + $0x30] sm:$0xff]
        %v681 = vld [vmem:[#allocation2 + $0x38] sm:$0xff]
        %v682 = vld [vmem:[#allocation2 + $0x40] sm:$0xff]
        %v683 = vld [vmem:[#allocation2 + $0x48] sm:$0xff]
        %v684 = vld [vmem:[#allocation2 + $0x50] sm:$0xff]
        %v685 = vld [vmem:[#allocation2 + $0x58] sm:$0xff]
        %v686 = vld [vmem:[#allocation2 + $0x60] sm:$0xff]
        %v687 = vld [vmem:[#allocation2 + $0x68] sm:$0xff]
        %v688 = vld [vmem:[#allocation2 + $0x70] sm:$0xff]
        %v689 = vld [vmem:[#allocation2 + $0x78] sm:$0xff]
        %v690 = vld [vmem:[#allocation2 + $0x80] sm:$0xff]
        %v691 = vld [vmem:[#allocation2 + $0x88] sm:$0xff]
        %v692 = vld [vmem:[#allocation2 + $0x90] sm:$0xff]
        %v693 = vld [vmem:[#allocation2 + $0x98] sm:$0xff]
        %v694 = vld [vmem:[#allocation2 + $0xa0] sm:$0xff]
        %v695 = vld [vmem:[#allocation2 + $0xa8] sm:$0xff]
        %v696 = vld [vmem:[#allocation2 + $0xb0] sm:$0xff]
        %v697 = vld [vmem:[#allocation2 + $0xb8] sm:$0xff]
        %699 = vset.pattern.permute.xlu0 0
        %700 = vperm.xlu0 %699, %v357
        %v701 = vpop.permute.xlu0 %700
        %704 = vset.pattern.permute.xlu0 0
        %705 = vperm.xlu0 %704, %v358
        %v706 = vpop.permute.xlu0 %705
        %709 = vset.pattern.permute.xlu0 0
        %710 = vperm.xlu0 %709, %v359
        %v711 = vpop.permute.xlu0 %710
        %714 = vset.pattern.permute.xlu0 0
        %715 = vperm.xlu0 %714, %v360
        %v716 = vpop.permute.xlu0 %715
        %719 = vset.pattern.permute.xlu0 0
        %720 = vperm.xlu0 %719, %v361
        %v721 = vpop.permute.xlu0 %720
        %724 = vset.pattern.permute.xlu0 0
        %725 = vperm.xlu0 %724, %v362
        %v726 = vpop.permute.xlu0 %725
        %729 = vset.pattern.permute.xlu0 0
        %730 = vperm.xlu0 %729, %v363
        %v731 = vpop.permute.xlu0 %730
        %734 = vset.pattern.permute.xlu0 0
        %735 = vperm.xlu0 %734, %v364
        %v736 = vpop.permute.xlu0 %735
        %vm738 = vcmask 523264
        %v740 = vsel %vm738, %v342, 0
        %v743 = vsel %vm738, %v344, 0
        %v746 = vsel %vm738, %v346, 0
        %v749 = vsel %vm738, %v348, 0
        %v752 = vsel %vm738, %v350, 0
        %v755 = vsel %vm738, %v352, 0
        %v758 = vsel %vm738, %v354, 0
        %v761 = vsel %vm738, %v356, 0
        %763 = vmatprep.subr.mxu0 0.0
        %v764 = vand.u32 %v674, 4294901760
        %765 = vmatpush1.msra.mxu0 %v764
        %766 = vmatprep.subr.mxu0 0.0
        %v767 = vand.u32 %v675, 4294901760
        %768 = vmatpush1.msra.mxu0 %v767
        %769 = vmatprep.subr.mxu0 0.0
        %v770 = vand.u32 %v676, 4294901760
        %771 = vmatpush1.msra.mxu0 %v770
        %772 = vmatprep.subr.mxu0 0.0
        %v773 = vand.u32 %v677, 4294901760
        %774 = vmatpush1.msra.mxu0 %v773
        %775 = vmatprep.subr.mxu0 0.0
        %v776 = vand.u32 %v678, 4294901760
        %777 = vmatpush1.msra.mxu0 %v776
        %778 = vmatprep.subr.mxu0 0.0
        %v779 = vand.u32 %v679, 4294901760
        %780 = vmatpush1.msra.mxu0 %v779
        %781 = vmatprep.subr.mxu0 0.0
        %v782 = vand.u32 %v680, 4294901760
        %783 = vmatpush1.msra.mxu0 %v782
        %784 = vmatprep.subr.mxu0 0.0
        %v785 = vand.u32 %v681, 4294901760
        %786 = vmatpush1.msra.mxu0 %v785
        %787 = vmatprep.subr.mxu0 0.0
        %v788 = vand.u32 %v682, 4294901760
        %789 = vmatpush1.msra.mxu0 %v788
        %790 = vmatprep.subr.mxu0 0.0
        %v791 = vand.u32 %v683, 4294901760
        %792 = vmatpush1.msra.mxu0 %v791
        %793 = vmatprep.subr.mxu0 0.0
        %v794 = vand.u32 %v684, 4294901760
        %795 = vmatpush1.msra.mxu0 %v794
        %796 = vmatprep.subr.mxu0 0.0
        %v797 = vand.u32 %v685, 4294901760
        %798 = vmatpush1.msra.mxu0 %v797
        %799 = vmatprep.subr.mxu0 0.0
        %v800 = vand.u32 %v686, 4294901760
        %801 = vmatpush1.msra.mxu0 %v800
        %802 = vmatprep.subr.mxu0 0.0
        %v803 = vand.u32 %v687, 4294901760
        %804 = vmatpush1.msra.mxu0 %v803
        %805 = vmatprep.subr.mxu0 0.0
        %v806 = vand.u32 %v688, 4294901760
        %807 = vmatpush1.msra.mxu0 %v806
        %808 = vmatprep.subr.mxu0 0.0
        %v809 = vand.u32 %v689, 4294901760
        %810 = vmatpush1.msra.mxu0 %v809
        %811 = vmatprep.subr.mxu0 0.0
        %v812 = vand.u32 %v690, 4294901760
        %813 = vmatpush1.msra.mxu0 %v812
        %814 = vmatprep.subr.mxu0 0.0
        %v815 = vand.u32 %v691, 4294901760
        %816 = vmatpush1.msra.mxu0 %v815
        %817 = vmatprep.subr.mxu0 0.0
        %v818 = vand.u32 %v692, 4294901760
        %819 = vmatpush1.msra.mxu0 %v818
        %820 = vmatprep.subr.mxu0 0.0
        %v821 = vand.u32 %v693, 4294901760
        %822 = vmatpush1.msra.mxu0 %v821
        %823 = vmatprep.subr.mxu0 0.0
        %v824 = vand.u32 %v694, 4294901760
        %825 = vmatpush1.msra.mxu0 %v824
        %826 = vmatprep.subr.mxu0 0.0
        %v827 = vand.u32 %v695, 4294901760
        %828 = vmatpush1.msra.mxu0 %v827
        %829 = vmatprep.subr.mxu0 0.0
        %v830 = vand.u32 %v696, 4294901760
        %831 = vmatpush1.msra.mxu0 %v830
        %832 = vmatprep.subr.mxu0 0.0
        %v833 = vand.u32 %v697, 4294901760
        %834 = vmatpush1.msra.mxu0 %v833
        %835 = vmatprep.subr.mxu0 0.0
        %836 = vmatpush1.msra.mxu0 0.0
        %837 = vmatprep.subr.mxu0 0.0
        %838 = vmatpush1.msra.mxu0 0.0
        %839 = vmatprep.subr.mxu0 0.0
        %840 = vmatpush1.msra.mxu0 0.0
        %841 = vmatprep.subr.mxu0 0.0
        %842 = vmatpush1.msra.mxu0 0.0
        %843 = vmatprep.subr.mxu0 0.0
        %844 = vmatpush1.msra.mxu0 0.0
        %845 = vmatprep.subr.mxu0 0.0
        %846 = vmatpush1.msra.mxu0 0.0
        %847 = vmatprep.subr.mxu0 0.0
        %848 = vmatpush1.msra.mxu0 0.0
        %849 = vmatprep.subr.mxu0 0.0
        %850 = vmatpush1.msra.mxu0 0.0
        %v851 = vand.u32 %v740, 4294901760
        %v852 = vsub.f32 %v740, %v851
        %v853 = vand.u32 %v852, 4294901760
        %v854 = vsub.f32 %v852, %v853
        %v855 = vand.u32 %v854, 4294901760
        %856 = vmatprep.mubr.f32.mxu0 %v855
        %v857 = vand.u32 %v341, 4294901760
        %v858 = vsub.f32 %v341, %v857
        %v859 = vand.u32 %v858, 4294901760
        %v860 = vsub.f32 %v858, %v859
        %v861 = vand.u32 %v860, 4294901760
        %862 = vmatmul.mubr.f32.gmra.mrb[0].mxu0 %v861
        %v863 = vpop.f32.mrb[0].mxu0
        %v864 = vadd.f32 %v701, %v863
        %v865 = vpop.f32.mrb[0].mxu0
        %v866 = vand.u32 %v743, 4294901760
        %v867 = vsub.f32 %v743, %v866
        %v868 = vand.u32 %v867, 4294901760
        %v869 = vsub.f32 %v867, %v868
        %v870 = vand.u32 %v869, 4294901760
        %871 = vmatprep.mubr.f32.mxu0 %v870
        %v872 = vand.u32 %v343, 4294901760
        %v873 = vsub.f32 %v343, %v872
        %v874 = vand.u32 %v873, 4294901760
        %v875 = vsub.f32 %v873, %v874
        %v876 = vand.u32 %v875, 4294901760
        %877 = vmatmul.mubr.f32.gmra.mrb[0].mxu0 %v876
        %v878 = vpop.f32.mrb[0].mxu0
        %v879 = vadd.f32 %v706, %v878
        %v880 = vpop.f32.mrb[0].mxu0
        %v881 = vand.u32 %v746, 4294901760
        %v882 = vsub.f32 %v746, %v881
        %v883 = vand.u32 %v882, 4294901760
        %v884 = vsub.f32 %v882, %v883
        %v885 = vand.u32 %v884, 4294901760
        %886 = vmatprep.mubr.f32.mxu0 %v885
        %v887 = vand.u32 %v345, 4294901760
        %v888 = vsub.f32 %v345, %v887
        %v889 = vand.u32 %v888, 4294901760
        %v890 = vsub.f32 %v888, %v889
        %v891 = vand.u32 %v890, 4294901760
        %892 = vmatmul.mubr.f32.gmra.mrb[0].mxu0 %v891
        %v893 = vpop.f32.mrb[0].mxu0
        %v894 = vadd.f32 %v711, %v893
        %v895 = vpop.f32.mrb[0].mxu0
        %v896 = vand.u32 %v749, 4294901760
        %v897 = vsub.f32 %v749, %v896
        %v898 = vand.u32 %v897, 4294901760
        %v899 = vsub.f32 %v897, %v898
        %v900 = vand.u32 %v899, 4294901760
        %901 = vmatprep.mubr.f32.mxu0 %v900
        %v902 = vand.u32 %v347, 4294901760
        %v903 = vsub.f32 %v347, %v902
        %v904 = vand.u32 %v903, 4294901760
        %v905 = vsub.f32 %v903, %v904
        %v906 = vand.u32 %v905, 4294901760
        %907 = vmatmul.mubr.f32.gmra.mrb[0].mxu0 %v906
        %v908 = vpop.f32.mrb[0].mxu0
        %v909 = vadd.f32 %v716, %v908
        %v910 = vpop.f32.mrb[0].mxu0
        %v911 = vand.u32 %v752, 4294901760
        %v912 = vsub.f32 %v752, %v911
        %v913 = vand.u32 %v912, 4294901760
        %v914 = vsub.f32 %v912, %v913
        %v915 = vand.u32 %v914, 4294901760
        %916 = vmatprep.mubr.f32.mxu0 %v915
        %v917 = vand.u32 %v349, 4294901760
        %v918 = vsub.f32 %v349, %v917
        %v919 = vand.u32 %v918, 4294901760
        %v920 = vsub.f32 %v918, %v919
        %v921 = vand.u32 %v920, 4294901760
        %922 = vmatmul.mubr.f32.gmra.mrb[0].mxu0 %v921
        %v923 = vpop.f32.mrb[0].mxu0
        %v924 = vadd.f32 %v721, %v923
        %v925 = vpop.f32.mrb[0].mxu0
        %v926 = vand.u32 %v755, 4294901760
        %v927 = vsub.f32 %v755, %v926
        %v928 = vand.u32 %v927, 4294901760
        %v929 = vsub.f32 %v927, %v928
        %v930 = vand.u32 %v929, 4294901760
        %931 = vmatprep.mubr.f32.mxu0 %v930
        %v932 = vand.u32 %v351, 4294901760
        %v933 = vsub.f32 %v351, %v932
        %v934 = vand.u32 %v933, 4294901760
        %v935 = vsub.f32 %v933, %v934
        %v936 = vand.u32 %v935, 4294901760
        %937 = vmatmul.mubr.f32.gmra.mrb[0].mxu0 %v936
        %v938 = vpop.f32.mrb[0].mxu0
        %v939 = vadd.f32 %v726, %v938
        %v940 = vpop.f32.mrb[0].mxu0
        %v941 = vand.u32 %v758, 4294901760
        %v942 = vsub.f32 %v758, %v941
        %v943 = vand.u32 %v942, 4294901760
        %v944 = vsub.f32 %v942, %v943
        %v945 = vand.u32 %v944, 4294901760
        %946 = vmatprep.mubr.f32.mxu0 %v945
        %v947 = vand.u32 %v353, 4294901760
        %v948 = vsub.f32 %v353, %v947
        %v949 = vand.u32 %v948, 4294901760
        %v950 = vsub.f32 %v948, %v949
        %v951 = vand.u32 %v950, 4294901760
        %952 = vmatmul.mubr.f32.gmra.mrb[0].mxu0 %v951
        %v953 = vpop.f32.mrb[0].mxu0
        %v954 = vadd.f32 %v731, %v953
        %v955 = vpop.f32.mrb[0].mxu0
        %v956 = vand.u32 %v761, 4294901760
        %v957 = vsub.f32 %v761, %v956
        %v958 = vand.u32 %v957, 4294901760
        %v959 = vsub.f32 %v957, %v958
        %v960 = vand.u32 %v959, 4294901760
        %961 = vmatprep.mubr.f32.mxu0 %v960
        %v962 = vand.u32 %v355, 4294901760
        %v963 = vsub.f32 %v355, %v962
        %v964 = vand.u32 %v963, 4294901760
        %v965 = vsub.f32 %v963, %v964
        %v966 = vand.u32 %v965, 4294901760
        %967 = vmatmul.mubr.f32.gmra.mrb[0].mxu0 %v966
        %v968 = vpop.f32.mrb[0].mxu0
        %v969 = vadd.f32 %v736, %v968
        %v970 = vpop.f32.mrb[0].mxu0
        %971 = vdwg.mxu0
        %972 = vmatprep.subr.mxu0 0.0
        %v973 = vand.u32 %v674, 4294901760
        %v974 = vsub.f32 %v674, %v973
        %v975 = vand.u32 %v974, 4294901760
        %v976 = vsub.f32 %v974, %v975
        %v977 = vand.u32 %v976, 4294901760
        %978 = vmatpush1.msra.mxu0 %v977
        %979 = vmatprep.subr.mxu0 0.0
        %v980 = vand.u32 %v675, 4294901760
        %v981 = vsub.f32 %v675, %v980
        %v982 = vand.u32 %v981, 4294901760
        %v983 = vsub.f32 %v981, %v982
        %v984 = vand.u32 %v983, 4294901760
        %985 = vmatpush1.msra.mxu0 %v984
        %986 = vmatprep.subr.mxu0 0.0
        %v987 = vand.u32 %v676, 4294901760
        %v988 = vsub.f32 %v676, %v987
        %v989 = vand.u32 %v988, 4294901760
        %v990 = vsub.f32 %v988, %v989
        %v991 = vand.u32 %v990, 4294901760
        %992 = vmatpush1.msra.mxu0 %v991
        %993 = vmatprep.subr.mxu0 0.0
        %v994 = vand.u32 %v677, 4294901760
        %v995 = vsub.f32 %v677, %v994
        %v996 = vand.u32 %v995, 4294901760
        %v997 = vsub.f32 %v995, %v996
        %v998 = vand.u32 %v997, 4294901760
        %999 = vmatpush1.msra.mxu0 %v998
        %1000 = vmatprep.subr.mxu0 0.0
        %v1001 = vand.u32 %v678, 4294901760
        %v1002 = vsub.f32 %v678, %v1001
        %v1003 = vand.u32 %v1002, 4294901760
        %v1004 = vsub.f32 %v1002, %v1003
        %v1005 = vand.u32 %v1004, 4294901760
        %1006 = vmatpush1.msra.mxu0 %v1005
        %1007 = vmatprep.subr.mxu0 0.0
        %v1008 = vand.u32 %v679, 4294901760
        %v1009 = vsub.f32 %v679, %v1008
        %v1010 = vand.u32 %v1009, 4294901760
        %v1011 = vsub.f32 %v1009, %v1010
        %v1012 = vand.u32 %v1011, 4294901760
        %1013 = vmatpush1.msra.mxu0 %v1012
        %1014 = vmatprep.subr.mxu0 0.0
        %v1015 = vand.u32 %v680, 4294901760
        %v1016 = vsub.f32 %v680, %v1015
        %v1017 = vand.u32 %v1016, 4294901760
        %v1018 = vsub.f32 %v1016, %v1017
        %v1019 = vand.u32 %v1018, 4294901760
        %1020 = vmatpush1.msra.mxu0 %v1019
        %1021 = vmatprep.subr.mxu0 0.0
        %v1022 = vand.u32 %v681, 4294901760
        %v1023 = vsub.f32 %v681, %v1022
        %v1024 = vand.u32 %v1023, 4294901760
        %v1025 = vsub.f32 %v1023, %v1024
        %v1026 = vand.u32 %v1025, 4294901760
        %1027 = vmatpush1.msra.mxu0 %v1026
        %1028 = vmatprep.subr.mxu0 0.0
        %v1029 = vand.u32 %v682, 4294901760
        %v1030 = vsub.f32 %v682, %v1029
        %v1031 = vand.u32 %v1030, 4294901760
        %v1032 = vsub.f32 %v1030, %v1031
        %v1033 = vand.u32 %v1032, 4294901760
        %1034 = vmatpush1.msra.mxu0 %v1033
        %1035 = vmatprep.subr.mxu0 0.0
        %v1036 = vand.u32 %v683, 4294901760
        %v1037 = vsub.f32 %v683, %v1036
        %v1038 = vand.u32 %v1037, 4294901760
        %v1039 = vsub.f32 %v1037, %v1038
        %v1040 = vand.u32 %v1039, 4294901760
        %1041 = vmatpush1.msra.mxu0 %v1040
        %1042 = vmatprep.subr.mxu0 0.0
        %v1043 = vand.u32 %v684, 4294901760
        %v1044 = vsub.f32 %v684, %v1043
        %v1045 = vand.u32 %v1044, 4294901760
        %v1046 = vsub.f32 %v1044, %v1045
        %v1047 = vand.u32 %v1046, 4294901760
        %1048 = vmatpush1.msra.mxu0 %v1047
        %1049 = vmatprep.subr.mxu0 0.0
        %v1050 = vand.u32 %v685, 4294901760
        %v1051 = vsub.f32 %v685, %v1050
        %v1052 = vand.u32 %v1051, 4294901760
        %v1053 = vsub.f32 %v1051, %v1052
        %v1054 = vand.u32 %v1053, 4294901760
        %1055 = vmatpush1.msra.mxu0 %v1054
        %1056 = vmatprep.subr.mxu0 0.0
        %v1057 = vand.u32 %v686, 4294901760
        %v1058 = vsub.f32 %v686, %v1057
        %v1059 = vand.u32 %v1058, 4294901760
        %v1060 = vsub.f32 %v1058, %v1059
        %v1061 = vand.u32 %v1060, 4294901760
        %1062 = vmatpush1.msra.mxu0 %v1061
        %1063 = vmatprep.subr.mxu0 0.0
        %v1064 = vand.u32 %v687, 4294901760
        %v1065 = vsub.f32 %v687, %v1064
        %v1066 = vand.u32 %v1065, 4294901760
        %v1067 = vsub.f32 %v1065, %v1066
        %v1068 = vand.u32 %v1067, 4294901760
        %1069 = vmatpush1.msra.mxu0 %v1068
        %1070 = vmatprep.subr.mxu0 0.0
        %v1071 = vand.u32 %v688, 4294901760
        %v1072 = vsub.f32 %v688, %v1071
        %v1073 = vand.u32 %v1072, 4294901760
        %v1074 = vsub.f32 %v1072, %v1073
        %v1075 = vand.u32 %v1074, 4294901760
        %1076 = vmatpush1.msra.mxu0 %v1075
        %1077 = vmatprep.subr.mxu0 0.0
        %v1078 = vand.u32 %v689, 4294901760
        %v1079 = vsub.f32 %v689, %v1078
        %v1080 = vand.u32 %v1079, 4294901760
        %v1081 = vsub.f32 %v1079, %v1080
        %v1082 = vand.u32 %v1081, 4294901760
        %1083 = vmatpush1.msra.mxu0 %v1082
        %1084 = vmatprep.subr.mxu0 0.0
        %v1085 = vand.u32 %v690, 4294901760
        %v1086 = vsub.f32 %v690, %v1085
        %v1087 = vand.u32 %v1086, 4294901760
        %v1088 = vsub.f32 %v1086, %v1087
        %v1089 = vand.u32 %v1088, 4294901760
        %1090 = vmatpush1.msra.mxu0 %v1089
        %1091 = vmatprep.subr.mxu0 0.0
        %v1092 = vand.u32 %v691, 4294901760
        %v1093 = vsub.f32 %v691, %v1092
        %v1094 = vand.u32 %v1093, 4294901760
        %v1095 = vsub.f32 %v1093, %v1094
        %v1096 = vand.u32 %v1095, 4294901760
        %1097 = vmatpush1.msra.mxu0 %v1096
        %1098 = vmatprep.subr.mxu0 0.0
        %v1099 = vand.u32 %v692, 4294901760
        %v1100 = vsub.f32 %v692, %v1099
        %v1101 = vand.u32 %v1100, 4294901760
        %v1102 = vsub.f32 %v1100, %v1101
        %v1103 = vand.u32 %v1102, 4294901760
        %1104 = vmatpush1.msra.mxu0 %v1103
        %1105 = vmatprep.subr.mxu0 0.0
        %v1106 = vand.u32 %v693, 4294901760
        %v1107 = vsub.f32 %v693, %v1106
        %v1108 = vand.u32 %v1107, 4294901760
        %v1109 = vsub.f32 %v1107, %v1108
        %v1110 = vand.u32 %v1109, 4294901760
        %1111 = vmatpush1.msra.mxu0 %v1110
        %1112 = vmatprep.subr.mxu0 0.0
        %v1113 = vand.u32 %v694, 4294901760
        %v1114 = vsub.f32 %v694, %v1113
        %v1115 = vand.u32 %v1114, 4294901760
        %v1116 = vsub.f32 %v1114, %v1115
        %v1117 = vand.u32 %v1116, 4294901760
        %1118 = vmatpush1.msra.mxu0 %v1117
        %1119 = vmatprep.subr.mxu0 0.0
        %v1120 = vand.u32 %v695, 4294901760
        %v1121 = vsub.f32 %v695, %v1120
        %v1122 = vand.u32 %v1121, 4294901760
        %v1123 = vsub.f32 %v1121, %v1122
        %v1124 = vand.u32 %v1123, 4294901760
        %1125 = vmatpush1.msra.mxu0 %v1124
        %1126 = vmatprep.subr.mxu0 0.0
        %v1127 = vand.u32 %v696, 4294901760
        %v1128 = vsub.f32 %v696, %v1127
        %v1129 = vand.u32 %v1128, 4294901760
        %v1130 = vsub.f32 %v1128, %v1129
        %v1131 = vand.u32 %v1130, 4294901760
        %1132 = vmatpush1.msra.mxu0 %v1131
        %1133 = vmatprep.subr.mxu0 0.0
        %v1134 = vand.u32 %v697, 4294901760
        %v1135 = vsub.f32 %v697, %v1134
        %v1136 = vand.u32 %v1135, 4294901760
        %v1137 = vsub.f32 %v1135, %v1136
        %v1138 = vand.u32 %v1137, 4294901760
        %1139 = vmatpush1.msra.mxu0 %v1138
        %1140 = vmatprep.subr.mxu0 0.0
        %1141 = vmatpush1.msra.mxu0 0.0
        %1142 = vmatprep.subr.mxu0 0.0
        %1143 = vmatpush1.msra.mxu0 0.0
        %1144 = vmatprep.subr.mxu0 0.0
        %1145 = vmatpush1.msra.mxu0 0.0
        %1146 = vmatprep.subr.mxu0 0.0
        %1147 = vmatpush1.msra.mxu0 0.0
        %1148 = vmatprep.subr.mxu0 0.0
        %1149 = vmatpush1.msra.mxu0 0.0
        %1150 = vmatprep.subr.mxu0 0.0
        %1151 = vmatpush1.msra.mxu0 0.0
        %1152 = vmatprep.subr.mxu0 0.0
        %1153 = vmatpush1.msra.mxu0 0.0
        %1154 = vmatprep.subr.mxu0 0.0
        %1155 = vmatpush1.msra.mxu0 0.0
        %v1156 = vand.u32 %v740, 4294901760
        %1157 = vmatprep.mubr.f32.mxu0 %v1156
        %v1158 = vand.u32 %v341, 4294901760
        %1159 = vmatmul.mubr.f32.gmra.mrb[0].mxu0 %v1158
        %v1160 = vpop.f32.mrb[0].mxu0
        %v1161 = vadd.f32 %v864, %v1160
        %v1162 = vpop.f32.mrb[0].mxu0
        %v1163 = vand.u32 %v743, 4294901760
        %1164 = vmatprep.mubr.f32.mxu0 %v1163
        %v1165 = vand.u32 %v343, 4294901760
        %1166 = vmatmul.mubr.f32.gmra.mrb[0].mxu0 %v1165
        %v1167 = vpop.f32.mrb[0].mxu0
        %v1168 = vadd.f32 %v879, %v1167
        %v1169 = vpop.f32.mrb[0].mxu0
        %v1170 = vand.u32 %v746, 4294901760
        %1171 = vmatprep.mubr.f32.mxu0 %v1170
        %v1172 = vand.u32 %v345, 4294901760
        %1173 = vmatmul.mubr.f32.gmra.mrb[0].mxu0 %v1172
        %v1174 = vpop.f32.mrb[0].mxu0
        %v1175 = vadd.f32 %v894, %v1174
        %v1176 = vpop.f32.mrb[0].mxu0
        %v1177 = vand.u32 %v749, 4294901760
        %1178 = vmatprep.mubr.f32.mxu0 %v1177
        %v1179 = vand.u32 %v347, 4294901760
        %1180 = vmatmul.mubr.f32.gmra.mrb[0].mxu0 %v1179
        %v1181 = vpop.f32.mrb[0].mxu0
        %v1182 = vadd.f32 %v909, %v1181
        %v1183 = vpop.f32.mrb[0].mxu0
        %v1184 = vand.u32 %v752, 4294901760
        %1185 = vmatprep.mubr.f32.mxu0 %v1184
        %v1186 = vand.u32 %v349, 4294901760
        %1187 = vmatmul.mubr.f32.gmra.mrb[0].mxu0 %v1186
        %v1188 = vpop.f32.mrb[0].mxu0
        %v1189 = vadd.f32 %v924, %v1188
        %v1190 = vpop.f32.mrb[0].mxu0
        %v1191 = vand.u32 %v755, 4294901760
        %1192 = vmatprep.mubr.f32.mxu0 %v1191
        %v1193 = vand.u32 %v351, 4294901760
        %1194 = vmatmul.mubr.f32.gmra.mrb[0].mxu0 %v1193
        %v1195 = vpop.f32.mrb[0].mxu0
        %v1196 = vadd.f32 %v939, %v1195
        %v1197 = vpop.f32.mrb[0].mxu0
        %v1198 = vand.u32 %v758, 4294901760
        %1199 = vmatprep.mubr.f32.mxu0 %v1198
        %v1200 = vand.u32 %v353, 4294901760
        %1201 = vmatmul.mubr.f32.gmra.mrb[0].mxu0 %v1200
        %v1202 = vpop.f32.mrb[0].mxu0
        %v1203 = vadd.f32 %v954, %v1202
        %v1204 = vpop.f32.mrb[0].mxu0
        %v1205 = vand.u32 %v761, 4294901760
        %1206 = vmatprep.mubr.f32.mxu0 %v1205
        %v1207 = vand.u32 %v355, 4294901760
        %1208 = vmatmul.mubr.f32.gmra.mrb[0].mxu0 %v1207
        %v1209 = vpop.f32.mrb[0].mxu0
        %v1210 = vadd.f32 %v969, %v1209
        %v1211 = vpop.f32.mrb[0].mxu0
        %1212 = vdwg.mxu0
        %1213 = vmatprep.subr.mxu0 0.0
        %v1214 = vand.u32 %v674, 4294901760
        %v1215 = vsub.f32 %v674, %v1214
        %1216 = vmatpush1.msra.mxu0 %v1215
        %1217 = vmatprep.subr.mxu0 0.0
        %v1218 = vand.u32 %v675, 4294901760
        %v1219 = vsub.f32 %v675, %v1218
        %1220 = vmatpush1.msra.mxu0 %v1219
        %1221 = vmatprep.subr.mxu0 0.0
        %v1222 = vand.u32 %v676, 4294901760
        %v1223 = vsub.f32 %v676, %v1222
        %1224 = vmatpush1.msra.mxu0 %v1223
        %1225 = vmatprep.subr.mxu0 0.0
        %v1226 = vand.u32 %v677, 4294901760
        %v1227 = vsub.f32 %v677, %v1226
        %1228 = vmatpush1.msra.mxu0 %v1227
        %1229 = vmatprep.subr.mxu0 0.0
        %v1230 = vand.u32 %v678, 4294901760
        %v1231 = vsub.f32 %v678, %v1230
        %1232 = vmatpush1.msra.mxu0 %v1231
        %1233 = vmatprep.subr.mxu0 0.0
        %v1234 = vand.u32 %v679, 4294901760
        %v1235 = vsub.f32 %v679, %v1234
        %1236 = vmatpush1.msra.mxu0 %v1235
        %1237 = vmatprep.subr.mxu0 0.0
        %v1238 = vand.u32 %v680, 4294901760
        %v1239 = vsub.f32 %v680, %v1238
        %1240 = vmatpush1.msra.mxu0 %v1239
        %1241 = vmatprep.subr.mxu0 0.0
        %v1242 = vand.u32 %v681, 4294901760
        %v1243 = vsub.f32 %v681, %v1242
        %1244 = vmatpush1.msra.mxu0 %v1243
        %1245 = vmatprep.subr.mxu0 0.0
        %v1246 = vand.u32 %v682, 4294901760
        %v1247 = vsub.f32 %v682, %v1246
        %1248 = vmatpush1.msra.mxu0 %v1247
        %1249 = vmatprep.subr.mxu0 0.0
        %v1250 = vand.u32 %v683, 4294901760
        %v1251 = vsub.f32 %v683, %v1250
        %1252 = vmatpush1.msra.mxu0 %v1251
        %1253 = vmatprep.subr.mxu0 0.0
        %v1254 = vand.u32 %v684, 4294901760
        %v1255 = vsub.f32 %v684, %v1254
        %1256 = vmatpush1.msra.mxu0 %v1255
        %1257 = vmatprep.subr.mxu0 0.0
        %v1258 = vand.u32 %v685, 4294901760
        %v1259 = vsub.f32 %v685, %v1258
        %1260 = vmatpush1.msra.mxu0 %v1259
        %1261 = vmatprep.subr.mxu0 0.0
        %v1262 = vand.u32 %v686, 4294901760
        %v1263 = vsub.f32 %v686, %v1262
        %1264 = vmatpush1.msra.mxu0 %v1263
        %1265 = vmatprep.subr.mxu0 0.0
        %v1266 = vand.u32 %v687, 4294901760
        %v1267 = vsub.f32 %v687, %v1266
        %1268 = vmatpush1.msra.mxu0 %v1267
        %1269 = vmatprep.subr.mxu0 0.0
        %v1270 = vand.u32 %v688, 4294901760
        %v1271 = vsub.f32 %v688, %v1270
        %1272 = vmatpush1.msra.mxu0 %v1271
        %1273 = vmatprep.subr.mxu0 0.0
        %v1274 = vand.u32 %v689, 4294901760
        %v1275 = vsub.f32 %v689, %v1274
        %1276 = vmatpush1.msra.mxu0 %v1275
        %1277 = vmatprep.subr.mxu0 0.0
        %v1278 = vand.u32 %v690, 4294901760
        %v1279 = vsub.f32 %v690, %v1278
        %1280 = vmatpush1.msra.mxu0 %v1279
        %1281 = vmatprep.subr.mxu0 0.0
        %v1282 = vand.u32 %v691, 4294901760
        %v1283 = vsub.f32 %v691, %v1282
        %1284 = vmatpush1.msra.mxu0 %v1283
        %1285 = vmatprep.subr.mxu0 0.0
        %v1286 = vand.u32 %v692, 4294901760
        %v1287 = vsub.f32 %v692, %v1286
        %1288 = vmatpush1.msra.mxu0 %v1287
        %1289 = vmatprep.subr.mxu0 0.0
        %v1290 = vand.u32 %v693, 4294901760
        %v1291 = vsub.f32 %v693, %v1290
        %1292 = vmatpush1.msra.mxu0 %v1291
        %1293 = vmatprep.subr.mxu0 0.0
        %v1294 = vand.u32 %v694, 4294901760
        %v1295 = vsub.f32 %v694, %v1294
        %1296 = vmatpush1.msra.mxu0 %v1295
        %1297 = vmatprep.subr.mxu0 0.0
        %v1298 = vand.u32 %v695, 4294901760
        %v1299 = vsub.f32 %v695, %v1298
        %1300 = vmatpush1.msra.mxu0 %v1299
        %1301 = vmatprep.subr.mxu0 0.0
        %v1302 = vand.u32 %v696, 4294901760
        %v1303 = vsub.f32 %v696, %v1302
        %1304 = vmatpush1.msra.mxu0 %v1303
        %1305 = vmatprep.subr.mxu0 0.0
        %v1306 = vand.u32 %v697, 4294901760
        %v1307 = vsub.f32 %v697, %v1306
        %1308 = vmatpush1.msra.mxu0 %v1307
        %1309 = vmatprep.subr.mxu0 0.0
        %1310 = vmatpush1.msra.mxu0 0.0
        %1311 = vmatprep.subr.mxu0 0.0
        %1312 = vmatpush1.msra.mxu0 0.0
        %1313 = vmatprep.subr.mxu0 0.0
        %1314 = vmatpush1.msra.mxu0 0.0
        %1315 = vmatprep.subr.mxu0 0.0
        %1316 = vmatpush1.msra.mxu0 0.0
        %1317 = vmatprep.subr.mxu0 0.0
        %1318 = vmatpush1.msra.mxu0 0.0
        %1319 = vmatprep.subr.mxu0 0.0
        %1320 = vmatpush1.msra.mxu0 0.0
        %1321 = vmatprep.subr.mxu0 0.0
        %1322 = vmatpush1.msra.mxu0 0.0
        %1323 = vmatprep.subr.mxu0 0.0
        %1324 = vmatpush1.msra.mxu0 0.0
        %v1325 = vand.u32 %v740, 4294901760
        %v1326 = vsub.f32 %v740, %v1325
        %1327 = vmatprep.mubr.f32.mxu0 %v1326
        %v1328 = vand.u32 %v341, 4294901760
        %v1329 = vsub.f32 %v341, %v1328
        %1330 = vmatmul.mubr.f32.gmra.mrb[0].mxu0 %v1329
        %v1331 = vpop.f32.mrb[0].mxu0
        %v1332 = vadd.f32 %v1161, %v1331
        %v1333 = vpop.f32.mrb[0].mxu0
        %v1334 = vand.u32 %v743, 4294901760
        %v1335 = vsub.f32 %v743, %v1334
        %1336 = vmatprep.mubr.f32.mxu0 %v1335
        %v1337 = vand.u32 %v343, 4294901760
        %v1338 = vsub.f32 %v343, %v1337
        %1339 = vmatmul.mubr.f32.gmra.mrb[0].mxu0 %v1338
        %v1340 = vpop.f32.mrb[0].mxu0
        %v1341 = vadd.f32 %v1168, %v1340
        %v1342 = vpop.f32.mrb[0].mxu0
        %v1343 = vand.u32 %v746, 4294901760
        %v1344 = vsub.f32 %v746, %v1343
        %1345 = vmatprep.mubr.f32.mxu0 %v1344
        %v1346 = vand.u32 %v345, 4294901760
        %v1347 = vsub.f32 %v345, %v1346
        %1348 = vmatmul.mubr.f32.gmra.mrb[0].mxu0 %v1347
        %v1349 = vpop.f32.mrb[0].mxu0
        %v1350 = vadd.f32 %v1175, %v1349
        %v1351 = vpop.f32.mrb[0].mxu0
        %v1352 = vand.u32 %v749, 4294901760
        %v1353 = vsub.f32 %v749, %v1352
        %1354 = vmatprep.mubr.f32.mxu0 %v1353
        %v1355 = vand.u32 %v347, 4294901760
        %v1356 = vsub.f32 %v347, %v1355
        %1357 = vmatmul.mubr.f32.gmra.mrb[0].mxu0 %v1356
        %v1358 = vpop.f32.mrb[0].mxu0
        %v1359 = vadd.f32 %v1182, %v1358
        %v1360 = vpop.f32.mrb[0].mxu0
        %v1361 = vand.u32 %v752, 4294901760
        %v1362 = vsub.f32 %v752, %v1361
        %1363 = vmatprep.mubr.f32.mxu0 %v1362
        %v1364 = vand.u32 %v349, 4294901760
        %v1365 = vsub.f32 %v349, %v1364
        %1366 = vmatmul.mubr.f32.gmra.mrb[0].mxu0 %v1365
        %v1367 = vpop.f32.mrb[0].mxu0
        %v1368 = vadd.f32 %v1189, %v1367
        %v1369 = vpop.f32.mrb[0].mxu0
        %v1370 = vand.u32 %v755, 4294901760
        %v1371 = vsub.f32 %v755, %v1370
        %1372 = vmatprep.mubr.f32.mxu0 %v1371
        %v1373 = vand.u32 %v351, 4294901760
        %v1374 = vsub.f32 %v351, %v1373
        %1375 = vmatmul.mubr.f32.gmra.mrb[0].mxu0 %v1374
        %v1376 = vpop.f32.mrb[0].mxu0
        %v1377 = vadd.f32 %v1196, %v1376
        %v1378 = vpop.f32.mrb[0].mxu0
        %v1379 = vand.u32 %v758, 4294901760
        %v1380 = vsub.f32 %v758, %v1379
        %1381 = vmatprep.mubr.f32.mxu0 %v1380
        %v1382 = vand.u32 %v353, 4294901760
        %v1383 = vsub.f32 %v353, %v1382
        %1384 = vmatmul.mubr.f32.gmra.mrb[0].mxu0 %v1383
        %v1385 = vpop.f32.mrb[0].mxu0
        %v1386 = vadd.f32 %v1203, %v1385
        %v1387 = vpop.f32.mrb[0].mxu0
        %v1388 = vand.u32 %v761, 4294901760
        %v1389 = vsub.f32 %v761, %v1388
        %1390 = vmatprep.mubr.f32.mxu0 %v1389
        %v1391 = vand.u32 %v355, 4294901760
        %v1392 = vsub.f32 %v355, %v1391
        %1393 = vmatmul.mubr.f32.gmra.mrb[0].mxu0 %v1392
        %v1394 = vpop.f32.mrb[0].mxu0
        %v1395 = vadd.f32 %v1210, %v1394
        %v1396 = vpop.f32.mrb[0].mxu0
        %1397 = vdwg.mxu0
        %1398 = vmatprep.subr.mxu0 0.0
        %v1399 = vand.u32 %v674, 4294901760
        %1400 = vmatpush1.msra.mxu0 %v1399
        %1401 = vmatprep.subr.mxu0 0.0
        %v1402 = vand.u32 %v675, 4294901760
        %1403 = vmatpush1.msra.mxu0 %v1402
        %1404 = vmatprep.subr.mxu0 0.0
        %v1405 = vand.u32 %v676, 4294901760
        %1406 = vmatpush1.msra.mxu0 %v1405
        %1407 = vmatprep.subr.mxu0 0.0
        %v1408 = vand.u32 %v677, 4294901760
        %1409 = vmatpush1.msra.mxu0 %v1408
        %1410 = vmatprep.subr.mxu0 0.0
        %v1411 = vand.u32 %v678, 4294901760
        %1412 = vmatpush1.msra.mxu0 %v1411
        %1413 = vmatprep.subr.mxu0 0.0
        %v1414 = vand.u32 %v679, 4294901760
        %1415 = vmatpush1.msra.mxu0 %v1414
        %1416 = vmatprep.subr.mxu0 0.0
        %v1417 = vand.u32 %v680, 4294901760
        %1418 = vmatpush1.msra.mxu0 %v1417
        %1419 = vmatprep.subr.mxu0 0.0
        %v1420 = vand.u32 %v681, 4294901760
        %1421 = vmatpush1.msra.mxu0 %v1420
        %1422 = vmatprep.subr.mxu0 0.0
        %v1423 = vand.u32 %v682, 4294901760
        %1424 = vmatpush1.msra.mxu0 %v1423
        %1425 = vmatprep.subr.mxu0 0.0
        %v1426 = vand.u32 %v683, 4294901760
        %1427 = vmatpush1.msra.mxu0 %v1426
        %1428 = vmatprep.subr.mxu0 0.0
        %v1429 = vand.u32 %v684, 4294901760
        %1430 = vmatpush1.msra.mxu0 %v1429
        %1431 = vmatprep.subr.mxu0 0.0
        %v1432 = vand.u32 %v685, 4294901760
        %1433 = vmatpush1.msra.mxu0 %v1432
        %1434 = vmatprep.subr.mxu0 0.0
        %v1435 = vand.u32 %v686, 4294901760
        %1436 = vmatpush1.msra.mxu0 %v1435
        %1437 = vmatprep.subr.mxu0 0.0
        %v1438 = vand.u32 %v687, 4294901760
        %1439 = vmatpush1.msra.mxu0 %v1438
        %1440 = vmatprep.subr.mxu0 0.0
        %v1441 = vand.u32 %v688, 4294901760
        %1442 = vmatpush1.msra.mxu0 %v1441
        %1443 = vmatprep.subr.mxu0 0.0
        %v1444 = vand.u32 %v689, 4294901760
        %1445 = vmatpush1.msra.mxu0 %v1444
        %1446 = vmatprep.subr.mxu0 0.0
        %v1447 = vand.u32 %v690, 4294901760
        %1448 = vmatpush1.msra.mxu0 %v1447
        %1449 = vmatprep.subr.mxu0 0.0
        %v1450 = vand.u32 %v691, 4294901760
        %1451 = vmatpush1.msra.mxu0 %v1450
        %1452 = vmatprep.subr.mxu0 0.0
        %v1453 = vand.u32 %v692, 4294901760
        %1454 = vmatpush1.msra.mxu0 %v1453
        %1455 = vmatprep.subr.mxu0 0.0
        %v1456 = vand.u32 %v693, 4294901760
        %1457 = vmatpush1.msra.mxu0 %v1456
        %1458 = vmatprep.subr.mxu0 0.0
        %v1459 = vand.u32 %v694, 4294901760
        %1460 = vmatpush1.msra.mxu0 %v1459
        %1461 = vmatprep.subr.mxu0 0.0
        %v1462 = vand.u32 %v695, 4294901760
        %1463 = vmatpush1.msra.mxu0 %v1462
        %1464 = vmatprep.subr.mxu0 0.0
        %v1465 = vand.u32 %v696, 4294901760
        %1466 = vmatpush1.msra.mxu0 %v1465
        %1467 = vmatprep.subr.mxu0 0.0
        %v1468 = vand.u32 %v697, 4294901760
        %1469 = vmatpush1.msra.mxu0 %v1468
        %1470 = vmatprep.subr.mxu0 0.0
        %1471 = vmatpush1.msra.mxu0 0.0
        %1472 = vmatprep.subr.mxu0 0.0
        %1473 = vmatpush1.msra.mxu0 0.0
        %1474 = vmatprep.subr.mxu0 0.0
        %1475 = vmatpush1.msra.mxu0 0.0
        %1476 = vmatprep.subr.mxu0 0.0
        %1477 = vmatpush1.msra.mxu0 0.0
        %1478 = vmatprep.subr.mxu0 0.0
        %1479 = vmatpush1.msra.mxu0 0.0
        %1480 = vmatprep.subr.mxu0 0.0
        %1481 = vmatpush1.msra.mxu0 0.0
        %1482 = vmatprep.subr.mxu0 0.0
        %1483 = vmatpush1.msra.mxu0 0.0
        %1484 = vmatprep.subr.mxu0 0.0
        %1485 = vmatpush1.msra.mxu0 0.0
        %v1486 = vand.u32 %v740, 4294901760
        %v1487 = vsub.f32 %v740, %v1486
        %v1488 = vand.u32 %v1487, 4294901760
        %1489 = vmatprep.mubr.f32.mxu0 %v1488
        %v1490 = vand.u32 %v341, 4294901760
        %v1491 = vsub.f32 %v341, %v1490
        %v1492 = vand.u32 %v1491, 4294901760
        %1493 = vmatmul.mubr.f32.gmra.mrb[0].mxu0 %v1492
        %v1494 = vpop.f32.mrb[0].mxu0
        %v1495 = vadd.f32 %v1332, %v1494
        %v1496 = vpop.f32.mrb[0].mxu0
        %v1497 = vand.u32 %v743, 4294901760
        %v1498 = vsub.f32 %v743, %v1497
        %v1499 = vand.u32 %v1498, 4294901760
        %1500 = vmatprep.mubr.f32.mxu0 %v1499
        %v1501 = vand.u32 %v343, 4294901760
        %v1502 = vsub.f32 %v343, %v1501
        %v1503 = vand.u32 %v1502, 4294901760
        %1504 = vmatmul.mubr.f32.gmra.mrb[0].mxu0 %v1503
        %v1505 = vpop.f32.mrb[0].mxu0
        %v1506 = vadd.f32 %v1341, %v1505
        %v1507 = vpop.f32.mrb[0].mxu0
        %v1508 = vand.u32 %v746, 4294901760
        %v1509 = vsub.f32 %v746, %v1508
        %v1510 = vand.u32 %v1509, 4294901760
        %1511 = vmatprep.mubr.f32.mxu0 %v1510
        %v1512 = vand.u32 %v345, 4294901760
        %v1513 = vsub.f32 %v345, %v1512
        %v1514 = vand.u32 %v1513, 4294901760
        %1515 = vmatmul.mubr.f32.gmra.mrb[0].mxu0 %v1514
        %v1516 = vpop.f32.mrb[0].mxu0
        %v1517 = vadd.f32 %v1350, %v1516
        %v1518 = vpop.f32.mrb[0].mxu0
        %v1519 = vand.u32 %v749, 4294901760
        %v1520 = vsub.f32 %v749, %v1519
        %v1521 = vand.u32 %v1520, 4294901760
        %1522 = vmatprep.mubr.f32.mxu0 %v1521
        %v1523 = vand.u32 %v347, 4294901760
        %v1524 = vsub.f32 %v347, %v1523
        %v1525 = vand.u32 %v1524, 4294901760
        %1526 = vmatmul.mubr.f32.gmra.mrb[0].mxu0 %v1525
        %v1527 = vpop.f32.mrb[0].mxu0
        %v1528 = vadd.f32 %v1359, %v1527
        %v1529 = vpop.f32.mrb[0].mxu0
        %v1530 = vand.u32 %v752, 4294901760
        %v1531 = vsub.f32 %v752, %v1530
        %v1532 = vand.u32 %v1531, 4294901760
        %1533 = vmatprep.mubr.f32.mxu0 %v1532
        %v1534 = vand.u32 %v349, 4294901760
        %v1535 = vsub.f32 %v349, %v1534
        %v1536 = vand.u32 %v1535, 4294901760
        %1537 = vmatmul.mubr.f32.gmra.mrb[0].mxu0 %v1536
        %v1538 = vpop.f32.mrb[0].mxu0
        %v1539 = vadd.f32 %v1368, %v1538
        %v1540 = vpop.f32.mrb[0].mxu0
        %v1541 = vand.u32 %v755, 4294901760
        %v1542 = vsub.f32 %v755, %v1541
        %v1543 = vand.u32 %v1542, 4294901760
        %1544 = vmatprep.mubr.f32.mxu0 %v1543
        %v1545 = vand.u32 %v351, 4294901760
        %v1546 = vsub.f32 %v351, %v1545
        %v1547 = vand.u32 %v1546, 4294901760
        %1548 = vmatmul.mubr.f32.gmra.mrb[0].mxu0 %v1547
        %v1549 = vpop.f32.mrb[0].mxu0
        %v1550 = vadd.f32 %v1377, %v1549
        %v1551 = vpop.f32.mrb[0].mxu0
        %v1552 = vand.u32 %v758, 4294901760
        %v1553 = vsub.f32 %v758, %v1552
        %v1554 = vand.u32 %v1553, 4294901760
        %1555 = vmatprep.mubr.f32.mxu0 %v1554
        %v1556 = vand.u32 %v353, 4294901760
        %v1557 = vsub.f32 %v353, %v1556
        %v1558 = vand.u32 %v1557, 4294901760
        %1559 = vmatmul.mubr.f32.gmra.mrb[0].mxu0 %v1558
        %v1560 = vpop.f32.mrb[0].mxu0
        %v1561 = vadd.f32 %v1386, %v1560
        %v1562 = vpop.f32.mrb[0].mxu0
        %v1563 = vand.u32 %v761, 4294901760
        %v1564 = vsub.f32 %v761, %v1563
        %v1565 = vand.u32 %v1564, 4294901760
        %1566 = vmatprep.mubr.f32.mxu0 %v1565
        %v1567 = vand.u32 %v355, 4294901760
        %v1568 = vsub.f32 %v355, %v1567
        %v1569 = vand.u32 %v1568, 4294901760
        %1570 = vmatmul.mubr.f32.gmra.mrb[0].mxu0 %v1569
        %v1571 = vpop.f32.mrb[0].mxu0
        %v1572 = vadd.f32 %v1395, %v1571
        %v1573 = vpop.f32.mrb[0].mxu0
        %1574 = vdwg.mxu0
        %1575 = vmatprep.subr.mxu0 0.0
        %v1576 = vand.u32 %v674, 4294901760
        %v1577 = vsub.f32 %v674, %v1576
        %v1578 = vand.u32 %v1577, 4294901760
        %1579 = vmatpush1.msra.mxu0 %v1578
        %1580 = vmatprep.subr.mxu0 0.0
        %v1581 = vand.u32 %v675, 4294901760
        %v1582 = vsub.f32 %v675, %v1581
        %v1583 = vand.u32 %v1582, 4294901760
        %1584 = vmatpush1.msra.mxu0 %v1583
        %1585 = vmatprep.subr.mxu0 0.0
        %v1586 = vand.u32 %v676, 4294901760
        %v1587 = vsub.f32 %v676, %v1586
        %v1588 = vand.u32 %v1587, 4294901760
        %1589 = vmatpush1.msra.mxu0 %v1588
        %1590 = vmatprep.subr.mxu0 0.0
        %v1591 = vand.u32 %v677, 4294901760
        %v1592 = vsub.f32 %v677, %v1591
        %v1593 = vand.u32 %v1592, 4294901760
        %1594 = vmatpush1.msra.mxu0 %v1593
        %1595 = vmatprep.subr.mxu0 0.0
        %v1596 = vand.u32 %v678, 4294901760
        %v1597 = vsub.f32 %v678, %v1596
        %v1598 = vand.u32 %v1597, 4294901760
        %1599 = vmatpush1.msra.mxu0 %v1598
        %1600 = vmatprep.subr.mxu0 0.0
        %v1601 = vand.u32 %v679, 4294901760
        %v1602 = vsub.f32 %v679, %v1601
        %v1603 = vand.u32 %v1602, 4294901760
        %1604 = vmatpush1.msra.mxu0 %v1603
        %1605 = vmatprep.subr.mxu0 0.0
        %v1606 = vand.u32 %v680, 4294901760
        %v1607 = vsub.f32 %v680, %v1606
        %v1608 = vand.u32 %v1607, 4294901760
        %1609 = vmatpush1.msra.mxu0 %v1608
        %1610 = vmatprep.subr.mxu0 0.0
        %v1611 = vand.u32 %v681, 4294901760
        %v1612 = vsub.f32 %v681, %v1611
        %v1613 = vand.u32 %v1612, 4294901760
        %1614 = vmatpush1.msra.mxu0 %v1613
        %1615 = vmatprep.subr.mxu0 0.0
        %v1616 = vand.u32 %v682, 4294901760
        %v1617 = vsub.f32 %v682, %v1616
        %v1618 = vand.u32 %v1617, 4294901760
        %1619 = vmatpush1.msra.mxu0 %v1618
        %1620 = vmatprep.subr.mxu0 0.0
        %v1621 = vand.u32 %v683, 4294901760
        %v1622 = vsub.f32 %v683, %v1621
        %v1623 = vand.u32 %v1622, 4294901760
        %1624 = vmatpush1.msra.mxu0 %v1623
        %1625 = vmatprep.subr.mxu0 0.0
        %v1626 = vand.u32 %v684, 4294901760
        %v1627 = vsub.f32 %v684, %v1626
        %v1628 = vand.u32 %v1627, 4294901760
        %1629 = vmatpush1.msra.mxu0 %v1628
        %1630 = vmatprep.subr.mxu0 0.0
        %v1631 = vand.u32 %v685, 4294901760
        %v1632 = vsub.f32 %v685, %v1631
        %v1633 = vand.u32 %v1632, 4294901760
        %1634 = vmatpush1.msra.mxu0 %v1633
        %1635 = vmatprep.subr.mxu0 0.0
        %v1636 = vand.u32 %v686, 4294901760
        %v1637 = vsub.f32 %v686, %v1636
        %v1638 = vand.u32 %v1637, 4294901760
        %1639 = vmatpush1.msra.mxu0 %v1638
        %1640 = vmatprep.subr.mxu0 0.0
        %v1641 = vand.u32 %v687, 4294901760
        %v1642 = vsub.f32 %v687, %v1641
        %v1643 = vand.u32 %v1642, 4294901760
        %1644 = vmatpush1.msra.mxu0 %v1643
        %1645 = vmatprep.subr.mxu0 0.0
        %v1646 = vand.u32 %v688, 4294901760
        %v1647 = vsub.f32 %v688, %v1646
        %v1648 = vand.u32 %v1647, 4294901760
        %1649 = vmatpush1.msra.mxu0 %v1648
        %1650 = vmatprep.subr.mxu0 0.0
        %v1651 = vand.u32 %v689, 4294901760
        %v1652 = vsub.f32 %v689, %v1651
        %v1653 = vand.u32 %v1652, 4294901760
        %1654 = vmatpush1.msra.mxu0 %v1653
        %1655 = vmatprep.subr.mxu0 0.0
        %v1656 = vand.u32 %v690, 4294901760
        %v1657 = vsub.f32 %v690, %v1656
        %v1658 = vand.u32 %v1657, 4294901760
        %1659 = vmatpush1.msra.mxu0 %v1658
        %1660 = vmatprep.subr.mxu0 0.0
        %v1661 = vand.u32 %v691, 4294901760
        %v1662 = vsub.f32 %v691, %v1661
        %v1663 = vand.u32 %v1662, 4294901760
        %1664 = vmatpush1.msra.mxu0 %v1663
        %1665 = vmatprep.subr.mxu0 0.0
        %v1666 = vand.u32 %v692, 4294901760
        %v1667 = vsub.f32 %v692, %v1666
        %v1668 = vand.u32 %v1667, 4294901760
        %1669 = vmatpush1.msra.mxu0 %v1668
        %1670 = vmatprep.subr.mxu0 0.0
        %v1671 = vand.u32 %v693, 4294901760
        %v1672 = vsub.f32 %v693, %v1671
        %v1673 = vand.u32 %v1672, 4294901760
        %1674 = vmatpush1.msra.mxu0 %v1673
        %1675 = vmatprep.subr.mxu0 0.0
        %v1676 = vand.u32 %v694, 4294901760
        %v1677 = vsub.f32 %v694, %v1676
        %v1678 = vand.u32 %v1677, 4294901760
        %1679 = vmatpush1.msra.mxu0 %v1678
        %1680 = vmatprep.subr.mxu0 0.0
        %v1681 = vand.u32 %v695, 4294901760
        %v1682 = vsub.f32 %v695, %v1681
        %v1683 = vand.u32 %v1682, 4294901760
        %1684 = vmatpush1.msra.mxu0 %v1683
        %1685 = vmatprep.subr.mxu0 0.0
        %v1686 = vand.u32 %v696, 4294901760
        %v1687 = vsub.f32 %v696, %v1686
        %v1688 = vand.u32 %v1687, 4294901760
        %1689 = vmatpush1.msra.mxu0 %v1688
        %1690 = vmatprep.subr.mxu0 0.0
        %v1691 = vand.u32 %v697, 4294901760
        %v1692 = vsub.f32 %v697, %v1691
        %v1693 = vand.u32 %v1692, 4294901760
        %1694 = vmatpush1.msra.mxu0 %v1693
        %1695 = vmatprep.subr.mxu0 0.0
        %1696 = vmatpush1.msra.mxu0 0.0
        %1697 = vmatprep.subr.mxu0 0.0
        %1698 = vmatpush1.msra.mxu0 0.0
        %1699 = vmatprep.subr.mxu0 0.0
        %1700 = vmatpush1.msra.mxu0 0.0
        %1701 = vmatprep.subr.mxu0 0.0
        %1702 = vmatpush1.msra.mxu0 0.0
        %1703 = vmatprep.subr.mxu0 0.0
        %1704 = vmatpush1.msra.mxu0 0.0
        %1705 = vmatprep.subr.mxu0 0.0
        %1706 = vmatpush1.msra.mxu0 0.0
        %1707 = vmatprep.subr.mxu0 0.0
        %1708 = vmatpush1.msra.mxu0 0.0
        %1709 = vmatprep.subr.mxu0 0.0
        %1710 = vmatpush1.msra.mxu0 0.0
        %v1711 = vand.u32 %v740, 4294901760
        %1712 = vmatprep.mubr.f32.mxu0 %v1711
        %v1713 = vand.u32 %v341, 4294901760
        %1714 = vmatmul.mubr.f32.gmra.mrb[0].mxu0 %v1713
        %v1715 = vpop.f32.mrb[0].mxu0
        %v1716 = vadd.f32 %v1495, %v1715
        %v1717 = vpop.f32.mrb[0].mxu0
        %v1718 = vand.u32 %v743, 4294901760
        %1719 = vmatprep.mubr.f32.mxu0 %v1718
        %v1720 = vand.u32 %v343, 4294901760
        %1721 = vmatmul.mubr.f32.gmra.mrb[0].mxu0 %v1720
        %v1722 = vpop.f32.mrb[0].mxu0
        %v1723 = vadd.f32 %v1506, %v1722
        %v1724 = vpop.f32.mrb[0].mxu0
        %v1725 = vand.u32 %v746, 4294901760
        %1726 = vmatprep.mubr.f32.mxu0 %v1725
        %v1727 = vand.u32 %v345, 4294901760
        %1728 = vmatmul.mubr.f32.gmra.mrb[0].mxu0 %v1727
        %v1729 = vpop.f32.mrb[0].mxu0
        %v1730 = vadd.f32 %v1517, %v1729
        %v1731 = vpop.f32.mrb[0].mxu0
        %v1732 = vand.u32 %v749, 4294901760
        %1733 = vmatprep.mubr.f32.mxu0 %v1732
        %v1734 = vand.u32 %v347, 4294901760
        %1735 = vmatmul.mubr.f32.gmra.mrb[0].mxu0 %v1734
        %v1736 = vpop.f32.mrb[0].mxu0
        %v1737 = vadd.f32 %v1528, %v1736
        %v1738 = vpop.f32.mrb[0].mxu0
        %v1739 = vand.u32 %v752, 4294901760
        %1740 = vmatprep.mubr.f32.mxu0 %v1739
        %v1741 = vand.u32 %v349, 4294901760
        %1742 = vmatmul.mubr.f32.gmra.mrb[0].mxu0 %v1741
        %v1743 = vpop.f32.mrb[0].mxu0
        %v1744 = vadd.f32 %v1539, %v1743
        %v1745 = vpop.f32.mrb[0].mxu0
        %v1746 = vand.u32 %v755, 4294901760
        %1747 = vmatprep.mubr.f32.mxu0 %v1746
        %v1748 = vand.u32 %v351, 4294901760
        %1749 = vmatmul.mubr.f32.gmra.mrb[0].mxu0 %v1748
        %v1750 = vpop.f32.mrb[0].mxu0
        %v1751 = vadd.f32 %v1550, %v1750
        %v1752 = vpop.f32.mrb[0].mxu0
        %v1753 = vand.u32 %v758, 4294901760
        %1754 = vmatprep.mubr.f32.mxu0 %v1753
        %v1755 = vand.u32 %v353, 4294901760
        %1756 = vmatmul.mubr.f32.gmra.mrb[0].mxu0 %v1755
        %v1757 = vpop.f32.mrb[0].mxu0
        %v1758 = vadd.f32 %v1561, %v1757
        %v1759 = vpop.f32.mrb[0].mxu0
        %v1760 = vand.u32 %v761, 4294901760
        %1761 = vmatprep.mubr.f32.mxu0 %v1760
        %v1762 = vand.u32 %v355, 4294901760
        %1763 = vmatmul.mubr.f32.gmra.mrb[0].mxu0 %v1762
        %v1764 = vpop.f32.mrb[0].mxu0
        %v1765 = vadd.f32 %v1572, %v1764
        %v1766 = vpop.f32.mrb[0].mxu0
        %1767 = vdwg.mxu0
        %1768 = vmatprep.subr.mxu0 0.0
        %v1769 = vand.u32 %v674, 4294901760
        %1770 = vmatpush1.msra.mxu0 %v1769
        %1771 = vmatprep.subr.mxu0 0.0
        %v1772 = vand.u32 %v675, 4294901760
        %1773 = vmatpush1.msra.mxu0 %v1772
        %1774 = vmatprep.subr.mxu0 0.0
        %v1775 = vand.u32 %v676, 4294901760
        %1776 = vmatpush1.msra.mxu0 %v1775
        %1777 = vmatprep.subr.mxu0 0.0
        %v1778 = vand.u32 %v677, 4294901760
        %1779 = vmatpush1.msra.mxu0 %v1778
        %1780 = vmatprep.subr.mxu0 0.0
        %v1781 = vand.u32 %v678, 4294901760
        %1782 = vmatpush1.msra.mxu0 %v1781
        %1783 = vmatprep.subr.mxu0 0.0
        %v1784 = vand.u32 %v679, 4294901760
        %1785 = vmatpush1.msra.mxu0 %v1784
        %1786 = vmatprep.subr.mxu0 0.0
        %v1787 = vand.u32 %v680, 4294901760
        %1788 = vmatpush1.msra.mxu0 %v1787
        %1789 = vmatprep.subr.mxu0 0.0
        %v1790 = vand.u32 %v681, 4294901760
        %1791 = vmatpush1.msra.mxu0 %v1790
        %1792 = vmatprep.subr.mxu0 0.0
        %v1793 = vand.u32 %v682, 4294901760
        %1794 = vmatpush1.msra.mxu0 %v1793
        %1795 = vmatprep.subr.mxu0 0.0
        %v1796 = vand.u32 %v683, 4294901760
        %1797 = vmatpush1.msra.mxu0 %v1796
        %1798 = vmatprep.subr.mxu0 0.0
        %v1799 = vand.u32 %v684, 4294901760
        %1800 = vmatpush1.msra.mxu0 %v1799
        %1801 = vmatprep.subr.mxu0 0.0
        %v1802 = vand.u32 %v685, 4294901760
        %1803 = vmatpush1.msra.mxu0 %v1802
        %1804 = vmatprep.subr.mxu0 0.0
        %v1805 = vand.u32 %v686, 4294901760
        %1806 = vmatpush1.msra.mxu0 %v1805
        %1807 = vmatprep.subr.mxu0 0.0
        %v1808 = vand.u32 %v687, 4294901760
        %1809 = vmatpush1.msra.mxu0 %v1808
        %1810 = vmatprep.subr.mxu0 0.0
        %v1811 = vand.u32 %v688, 4294901760
        %1812 = vmatpush1.msra.mxu0 %v1811
        %1813 = vmatprep.subr.mxu0 0.0
        %v1814 = vand.u32 %v689, 4294901760
        %1815 = vmatpush1.msra.mxu0 %v1814
        %1816 = vmatprep.subr.mxu0 0.0
        %v1817 = vand.u32 %v690, 4294901760
        %1818 = vmatpush1.msra.mxu0 %v1817
        %1819 = vmatprep.subr.mxu0 0.0
        %v1820 = vand.u32 %v691, 4294901760
        %1821 = vmatpush1.msra.mxu0 %v1820
        %1822 = vmatprep.subr.mxu0 0.0
        %v1823 = vand.u32 %v692, 4294901760
        %1824 = vmatpush1.msra.mxu0 %v1823
        %1825 = vmatprep.subr.mxu0 0.0
        %v1826 = vand.u32 %v693, 4294901760
        %1827 = vmatpush1.msra.mxu0 %v1826
        %1828 = vmatprep.subr.mxu0 0.0
        %v1829 = vand.u32 %v694, 4294901760
        %1830 = vmatpush1.msra.mxu0 %v1829
        %1831 = vmatprep.subr.mxu0 0.0
        %v1832 = vand.u32 %v695, 4294901760
        %1833 = vmatpush1.msra.mxu0 %v1832
        %1834 = vmatprep.subr.mxu0 0.0
        %v1835 = vand.u32 %v696, 4294901760
        %1836 = vmatpush1.msra.mxu0 %v1835
        %1837 = vmatprep.subr.mxu0 0.0
        %v1838 = vand.u32 %v697, 4294901760
        %1839 = vmatpush1.msra.mxu0 %v1838
        %1840 = vmatprep.subr.mxu0 0.0
        %1841 = vmatpush1.msra.mxu0 0.0
        %1842 = vmatprep.subr.mxu0 0.0
        %1843 = vmatpush1.msra.mxu0 0.0
        %1844 = vmatprep.subr.mxu0 0.0
        %1845 = vmatpush1.msra.mxu0 0.0
        %1846 = vmatprep.subr.mxu0 0.0
        %1847 = vmatpush1.msra.mxu0 0.0
        %1848 = vmatprep.subr.mxu0 0.0
        %1849 = vmatpush1.msra.mxu0 0.0
        %1850 = vmatprep.subr.mxu0 0.0
        %1851 = vmatpush1.msra.mxu0 0.0
        %1852 = vmatprep.subr.mxu0 0.0
        %1853 = vmatpush1.msra.mxu0 0.0
        %1854 = vmatprep.subr.mxu0 0.0
        %1855 = vmatpush1.msra.mxu0 0.0
        %v1856 = vand.u32 %v740, 4294901760
        %1857 = vmatprep.mubr.f32.mxu0 %v1856
        %v1858 = vand.u32 %v341, 4294901760
        %1859 = vmatmul.mubr.f32.gmra.mrb[0].mxu0 %v1858
        %v1860 = vpop.f32.mrb[0].mxu0
        %v1861 = vadd.f32 %v1716, %v1860
        %v1862 = vpop.f32.mrb[0].mxu0
        %v1863 = vand.u32 %v743, 4294901760
        %1864 = vmatprep.mubr.f32.mxu0 %v1863
        %v1865 = vand.u32 %v343, 4294901760
        %1866 = vmatmul.mubr.f32.gmra.mrb[0].mxu0 %v1865
        %v1867 = vpop.f32.mrb[0].mxu0
        %v1868 = vadd.f32 %v1723, %v1867
        %v1869 = vpop.f32.mrb[0].mxu0
        %v1870 = vand.u32 %v746, 4294901760
        %1871 = vmatprep.mubr.f32.mxu0 %v1870
        %v1872 = vand.u32 %v345, 4294901760
        %1873 = vmatmul.mubr.f32.gmra.mrb[0].mxu0 %v1872
        %v1874 = vpop.f32.mrb[0].mxu0
        %v1875 = vadd.f32 %v1730, %v1874
        %v1876 = vpop.f32.mrb[0].mxu0
        %v1877 = vand.u32 %v749, 4294901760
        %1878 = vmatprep.mubr.f32.mxu0 %v1877
        %v1879 = vand.u32 %v347, 4294901760
        %1880 = vmatmul.mubr.f32.gmra.mrb[0].mxu0 %v1879
        %v1881 = vpop.f32.mrb[0].mxu0
        %v1882 = vadd.f32 %v1737, %v1881
        %v1883 = vpop.f32.mrb[0].mxu0
        %v1884 = vand.u32 %v752, 4294901760
        %1885 = vmatprep.mubr.f32.mxu0 %v1884
        %v1886 = vand.u32 %v349, 4294901760
        %1887 = vmatmul.mubr.f32.gmra.mrb[0].mxu0 %v1886
        %v1888 = vpop.f32.mrb[0].mxu0
        %v1889 = vadd.f32 %v1744, %v1888
        %v1890 = vpop.f32.mrb[0].mxu0
        %v1891 = vand.u32 %v755, 4294901760
        %1892 = vmatprep.mubr.f32.mxu0 %v1891
        %v1893 = vand.u32 %v351, 4294901760
        %1894 = vmatmul.mubr.f32.gmra.mrb[0].mxu0 %v1893
        %v1895 = vpop.f32.mrb[0].mxu0
        %v1896 = vadd.f32 %v1751, %v1895
        %v1897 = vpop.f32.mrb[0].mxu0
        %v1898 = vand.u32 %v758, 4294901760
        %1899 = vmatprep.mubr.f32.mxu0 %v1898
        %v1900 = vand.u32 %v353, 4294901760
        %1901 = vmatmul.mubr.f32.gmra.mrb[0].mxu0 %v1900
        %v1902 = vpop.f32.mrb[0].mxu0
        %v1903 = vadd.f32 %v1758, %v1902
        %v1904 = vpop.f32.mrb[0].mxu0
        %v1905 = vand.u32 %v761, 4294901760
        %1906 = vmatprep.mubr.f32.mxu0 %v1905
        %v1907 = vand.u32 %v355, 4294901760
        %1908 = vmatmul.mubr.f32.gmra.mrb[0].mxu0 %v1907
        %v1909 = vpop.f32.mrb[0].mxu0
        %v1910 = vadd.f32 %v1765, %v1909
        %v1911 = vpop.f32.mrb[0].mxu0
        %1912 = vdwg.mxu0
        %v1913 = vmax.f32 %v1861, 0.0
        %v1914 = vmax.f32 %v1868, 0.0
        %v1915 = vmax.f32 %v1875, 0.0
        %v1916 = vmax.f32 %v1882, 0.0
        %v1917 = vmax.f32 %v1889, 0.0
        %v1918 = vmax.f32 %v1896, 0.0
        %v1919 = vmax.f32 %v1903, 0.0
        %v1920 = vmax.f32 %v1910, 0.0
        %v1922 = vsel %vm738, %v365, 0
        %1924 = vmatprep.subr.mxu0 0.0
        %v1925 = vand.u32 %v1913, 4294901760
        %1926 = vmatpush1.msra.mxu0 %v1925
        %1927 = vmatprep.subr.mxu0 0.0
        %v1928 = vand.u32 %v1914, 4294901760
        %1929 = vmatpush1.msra.mxu0 %v1928
        %1930 = vmatprep.subr.mxu0 0.0
        %v1931 = vand.u32 %v1915, 4294901760
        %1932 = vmatpush1.msra.mxu0 %v1931
        %1933 = vmatprep.subr.mxu0 0.0
        %v1934 = vand.u32 %v1916, 4294901760
        %1935 = vmatpush1.msra.mxu0 %v1934
        %1936 = vmatprep.subr.mxu0 0.0
        %v1937 = vand.u32 %v1917, 4294901760
        %1938 = vmatpush1.msra.mxu0 %v1937
        %1939 = vmatprep.subr.mxu0 0.0
        %v1940 = vand.u32 %v1918, 4294901760
        %1941 = vmatpush1.msra.mxu0 %v1940
        %1942 = vmatprep.subr.mxu0 0.0
        %v1943 = vand.u32 %v1919, 4294901760
        %1944 = vmatpush1.msra.mxu0 %v1943
        %1945 = vmatprep.subr.mxu0 0.0
        %v1946 = vand.u32 %v1920, 4294901760
        %1947 = vmatpush1.msra.mxu0 %v1946
        %1948 = vmatprep.subr.mxu0 0.0
        %1949 = vmatpush1.msra.mxu0 0.0
        %1950 = vmatprep.subr.mxu0 0.0
        %1951 = vmatpush1.msra.mxu0 0.0
        %1952 = vmatprep.subr.mxu0 0.0
        %1953 = vmatpush1.msra.mxu0 0.0
        %1954 = vmatprep.subr.mxu0 0.0
        %1955 = vmatpush1.msra.mxu0 0.0
        %1956 = vmatprep.subr.mxu0 0.0
        %1957 = vmatpush1.msra.mxu0 0.0
        %1958 = vmatprep.subr.mxu0 0.0
        %1959 = vmatpush1.msra.mxu0 0.0
        %1960 = vmatprep.subr.mxu0 0.0
        %1961 = vmatpush1.msra.mxu0 0.0
        %1962 = vmatprep.subr.mxu0 0.0
        %1963 = vmatpush1.msra.mxu0 0.0
        %1964 = vmatprep.subr.mxu0 0.0
        %1965 = vmatpush1.msra.mxu0 0.0
        %1966 = vmatprep.subr.mxu0 0.0
        %1967 = vmatpush1.msra.mxu0 0.0
        %1968 = vmatprep.subr.mxu0 0.0
        %1969 = vmatpush1.msra.mxu0 0.0
        %1970 = vmatprep.subr.mxu0 0.0
        %1971 = vmatpush1.msra.mxu0 0.0
        %1972 = vmatprep.subr.mxu0 0.0
        %1973 = vmatpush1.msra.mxu0 0.0
        %1974 = vmatprep.subr.mxu0 0.0
        %1975 = vmatpush1.msra.mxu0 0.0
        %1976 = vmatprep.subr.mxu0 0.0
        %1977 = vmatpush1.msra.mxu0 0.0
        %1978 = vmatprep.subr.mxu0 0.0
        %1979 = vmatpush1.msra.mxu0 0.0
        %1980 = vmatprep.subr.mxu0 0.0
        %1981 = vmatpush1.msra.mxu0 0.0
        %1982 = vmatprep.subr.mxu0 0.0
        %1983 = vmatpush1.msra.mxu0 0.0
        %1984 = vmatprep.subr.mxu0 0.0
        %1985 = vmatpush1.msra.mxu0 0.0
        %1986 = vmatprep.subr.mxu0 0.0
        %1987 = vmatpush1.msra.mxu0 0.0
        %1988 = vmatprep.subr.mxu0 0.0
        %1989 = vmatpush1.msra.mxu0 0.0
        %1990 = vmatprep.subr.mxu0 0.0
        %1991 = vmatpush1.msra.mxu0 0.0
        %1992 = vmatprep.subr.mxu0 0.0
        %1993 = vmatpush1.msra.mxu0 0.0
        %1994 = vmatprep.subr.mxu0 0.0
        %1995 = vmatpush1.msra.mxu0 0.0
        %1996 = vmatprep.mubr.f32.mxu0 0.0
        %v1997 = vand.u32 %v1922, 4294901760
        %v1998 = vsub.f32 %v1922, %v1997
        %v1999 = vand.u32 %v1998, 4294901760
        %v2000 = vsub.f32 %v1998, %v1999
        %v2001 = vand.u32 %v2000, 4294901760
        %2002 = vmatmul.mubr.f32.gmra.mrb[0].mxu0 %v2001
        %v2003 = vpop.f32.mrb[0].mxu0
        %v2004 = vadd.f32 0.0, %v2003
        %v2005 = vpop.f32.mrb[0].mxu0
        %2006 = vdwg.mxu0
        %2007 = vmatprep.subr.mxu0 0.0
        %v2008 = vand.u32 %v1913, 4294901760
        %v2009 = vsub.f32 %v1913, %v2008
        %v2010 = vand.u32 %v2009, 4294901760
        %v2011 = vsub.f32 %v2009, %v2010
        %v2012 = vand.u32 %v2011, 4294901760
        %2013 = vmatpush1.msra.mxu0 %v2012
        %2014 = vmatprep.subr.mxu0 0.0
        %v2015 = vand.u32 %v1914, 4294901760
        %v2016 = vsub.f32 %v1914, %v2015
        %v2017 = vand.u32 %v2016, 4294901760
        %v2018 = vsub.f32 %v2016, %v2017
        %v2019 = vand.u32 %v2018, 4294901760
        %2020 = vmatpush1.msra.mxu0 %v2019
        %2021 = vmatprep.subr.mxu0 0.0
        %v2022 = vand.u32 %v1915, 4294901760
        %v2023 = vsub.f32 %v1915, %v2022
        %v2024 = vand.u32 %v2023, 4294901760
        %v2025 = vsub.f32 %v2023, %v2024
        %v2026 = vand.u32 %v2025, 4294901760
        %2027 = vmatpush1.msra.mxu0 %v2026
        %2028 = vmatprep.subr.mxu0 0.0
        %v2029 = vand.u32 %v1916, 4294901760
        %v2030 = vsub.f32 %v1916, %v2029
        %v2031 = vand.u32 %v2030, 4294901760
        %v2032 = vsub.f32 %v2030, %v2031
        %v2033 = vand.u32 %v2032, 4294901760
        %2034 = vmatpush1.msra.mxu0 %v2033
        %2035 = vmatprep.subr.mxu0 0.0
        %v2036 = vand.u32 %v1917, 4294901760
        %v2037 = vsub.f32 %v1917, %v2036
        %v2038 = vand.u32 %v2037, 4294901760
        %v2039 = vsub.f32 %v2037, %v2038
        %v2040 = vand.u32 %v2039, 4294901760
        %2041 = vmatpush1.msra.mxu0 %v2040
        %2042 = vmatprep.subr.mxu0 0.0
        %v2043 = vand.u32 %v1918, 4294901760
        %v2044 = vsub.f32 %v1918, %v2043
        %v2045 = vand.u32 %v2044, 4294901760
        %v2046 = vsub.f32 %v2044, %v2045
        %v2047 = vand.u32 %v2046, 4294901760
        %2048 = vmatpush1.msra.mxu0 %v2047
        %2049 = vmatprep.subr.mxu0 0.0
        %v2050 = vand.u32 %v1919, 4294901760
        %v2051 = vsub.f32 %v1919, %v2050
        %v2052 = vand.u32 %v2051, 4294901760
        %v2053 = vsub.f32 %v2051, %v2052
        %v2054 = vand.u32 %v2053, 4294901760
        %2055 = vmatpush1.msra.mxu0 %v2054
        %2056 = vmatprep.subr.mxu0 0.0
        %v2057 = vand.u32 %v1920, 4294901760
        %v2058 = vsub.f32 %v1920, %v2057
        %v2059 = vand.u32 %v2058, 4294901760
        %v2060 = vsub.f32 %v2058, %v2059
        %v2061 = vand.u32 %v2060, 4294901760
        %2062 = vmatpush1.msra.mxu0 %v2061
        %2063 = vmatprep.subr.mxu0 0.0
        %2064 = vmatpush1.msra.mxu0 0.0
        %2065 = vmatprep.subr.mxu0 0.0
        %2066 = vmatpush1.msra.mxu0 0.0
        %2067 = vmatprep.subr.mxu0 0.0
        %2068 = vmatpush1.msra.mxu0 0.0
        %2069 = vmatprep.subr.mxu0 0.0
        %2070 = vmatpush1.msra.mxu0 0.0
        %2071 = vmatprep.subr.mxu0 0.0
        %2072 = vmatpush1.msra.mxu0 0.0
        %2073 = vmatprep.subr.mxu0 0.0
        %2074 = vmatpush1.msra.mxu0 0.0
        %2075 = vmatprep.subr.mxu0 0.0
        %2076 = vmatpush1.msra.mxu0 0.0
        %2077 = vmatprep.subr.mxu0 0.0
        %2078 = vmatpush1.msra.mxu0 0.0
        %2079 = vmatprep.subr.mxu0 0.0
        %2080 = vmatpush1.msra.mxu0 0.0
        %2081 = vmatprep.subr.mxu0 0.0
        %2082 = vmatpush1.msra.mxu0 0.0
        %2083 = vmatprep.subr.mxu0 0.0
        %2084 = vmatpush1.msra.mxu0 0.0
        %2085 = vmatprep.subr.mxu0 0.0
        %2086 = vmatpush1.msra.mxu0 0.0
        %2087 = vmatprep.subr.mxu0 0.0
        %2088 = vmatpush1.msra.mxu0 0.0
        %2089 = vmatprep.subr.mxu0 0.0
        %2090 = vmatpush1.msra.mxu0 0.0
        %2091 = vmatprep.subr.mxu0 0.0
        %2092 = vmatpush1.msra.mxu0 0.0
        %2093 = vmatprep.subr.mxu0 0.0
        %2094 = vmatpush1.msra.mxu0 0.0
        %2095 = vmatprep.subr.mxu0 0.0
        %2096 = vmatpush1.msra.mxu0 0.0
        %2097 = vmatprep.subr.mxu0 0.0
        %2098 = vmatpush1.msra.mxu0 0.0
        %2099 = vmatprep.subr.mxu0 0.0
        %2100 = vmatpush1.msra.mxu0 0.0
        %2101 = vmatprep.subr.mxu0 0.0
        %2102 = vmatpush1.msra.mxu0 0.0
        %2103 = vmatprep.subr.mxu0 0.0
        %2104 = vmatpush1.msra.mxu0 0.0
        %2105 = vmatprep.subr.mxu0 0.0
        %2106 = vmatpush1.msra.mxu0 0.0
        %2107 = vmatprep.subr.mxu0 0.0
        %2108 = vmatpush1.msra.mxu0 0.0
        %2109 = vmatprep.subr.mxu0 0.0
        %2110 = vmatpush1.msra.mxu0 0.0
        %2111 = vmatprep.mubr.f32.mxu0 0.0
        %v2112 = vand.u32 %v1922, 4294901760
        %2113 = vmatmul.mubr.f32.gmra.mrb[0].mxu0 %v2112
        %v2114 = vpop.f32.mrb[0].mxu0
        %v2115 = vadd.f32 %v2004, %v2114
        %v2116 = vpop.f32.mrb[0].mxu0
        %2117 = vdwg.mxu0
        %2118 = vmatprep.subr.mxu0 0.0
        %v2119 = vand.u32 %v1913, 4294901760
        %v2120 = vsub.f32 %v1913, %v2119
        %2121 = vmatpush1.msra.mxu0 %v2120
        %2122 = vmatprep.subr.mxu0 0.0
        %v2123 = vand.u32 %v1914, 4294901760
        %v2124 = vsub.f32 %v1914, %v2123
        %2125 = vmatpush1.msra.mxu0 %v2124
        %2126 = vmatprep.subr.mxu0 0.0
        %v2127 = vand.u32 %v1915, 4294901760
        %v2128 = vsub.f32 %v1915, %v2127
        %2129 = vmatpush1.msra.mxu0 %v2128
        %2130 = vmatprep.subr.mxu0 0.0
        %v2131 = vand.u32 %v1916, 4294901760
        %v2132 = vsub.f32 %v1916, %v2131
        %2133 = vmatpush1.msra.mxu0 %v2132
        %2134 = vmatprep.subr.mxu0 0.0
        %v2135 = vand.u32 %v1917, 4294901760
        %v2136 = vsub.f32 %v1917, %v2135
        %2137 = vmatpush1.msra.mxu0 %v2136
        %2138 = vmatprep.subr.mxu0 0.0
        %v2139 = vand.u32 %v1918, 4294901760
        %v2140 = vsub.f32 %v1918, %v2139
        %2141 = vmatpush1.msra.mxu0 %v2140
        %2142 = vmatprep.subr.mxu0 0.0
        %v2143 = vand.u32 %v1919, 4294901760
        %v2144 = vsub.f32 %v1919, %v2143
        %2145 = vmatpush1.msra.mxu0 %v2144
        %2146 = vmatprep.subr.mxu0 0.0
        %v2147 = vand.u32 %v1920, 4294901760
        %v2148 = vsub.f32 %v1920, %v2147
        %2149 = vmatpush1.msra.mxu0 %v2148
        %2150 = vmatprep.subr.mxu0 0.0
        %2151 = vmatpush1.msra.mxu0 0.0
        %2152 = vmatprep.subr.mxu0 0.0
        %2153 = vmatpush1.msra.mxu0 0.0
        %2154 = vmatprep.subr.mxu0 0.0
        %2155 = vmatpush1.msra.mxu0 0.0
        %2156 = vmatprep.subr.mxu0 0.0
        %2157 = vmatpush1.msra.mxu0 0.0
        %2158 = vmatprep.subr.mxu0 0.0
        %2159 = vmatpush1.msra.mxu0 0.0
        %2160 = vmatprep.subr.mxu0 0.0
        %2161 = vmatpush1.msra.mxu0 0.0
        %2162 = vmatprep.subr.mxu0 0.0
        %2163 = vmatpush1.msra.mxu0 0.0
        %2164 = vmatprep.subr.mxu0 0.0
        %2165 = vmatpush1.msra.mxu0 0.0
        %2166 = vmatprep.subr.mxu0 0.0
        %2167 = vmatpush1.msra.mxu0 0.0
        %2168 = vmatprep.subr.mxu0 0.0
        %2169 = vmatpush1.msra.mxu0 0.0
        %2170 = vmatprep.subr.mxu0 0.0
        %2171 = vmatpush1.msra.mxu0 0.0
        %2172 = vmatprep.subr.mxu0 0.0
        %2173 = vmatpush1.msra.mxu0 0.0
        %2174 = vmatprep.subr.mxu0 0.0
        %2175 = vmatpush1.msra.mxu0 0.0
        %2176 = vmatprep.subr.mxu0 0.0
        %2177 = vmatpush1.msra.mxu0 0.0
        %2178 = vmatprep.subr.mxu0 0.0
        %2179 = vmatpush1.msra.mxu0 0.0
        %2180 = vmatprep.subr.mxu0 0.0
        %2181 = vmatpush1.msra.mxu0 0.0
        %2182 = vmatprep.subr.mxu0 0.0
        %2183 = vmatpush1.msra.mxu0 0.0
        %2184 = vmatprep.subr.mxu0 0.0
        %2185 = vmatpush1.msra.mxu0 0.0
        %2186 = vmatprep.subr.mxu0 0.0
        %2187 = vmatpush1.msra.mxu0 0.0
        %2188 = vmatprep.subr.mxu0 0.0
        %2189 = vmatpush1.msra.mxu0 0.0
        %2190 = vmatprep.subr.mxu0 0.0
        %2191 = vmatpush1.msra.mxu0 0.0
        %2192 = vmatprep.subr.mxu0 0.0
        %2193 = vmatpush1.msra.mxu0 0.0
        %2194 = vmatprep.subr.mxu0 0.0
        %2195 = vmatpush1.msra.mxu0 0.0
        %2196 = vmatprep.subr.mxu0 0.0
        %2197 = vmatpush1.msra.mxu0 0.0
        %2198 = vmatprep.mubr.f32.mxu0 0.0
        %v2199 = vand.u32 %v1922, 4294901760
        %v2200 = vsub.f32 %v1922, %v2199
        %2201 = vmatmul.mubr.f32.gmra.mrb[0].mxu0 %v2200
        %v2202 = vpop.f32.mrb[0].mxu0
        %v2203 = vadd.f32 %v2115, %v2202
        %v2204 = vpop.f32.mrb[0].mxu0
        %2205 = vdwg.mxu0
        %2206 = vmatprep.subr.mxu0 0.0
        %v2207 = vand.u32 %v1913, 4294901760
        %2208 = vmatpush1.msra.mxu0 %v2207
        %2209 = vmatprep.subr.mxu0 0.0
        %v2210 = vand.u32 %v1914, 4294901760
        %2211 = vmatpush1.msra.mxu0 %v2210
        %2212 = vmatprep.subr.mxu0 0.0
        %v2213 = vand.u32 %v1915, 4294901760
        %2214 = vmatpush1.msra.mxu0 %v2213
        %2215 = vmatprep.subr.mxu0 0.0
        %v2216 = vand.u32 %v1916, 4294901760
        %2217 = vmatpush1.msra.mxu0 %v2216
        %2218 = vmatprep.subr.mxu0 0.0
        %v2219 = vand.u32 %v1917, 4294901760
        %2220 = vmatpush1.msra.mxu0 %v2219
        %2221 = vmatprep.subr.mxu0 0.0
        %v2222 = vand.u32 %v1918, 4294901760
        %2223 = vmatpush1.msra.mxu0 %v2222
        %2224 = vmatprep.subr.mxu0 0.0
        %v2225 = vand.u32 %v1919, 4294901760
        %2226 = vmatpush1.msra.mxu0 %v2225
        %2227 = vmatprep.subr.mxu0 0.0
        %v2228 = vand.u32 %v1920, 4294901760
        %2229 = vmatpush1.msra.mxu0 %v2228
        %2230 = vmatprep.subr.mxu0 0.0
        %2231 = vmatpush1.msra.mxu0 0.0
        %2232 = vmatprep.subr.mxu0 0.0
        %2233 = vmatpush1.msra.mxu0 0.0
        %2234 = vmatprep.subr.mxu0 0.0
        %2235 = vmatpush1.msra.mxu0 0.0
        %2236 = vmatprep.subr.mxu0 0.0
        %2237 = vmatpush1.msra.mxu0 0.0
        %2238 = vmatprep.subr.mxu0 0.0
        %2239 = vmatpush1.msra.mxu0 0.0
        %2240 = vmatprep.subr.mxu0 0.0
        %2241 = vmatpush1.msra.mxu0 0.0
        %2242 = vmatprep.subr.mxu0 0.0
        %2243 = vmatpush1.msra.mxu0 0.0
        %2244 = vmatprep.subr.mxu0 0.0
        %2245 = vmatpush1.msra.mxu0 0.0
        %2246 = vmatprep.subr.mxu0 0.0
        %2247 = vmatpush1.msra.mxu0 0.0
        %2248 = vmatprep.subr.mxu0 0.0
        %2249 = vmatpush1.msra.mxu0 0.0
        %2250 = vmatprep.subr.mxu0 0.0
        %2251 = vmatpush1.msra.mxu0 0.0
        %2252 = vmatprep.subr.mxu0 0.0
        %2253 = vmatpush1.msra.mxu0 0.0
        %2254 = vmatprep.subr.mxu0 0.0
        %2255 = vmatpush1.msra.mxu0 0.0
        %2256 = vmatprep.subr.mxu0 0.0
        %2257 = vmatpush1.msra.mxu0 0.0
        %2258 = vmatprep.subr.mxu0 0.0
        %2259 = vmatpush1.msra.mxu0 0.0
        %2260 = vmatprep.subr.mxu0 0.0
        %2261 = vmatpush1.msra.mxu0 0.0
        %2262 = vmatprep.subr.mxu0 0.0
        %2263 = vmatpush1.msra.mxu0 0.0
        %2264 = vmatprep.subr.mxu0 0.0
        %2265 = vmatpush1.msra.mxu0 0.0
        %2266 = vmatprep.subr.mxu0 0.0
        %2267 = vmatpush1.msra.mxu0 0.0
        %2268 = vmatprep.subr.mxu0 0.0
        %2269 = vmatpush1.msra.mxu0 0.0
        %2270 = vmatprep.subr.mxu0 0.0
        %2271 = vmatpush1.msra.mxu0 0.0
        %2272 = vmatprep.subr.mxu0 0.0
        %2273 = vmatpush1.msra.mxu0 0.0
        %2274 = vmatprep.subr.mxu0 0.0
        %2275 = vmatpush1.msra.mxu0 0.0
        %2276 = vmatprep.subr.mxu0 0.0
        %2277 = vmatpush1.msra.mxu0 0.0
        %2278 = vmatprep.mubr.f32.mxu0 0.0
        %v2279 = vand.u32 %v1922, 4294901760
        %v2280 = vsub.f32 %v1922, %v2279
        %v2281 = vand.u32 %v2280, 4294901760
        %2282 = vmatmul.mubr.f32.gmra.mrb[0].mxu0 %v2281
        %v2283 = vpop.f32.mrb[0].mxu0
        %v2284 = vadd.f32 %v2203, %v2283
        %v2285 = vpop.f32.mrb[0].mxu0
        %2286 = vdwg.mxu0
        %2287 = vmatprep.subr.mxu0 0.0
        %v2288 = vand.u32 %v1913, 4294901760
        %v2289 = vsub.f32 %v1913, %v2288
        %v2290 = vand.u32 %v2289, 4294901760
        %2291 = vmatpush1.msra.mxu0 %v2290
        %2292 = vmatprep.subr.mxu0 0.0
        %v2293 = vand.u32 %v1914, 4294901760
        %v2294 = vsub.f32 %v1914, %v2293
        %v2295 = vand.u32 %v2294, 4294901760
        %2296 = vmatpush1.msra.mxu0 %v2295
        %2297 = vmatprep.subr.mxu0 0.0
        %v2298 = vand.u32 %v1915, 4294901760
        %v2299 = vsub.f32 %v1915, %v2298
        %v2300 = vand.u32 %v2299, 4294901760
        %2301 = vmatpush1.msra.mxu0 %v2300
        %2302 = vmatprep.subr.mxu0 0.0
        %v2303 = vand.u32 %v1916, 4294901760
        %v2304 = vsub.f32 %v1916, %v2303
        %v2305 = vand.u32 %v2304, 4294901760
        %2306 = vmatpush1.msra.mxu0 %v2305
        %2307 = vmatprep.subr.mxu0 0.0
        %v2308 = vand.u32 %v1917, 4294901760
        %v2309 = vsub.f32 %v1917, %v2308
        %v2310 = vand.u32 %v2309, 4294901760
        %2311 = vmatpush1.msra.mxu0 %v2310
        %2312 = vmatprep.subr.mxu0 0.0
        %v2313 = vand.u32 %v1918, 4294901760
        %v2314 = vsub.f32 %v1918, %v2313
        %v2315 = vand.u32 %v2314, 4294901760
        %2316 = vmatpush1.msra.mxu0 %v2315
        %2317 = vmatprep.subr.mxu0 0.0
        %v2318 = vand.u32 %v1919, 4294901760
        %v2319 = vsub.f32 %v1919, %v2318
        %v2320 = vand.u32 %v2319, 4294901760
        %2321 = vmatpush1.msra.mxu0 %v2320
        %2322 = vmatprep.subr.mxu0 0.0
        %v2323 = vand.u32 %v1920, 4294901760
        %v2324 = vsub.f32 %v1920, %v2323
        %v2325 = vand.u32 %v2324, 4294901760
        %2326 = vmatpush1.msra.mxu0 %v2325
        %2327 = vmatprep.subr.mxu0 0.0
        %2328 = vmatpush1.msra.mxu0 0.0
        %2329 = vmatprep.subr.mxu0 0.0
        %2330 = vmatpush1.msra.mxu0 0.0
        %2331 = vmatprep.subr.mxu0 0.0
        %2332 = vmatpush1.msra.mxu0 0.0
        %2333 = vmatprep.subr.mxu0 0.0
        %2334 = vmatpush1.msra.mxu0 0.0
        %2335 = vmatprep.subr.mxu0 0.0
        %2336 = vmatpush1.msra.mxu0 0.0
        %2337 = vmatprep.subr.mxu0 0.0
        %2338 = vmatpush1.msra.mxu0 0.0
        %2339 = vmatprep.subr.mxu0 0.0
        %2340 = vmatpush1.msra.mxu0 0.0
        %2341 = vmatprep.subr.mxu0 0.0
        %2342 = vmatpush1.msra.mxu0 0.0
        %2343 = vmatprep.subr.mxu0 0.0
        %2344 = vmatpush1.msra.mxu0 0.0
        %2345 = vmatprep.subr.mxu0 0.0
        %2346 = vmatpush1.msra.mxu0 0.0
        %2347 = vmatprep.subr.mxu0 0.0
        %2348 = vmatpush1.msra.mxu0 0.0
        %2349 = vmatprep.subr.mxu0 0.0
        %2350 = vmatpush1.msra.mxu0 0.0
        %2351 = vmatprep.subr.mxu0 0.0
        %2352 = vmatpush1.msra.mxu0 0.0
        %2353 = vmatprep.subr.mxu0 0.0
        %2354 = vmatpush1.msra.mxu0 0.0
        %2355 = vmatprep.subr.mxu0 0.0
        %2356 = vmatpush1.msra.mxu0 0.0
        %2357 = vmatprep.subr.mxu0 0.0
        %2358 = vmatpush1.msra.mxu0 0.0
        %2359 = vmatprep.subr.mxu0 0.0
        %2360 = vmatpush1.msra.mxu0 0.0
        %2361 = vmatprep.subr.mxu0 0.0
        %2362 = vmatpush1.msra.mxu0 0.0
        %2363 = vmatprep.subr.mxu0 0.0
        %2364 = vmatpush1.msra.mxu0 0.0
        %2365 = vmatprep.subr.mxu0 0.0
        %2366 = vmatpush1.msra.mxu0 0.0
        %2367 = vmatprep.subr.mxu0 0.0
        %2368 = vmatpush1.msra.mxu0 0.0
        %2369 = vmatprep.subr.mxu0 0.0
        %2370 = vmatpush1.msra.mxu0 0.0
        %2371 = vmatprep.subr.mxu0 0.0
        %2372 = vmatpush1.msra.mxu0 0.0
        %2373 = vmatprep.subr.mxu0 0.0
        %2374 = vmatpush1.msra.mxu0 0.0
        %2375 = vmatprep.mubr.f32.mxu0 0.0
        %v2376 = vand.u32 %v1922, 4294901760
        %2377 = vmatmul.mubr.f32.gmra.mrb[0].mxu0 %v2376
        %v2378 = vpop.f32.mrb[0].mxu0
        %v2379 = vadd.f32 %v2284, %v2378
        %v2380 = vpop.f32.mrb[0].mxu0
        %2381 = vdwg.mxu0
        %2382 = vmatprep.subr.mxu0 0.0
        %v2383 = vand.u32 %v1913, 4294901760
        %2384 = vmatpush1.msra.mxu0 %v2383
        %2385 = vmatprep.subr.mxu0 0.0
        %v2386 = vand.u32 %v1914, 4294901760
        %2387 = vmatpush1.msra.mxu0 %v2386
        %2388 = vmatprep.subr.mxu0 0.0
        %v2389 = vand.u32 %v1915, 4294901760
        %2390 = vmatpush1.msra.mxu0 %v2389
        %2391 = vmatprep.subr.mxu0 0.0
        %v2392 = vand.u32 %v1916, 4294901760
        %2393 = vmatpush1.msra.mxu0 %v2392
        %2394 = vmatprep.subr.mxu0 0.0
        %v2395 = vand.u32 %v1917, 4294901760
        %2396 = vmatpush1.msra.mxu0 %v2395
        %2397 = vmatprep.subr.mxu0 0.0
        %v2398 = vand.u32 %v1918, 4294901760
        %2399 = vmatpush1.msra.mxu0 %v2398
        %2400 = vmatprep.subr.mxu0 0.0
        %v2401 = vand.u32 %v1919, 4294901760
        %2402 = vmatpush1.msra.mxu0 %v2401
        %2403 = vmatprep.subr.mxu0 0.0
        %v2404 = vand.u32 %v1920, 4294901760
        %2405 = vmatpush1.msra.mxu0 %v2404
        %2406 = vmatprep.subr.mxu0 0.0
        %2407 = vmatpush1.msra.mxu0 0.0
        %2408 = vmatprep.subr.mxu0 0.0
        %2409 = vmatpush1.msra.mxu0 0.0
        %2410 = vmatprep.subr.mxu0 0.0
        %2411 = vmatpush1.msra.mxu0 0.0
        %2412 = vmatprep.subr.mxu0 0.0
        %2413 = vmatpush1.msra.mxu0 0.0
        %2414 = vmatprep.subr.mxu0 0.0
        %2415 = vmatpush1.msra.mxu0 0.0
        %2416 = vmatprep.subr.mxu0 0.0
        %2417 = vmatpush1.msra.mxu0 0.0
        %2418 = vmatprep.subr.mxu0 0.0
        %2419 = vmatpush1.msra.mxu0 0.0
        %2420 = vmatprep.subr.mxu0 0.0
        %2421 = vmatpush1.msra.mxu0 0.0
        %2422 = vmatprep.subr.mxu0 0.0
        %2423 = vmatpush1.msra.mxu0 0.0
        %2424 = vmatprep.subr.mxu0 0.0
        %2425 = vmatpush1.msra.mxu0 0.0
        %2426 = vmatprep.subr.mxu0 0.0
        %2427 = vmatpush1.msra.mxu0 0.0
        %2428 = vmatprep.subr.mxu0 0.0
        %2429 = vmatpush1.msra.mxu0 0.0
        %2430 = vmatprep.subr.mxu0 0.0
        %2431 = vmatpush1.msra.mxu0 0.0
        %2432 = vmatprep.subr.mxu0 0.0
        %2433 = vmatpush1.msra.mxu0 0.0
        %2434 = vmatprep.subr.mxu0 0.0
        %2435 = vmatpush1.msra.mxu0 0.0
        %2436 = vmatprep.subr.mxu0 0.0
        %2437 = vmatpush1.msra.mxu0 0.0
        %2438 = vmatprep.subr.mxu0 0.0
        %2439 = vmatpush1.msra.mxu0 0.0
        %2440 = vmatprep.subr.mxu0 0.0
        %2441 = vmatpush1.msra.mxu0 0.0
        %2442 = vmatprep.subr.mxu0 0.0
        %2443 = vmatpush1.msra.mxu0 0.0
        %2444 = vmatprep.subr.mxu0 0.0
        %2445 = vmatpush1.msra.mxu0 0.0
        %2446 = vmatprep.subr.mxu0 0.0
        %2447 = vmatpush1.msra.mxu0 0.0
        %2448 = vmatprep.subr.mxu0 0.0
        %2449 = vmatpush1.msra.mxu0 0.0
        %2450 = vmatprep.subr.mxu0 0.0
        %2451 = vmatpush1.msra.mxu0 0.0
        %2452 = vmatprep.subr.mxu0 0.0
        %2453 = vmatpush1.msra.mxu0 0.0
        %2454 = vmatprep.mubr.f32.mxu0 0.0
        %v2455 = vand.u32 %v1922, 4294901760
        %2456 = vmatmul.mubr.f32.gmra.mrb[0].mxu0 %v2455
        %v2457 = vpop.f32.mrb[0].mxu0
        %v2458 = vadd.f32 %v2379, %v2457
        %v2459 = vpop.f32.mrb[0].mxu0
        %2460 = vdwg.mxu0
        %2461 = vrot.lane.b32.xlu0 %v2458, 1
        %v2462 = vpop.permute.xlu0 %2461
        %v2463 = vmul.f32 %v2462, %v367
        %v2465 = vrot.slane %v2458, 1
        %v2467 = vadd.f32 %v2463, %v2465
        %v2468 = vrot.slane %v2458, 2
        %2470 = vrot.lane.b32.xlu0 %v2468, 127
        %v2471 = vpop.permute.xlu0 %2470
        %v2472 = vmul.f32 %v2471, %v368
        %v2473 = vadd.f32 %v2467, %v2472
        %v2474 = vstv %s366
        %v2475 = vadd.f32 %v2473, %v2474
        %2476 = vst [vmem:[%s321] sm:$0x1] %v2475
        %s2477 = sand.u32 %s226, 1
        %s2478 = scalar_lea.sflag [#allocation5], %s2477
        %s2479 = sand.u32 %s226, 1
        %s2480 = scalar_lea.vmem [#allocation4], %s2479
        // Predicated region
        $region57: #{tpu_custom_call.1} parent=55 // pred_check
          %p2481 = pneg %p236
        $region58: #{tpu_custom_call.1} parent=55 // pred_check_branch
          %2483 = sbr.rel (%p2481) target = $region60
        $region59: #{tpu_custom_call.1} parent=55 // pred_region
          %s2485 = ssub.s32 16, 16
          %2486 = vsyncadd %s2478, %s2485
          %s2487 = smul.addr %s24, 16
          %s2488 = scalar_lea.hbm %s9, %s2487
          %s2490 = sshll.u32 %s2480, 4
          %s2491 = int_to_ptr.vmem [resolvable:$true] %s2490
          %2493 = dma.vmem_to_hbm [thread:$0]  %s2491, 16, %s2488, %s2478
        $region60: #{tpu_custom_call.1} parent=55 // pred_fallthru
          _
      $region56: #{tpu_custom_call.1} parent=5 // pred_fallthru
        _
      %p2494 = scmp.le.s32.totalorder 2, %s19
      // Predicated region
      $region61: #{tpu_custom_call.1} parent=5 // pred_check
        %p2495 = pneg %p2494
      $region62: #{tpu_custom_call.1} parent=5 // pred_check_branch
        %2497 = sbr.rel (%p2495) target = $region64
      $region63: #{tpu_custom_call.1} parent=5 // pred_region
        %s2498 = ssub.s32 %s19, 2
        // Predicated region
        $region65: #{tpu_custom_call.1} parent=63 // pred_check
          %p2499 = pneg %p242
        $region66: #{tpu_custom_call.1} parent=63 // pred_check_branch
          %2501 = sbr.rel (%p2499) target = $region68
        $region67: #{tpu_custom_call.1} parent=63 // pred_region
          %s2502 = sand.u32 %s227, 1
          %s2503 = scalar_lea.sflag [#allocation5], %s2502
          %s2504 = sand.u32 %s227, 1
          %s2505 = scalar_lea.vmem [#allocation4], %s2504
          %2506 = dma.done %s2503, 16
        $region68: #{tpu_custom_call.1} parent=63 // pred_fallthru
          _
      $region64: #{tpu_custom_call.1} parent=5 // pred_fallthru
        _
    $region6: #{tpu_custom_call.1} parent=1 // loop_footer
      %s23 = sadd.s32 1, %s19
    $region7: #{tpu_custom_call.1} parent=1 // loop_footer_branch
      %18 = sbr.rel target = $region3
    $region8: #{tpu_custom_call.1} parent=1 // loop_exit
      _
    %2507 = vsyncpa [#allocation5], 1
    %s2508 = scalar_lea.sflag [#allocation5], 1
    %2509 = vsyncpa %s2508, 1

// kernel: tpu_custom_call.1
$region0: #{tpu_custom_call.1}
  #allocation0 [shape = 'u32[]', space=smem, size = 0x4, offset = 0x4, fixed_abs, tag = 'smem constant byte address 0x4 - core index']
  #allocation1 [shape = 'u32[144,128]{1,0:T(1,128)}', space=vmem, size = 0x12000, scoped, tag = 'internal scratch']
  #allocation2 [shape = 'f32[192,128]{1,0:T(8,128)}', space=vmem, size = 0x18000, scoped, tag = 'scratch operand']
  #allocation3 [shape = 'f32[1]{0:T(128)S(6)}', space=smem, size = 0x200, scoped, tag = 'scoped memory for tpu_custom_call.1']
  %s0 = inlined_call_operand.vmem [shape: f32[2,1,128], index: 0, kind: input, shape index: {}]
  %s1 = inlined_call_operand.vmem [shape: f32[1,128], index: 1, kind: input, shape index: {}]
  %s2 = inlined_call_operand.vmem [shape: f32[1,128], index: 2, kind: input, shape index: {}]
  %s3 = inlined_call_operand.vmem [shape: f32[64,3], index: 3, kind: input, shape index: {}]
  %s4 = inlined_call_operand.vmem [shape: f32[64,1], index: 4, kind: input, shape index: {}]
  %s5 = inlined_call_operand.vmem [shape: f32[64,192], index: 5, kind: input, shape index: {}]
  %s6 = inlined_call_operand.vmem [shape: f32[64,1], index: 6, kind: input, shape index: {}]
  %s7 = inlined_call_operand.vmem [shape: f32[3,64], index: 7, kind: input, shape index: {}]
  %s8 = inlined_call_operand.<no memory space> [shape: f32[1], index: 8, kind: input, shape index: {}]
  %s9 = inlined_call_operand.hbm [shape: f32[2,1,128], index: 9, kind: output, shape index: {}]
  %s10 = sld [smem:[#allocation0]]
  $region69: #{tpu_custom_call.1} parent=0
    _
  %s12 = ssub.s32 1, %s10
  %s13 = scalar_select 0, %s12, %s10
  %14 = sst [smem:[#allocation3]] %s8
  $region1: #{tpu_custom_call.1} parent=0
    #allocation4 [shape = 'u8[1024]{0}', space=vmem, size = 0x400, scoped, tag = 'output window, operand 0']
    #allocation5 [shape = 's32[2]{0}', space=sflag, size = 0x8, scoped, tag = 'scoped memory for tpu_custom_call.1']
    %15 = vsyncpa [#allocation5], 0
    %s16 = scalar_lea.sflag [#allocation5], 1
    %17 = vsyncpa %s16, 0
    loop: start=0, step=1, limit=4
    $region2: #{tpu_custom_call.1} parent=1 // loop_pre_header
      _
    $region3: #{tpu_custom_call.1} parent=1 // loop_header
      %s19 = sphi 0, %s23
      %p20 = scmp.ge.s32.totalorder %s19, 4
      %s29 = sphi 0, %s31
      %s32 = sphi 0, %s29
      %s33 = sphi 0, %s32
      %s49 = sphi 0, %s33
      %s53 = sphi 0, %s53
      %s55 = sphi 0, %s53
      %s56 = sphi 0, %s55
      %s70 = sphi 0, %s56
      %s74 = sphi 0, %s74
      %s76 = sphi 0, %s74
      %s77 = sphi 0, %s76
      %s91 = sphi 0, %s77
      %s95 = sphi 0, %s95
      %s97 = sphi 0, %s95
      %s98 = sphi 0, %s97
      %s112 = sphi 0, %s98
      %s116 = sphi 0, %s116
      %s118 = sphi 0, %s116
      %s119 = sphi 0, %s118
      %s133 = sphi 0, %s119
      %s137 = sphi 0, %s137
      %s139 = sphi 0, %s137
      %s140 = sphi 0, %s139
      %s154 = sphi 0, %s140
      %s158 = sphi 0, %s158
      %s160 = sphi 0, %s158
      %s161 = sphi 0, %s160
      %s175 = sphi 0, %s161
      %s179 = sphi 0, %s179
      %s181 = sphi 0, %s179
      %s182 = sphi 0, %s181
      %s196 = sphi 0, %s182
      %s200 = sphi 0, %s200
      %s202 = sphi 0, %s200
      %s203 = sphi 0, %s202
      %s217 = sphi 0, %s203
      %s223 = sphi 0, %s225
      %s226 = sphi 0, %s223
      %s227 = sphi 0, %s226
      %s243 = sphi 0, %s227
    $region4: #{tpu_custom_call.1} parent=1 // loop_header_branch
      %22 = sbr.rel (%p20) target = $region8
    $region5: #{tpu_custom_call.1} parent=1 // loop_body
      %s24 = ssub.s32 %s19, 1
      %s25 = ssub.s32 %s19, 2
      %s26 = sadd.s32 %s19, 1
      %s27 = ssub.s32 %s19, %s26
      %p28 = scmp.eq.s32.totalorder %s27, 0
      %s30 = sadd.s32 %s29, 1
      %s31 = scalar_select %p28, %s29, %s30
      %p34 = pneg %p28
      %p35 = scmp.eq.s32.totalorder %s19, 1
      %p36 = por %p34, %p35
      %p37 = scmp.ne.s32.totalorder %s29, %s32
      %p38 = scmp.eq.s32.totalorder %s19, 0
      %p39 = por %p37, %p38
      %p40 = scmp.ne.s32.totalorder %s29, %s32
      %p41 = scmp.eq.s32.totalorder %s24, 1
      %p42 = por %p40, %p41
      %p43 = scmp.ne.s32.totalorder %s32, %s33
      %p44 = scmp.eq.s32.totalorder %s24, 0
      %p45 = por %p43, %p44
      %p46 = scmp.ne.s32.totalorder %s32, %s33
      %p47 = scmp.eq.s32.totalorder %s25, 1
      %p48 = por %p46, %p47
      %p50 = scmp.ne.s32.totalorder %s33, %s49
      %p51 = scmp.eq.s32.totalorder %s25, 0
      %p52 = por %p50, %p51
      %s54 = sadd.s32 %s53, 1
      %p57 = scmp.eq.s32.totalorder %s19, 1
      %p58 = scmp.ne.s32.totalorder %s53, %s55
      %p59 = scmp.eq.s32.totalorder %s19, 0
      %p60 = por %p58, %p59
      %p61 = scmp.ne.s32.totalorder %s53, %s55
      %p62 = scmp.eq.s32.totalorder %s24, 1
      %p63 = por %p61, %p62
      %p64 = scmp.ne.s32.totalorder %s55, %s56
      %p65 = scmp.eq.s32.totalorder %s24, 0
      %p66 = por %p64, %p65
      %p67 = scmp.ne.s32.totalorder %s55, %s56
      %p68 = scmp.eq.s32.totalorder %s25, 1
      %p69 = por %p67, %p68
      %p71 = scmp.ne.s32.totalorder %s56, %s70
      %p72 = scmp.eq.s32.totalorder %s25, 0
      %p73 = por %p71, %p72
      %s75 = sadd.s32 %s74, 1
      %p78 = scmp.eq.s32.totalorder %s19, 1
      %p79 = scmp.ne.s32.totalorder %s74, %s76
      %p80 = scmp.eq.s32.totalorder %s19, 0
      %p81 = por %p79, %p80
      %p82 = scmp.ne.s32.totalorder %s74, %s76
      %p83 = scmp.eq.s32.totalorder %s24, 1
      %p84 = por %p82, %p83
      %p85 = scmp.ne.s32.totalorder %s76, %s77
      %p86 = scmp.eq.s32.totalorder %s24, 0
      %p87 = por %p85, %p86
      %p88 = scmp.ne.s32.totalorder %s76, %s77
      %p89 = scmp.eq.s32.totalorder %s25, 1
      %p90 = por %p88, %p89
      %p92 = scmp.ne.s32.totalorder %s77, %s91
      %p93 = scmp.eq.s32.totalorder %s25, 0
      %p94 = por %p92, %p93
      %s96 = sadd.s32 %s95, 1
      %p99 = scmp.eq.s32.totalorder %s19, 1
      %p100 = scmp.ne.s32.totalorder %s95, %s97
      %p101 = scmp.eq.s32.totalorder %s19, 0
      %p102 = por %p100, %p101
      %p103 = scmp.ne.s32.totalorder %s95, %s97
      %p104 = scmp.eq.s32.totalorder %s24, 1
      %p105 = por %p103, %p104
      %p106 = scmp.ne.s32.totalorder %s97, %s98
      %p107 = scmp.eq.s32.totalorder %s24, 0
      %p108 = por %p106, %p107
      %p109 = scmp.ne.s32.totalorder %s97, %s98
      %p110 = scmp.eq.s32.totalorder %s25, 1
      %p111 = por %p109, %p110
      %p113 = scmp.ne.s32.totalorder %s98, %s112
      %p114 = scmp.eq.s32.totalorder %s25, 0
      %p115 = por %p113, %p114
      %s117 = sadd.s32 %s116, 1
      %p120 = scmp.eq.s32.totalorder %s19, 1
      %p121 = scmp.ne.s32.totalorder %s116, %s118
      %p122 = scmp.eq.s32.totalorder %s19, 0
      %p123 = por %p121, %p122
      %p124 = scmp.ne.s32.totalorder %s116, %s118
      %p125 = scmp.eq.s32.totalorder %s24, 1
      %p126 = por %p124, %p125
      %p127 = scmp.ne.s32.totalorder %s118, %s119
      %p128 = scmp.eq.s32.totalorder %s24, 0
      %p129 = por %p127, %p128
      %p130 = scmp.ne.s32.totalorder %s118, %s119
      %p131 = scmp.eq.s32.totalorder %s25, 1
      %p132 = por %p130, %p131
      %p134 = scmp.ne.s32.totalorder %s119, %s133
      %p135 = scmp.eq.s32.totalorder %s25, 0
      %p136 = por %p134, %p135
      %s138 = sadd.s32 %s137, 1
      %p141 = scmp.eq.s32.totalorder %s19, 1
      %p142 = scmp.ne.s32.totalorder %s137, %s139
      %p143 = scmp.eq.s32.totalorder %s19, 0
      %p144 = por %p142, %p143
      %p145 = scmp.ne.s32.totalorder %s137, %s139
      %p146 = scmp.eq.s32.totalorder %s24, 1
      %p147 = por %p145, %p146
      %p148 = scmp.ne.s32.totalorder %s139, %s140
      %p149 = scmp.eq.s32.totalorder %s24, 0
      %p150 = por %p148, %p149
      %p151 = scmp.ne.s32.totalorder %s139, %s140
      %p152 = scmp.eq.s32.totalorder %s25, 1
      %p153 = por %p151, %p152
      %p155 = scmp.ne.s32.totalorder %s140, %s154
      %p156 = scmp.eq.s32.totalorder %s25, 0
      %p157 = por %p155, %p156
      %s159 = sadd.s32 %s158, 1
      %p162 = scmp.eq.s32.totalorder %s19, 1
      %p163 = scmp.ne.s32.totalorder %s158, %s160
      %p164 = scmp.eq.s32.totalorder %s19, 0
      %p165 = por %p163, %p164
      %p166 = scmp.ne.s32.totalorder %s158, %s160
      %p167 = scmp.eq.s32.totalorder %s24, 1
      %p168 = por %p166, %p167
      %p169 = scmp.ne.s32.totalorder %s160, %s161
      %p170 = scmp.eq.s32.totalorder %s24, 0
      %p171 = por %p169, %p170
      %p172 = scmp.ne.s32.totalorder %s160, %s161
      %p173 = scmp.eq.s32.totalorder %s25, 1
      %p174 = por %p172, %p173
      %p176 = scmp.ne.s32.totalorder %s161, %s175
      %p177 = scmp.eq.s32.totalorder %s25, 0
      %p178 = por %p176, %p177
      %s180 = sadd.s32 %s179, 1
      %p183 = scmp.eq.s32.totalorder %s19, 1
      %p184 = scmp.ne.s32.totalorder %s179, %s181
      %p185 = scmp.eq.s32.totalorder %s19, 0
      %p186 = por %p184, %p185
      %p187 = scmp.ne.s32.totalorder %s179, %s181
      %p188 = scmp.eq.s32.totalorder %s24, 1
      %p189 = por %p187, %p188
      %p190 = scmp.ne.s32.totalorder %s181, %s182
      %p191 = scmp.eq.s32.totalorder %s24, 0
      %p192 = por %p190, %p191
      %p193 = scmp.ne.s32.totalorder %s181, %s182
      %p194 = scmp.eq.s32.totalorder %s25, 1
      %p195 = por %p193, %p194
      %p197 = scmp.ne.s32.totalorder %s182, %s196
      %p198 = scmp.eq.s32.totalorder %s25, 0
      %p199 = por %p197, %p198
      %s201 = sadd.s32 %s200, 1
      %p204 = scmp.eq.s32.totalorder %s19, 1
      %p205 = scmp.ne.s32.totalorder %s200, %s202
      %p206 = scmp.eq.s32.totalorder %s19, 0
      %p207 = por %p205, %p206
      %p208 = scmp.ne.s32.totalorder %s200, %s202
      %p209 = scmp.eq.s32.totalorder %s24, 1
      %p210 = por %p208, %p209
      %p211 = scmp.ne.s32.totalorder %s202, %s203
      %p212 = scmp.eq.s32.totalorder %s24, 0
      %p213 = por %p211, %p212
      %p214 = scmp.ne.s32.totalorder %s202, %s203
      %p215 = scmp.eq.s32.totalorder %s25, 1
      %p216 = por %p214, %p215
      %p218 = scmp.ne.s32.totalorder %s203, %s217
      %p219 = scmp.eq.s32.totalorder %s25, 0
      %p220 = por %p218, %p219
      %s221 = ssub.s32 %s19, %s26
      %p222 = scmp.eq.s32.totalorder %s221, 0
      %s224 = sadd.s32 %s223, 1
      %s225 = scalar_select %p222, %s223, %s224
      %p228 = pneg %p222
      %p229 = scmp.eq.s32.totalorder %s19, 1
      %p230 = por %p228, %p229
      %p231 = scmp.ne.s32.totalorder %s223, %s226
      %p232 = scmp.eq.s32.totalorder %s19, 0
      %p233 = por %p231, %p232
      %p234 = scmp.ne.s32.totalorder %s223, %s226
      %p235 = scmp.eq.s32.totalorder %s24, 1
      %p236 = por %p234, %p235
      %p237 = scmp.ne.s32.totalorder %s226, %s227
      %p238 = scmp.eq.s32.totalorder %s24, 0
      %p239 = por %p237, %p238
      %p240 = scmp.ne.s32.totalorder %s226, %s227
      %p241 = scmp.eq.s32.totalorder %s25, 1
      %p242 = por %p240, %p241
      %p244 = scmp.ne.s32.totalorder %s227, %s243
      %p245 = scmp.eq.s32.totalorder %s25, 0
      %p246 = por %p244, %p245
      %p247 = scmp.le.s32.totalorder 1, %s19
      %p248 = scmp.lt.s32.totalorder %s19, 3
      %p249 = pnand %p247, %p248
      %p250 = pneg %p249
      // Predicated region
      $region9: #{tpu_custom_call.1} parent=5 // pred_check
        _
      $region10: #{tpu_custom_call.1} parent=5 // pred_check_branch
        %252 = sbr.rel (%p249) target = $region12
      $region11: #{tpu_custom_call.1} parent=5 // pred_region
        %s253 = ssub.s32 %s19, 1
        // Predicated region
        $region13: #{tpu_custom_call.1} parent=11 // pred_check
          %p254 = pneg %p66
        $region14: #{tpu_custom_call.1} parent=11 // pred_check_branch
          %256 = sbr.rel (%p254) target = $region16
        $region15: #{tpu_custom_call.1} parent=11 // pred_region
          _
        $region16: #{tpu_custom_call.1} parent=11 // pred_fallthru
          _
        // Predicated region
        $region17: #{tpu_custom_call.1} parent=11 // pred_check
          %p257 = pneg %p87
        $region18: #{tpu_custom_call.1} parent=11 // pred_check_branch
          %259 = sbr.rel (%p257) target = $region20
        $region19: #{tpu_custom_call.1} parent=11 // pred_region
          _
        $region20: #{tpu_custom_call.1} parent=11 // pred_fallthru
          _
        // Predicated region
        $region21: #{tpu_custom_call.1} parent=11 // pred_check
          %p260 = pneg %p108
        $region22: #{tpu_custom_call.1} parent=11 // pred_check_branch
          %262 = sbr.rel (%p260) target = $region24
        $region23: #{tpu_custom_call.1} parent=11 // pred_region
          _
        $region24: #{tpu_custom_call.1} parent=11 // pred_fallthru
          _
        // Predicated region
        $region25: #{tpu_custom_call.1} parent=11 // pred_check
          %p263 = pneg %p129
        $region26: #{tpu_custom_call.1} parent=11 // pred_check_branch
          %265 = sbr.rel (%p263) target = $region28
        $region27: #{tpu_custom_call.1} parent=11 // pred_region
          _
        $region28: #{tpu_custom_call.1} parent=11 // pred_fallthru
          _
        // Predicated region
        $region29: #{tpu_custom_call.1} parent=11 // pred_check
          %p266 = pneg %p150
        $region30: #{tpu_custom_call.1} parent=11 // pred_check_branch
          %268 = sbr.rel (%p266) target = $region32
        $region31: #{tpu_custom_call.1} parent=11 // pred_region
          _
        $region32: #{tpu_custom_call.1} parent=11 // pred_fallthru
          _
        // Predicated region
        $region33: #{tpu_custom_call.1} parent=11 // pred_check
          %p269 = pneg %p171
        $region34: #{tpu_custom_call.1} parent=11 // pred_check_branch
          %271 = sbr.rel (%p269) target = $region36
        $region35: #{tpu_custom_call.1} parent=11 // pred_region
          _
        $region36: #{tpu_custom_call.1} parent=11 // pred_fallthru
          _
        // Predicated region
        $region37: #{tpu_custom_call.1} parent=11 // pred_check
          %p272 = pneg %p192
        $region38: #{tpu_custom_call.1} parent=11 // pred_check_branch
          %274 = sbr.rel (%p272) target = $region40
        $region39: #{tpu_custom_call.1} parent=11 // pred_region
          _
        $region40: #{tpu_custom_call.1} parent=11 // pred_fallthru
          _
        // Predicated region
        $region41: #{tpu_custom_call.1} parent=11 // pred_check
          %p275 = pneg %p213
        $region42: #{tpu_custom_call.1} parent=11 // pred_check_branch
          %277 = sbr.rel (%p275) target = $region44
        $region43: #{tpu_custom_call.1} parent=11 // pred_region
          _
        $region44: #{tpu_custom_call.1} parent=11 // pred_fallthru
          _
      $region12: #{tpu_custom_call.1} parent=5 // pred_fallthru
        _
      %p278 = scmp.lt.s32.totalorder %s19, 2
      // Predicated region
      $region45: #{tpu_custom_call.1} parent=5 // pred_check
        %p279 = pneg %p278
      $region46: #{tpu_custom_call.1} parent=5 // pred_check_branch
        %281 = sbr.rel (%p279) target = $region48
      $region47: #{tpu_custom_call.1} parent=5 // pred_region
        // Predicated region
        $region49: #{tpu_custom_call.1} parent=47 // pred_check
          %p282 = pneg %p39
        $region50: #{tpu_custom_call.1} parent=47 // pred_check_branch
          %284 = sbr.rel (%p282) target = $region52
        $region51: #{tpu_custom_call.1} parent=47 // pred_region
          %p285 = scmp.lt.s32.totalorder %s19, 1
          %s286 = scalar_select %p285, %s19, 1
          %s287 = scalar_lea.vmem %s0, %s286
        $region52: #{tpu_custom_call.1} parent=47 // pred_fallthru
          _
      $region48: #{tpu_custom_call.1} parent=5 // pred_fallthru
        _
      %p288 = scmp.le.s32.totalorder 1, %s19
      %p289 = scmp.lt.s32.totalorder %s19, 3
      %p290 = pnand %p288, %p289
      %p291 = pneg %p290
      // Predicated region
      $region53: #{tpu_custom_call.1} parent=5 // pred_check
        _
      $region54: #{tpu_custom_call.1} parent=5 // pred_check_branch
        %293 = sbr.rel (%p290) target = $region56
      $region55: #{tpu_custom_call.1} parent=5 // pred_region
        %s294 = ssub.s32 %s19, 1
        %p295 = scmp.lt.s32.totalorder %s24, 1
        %s296 = scalar_select %p295, %s24, 1
        %s297 = scalar_lea.vmem %s0, %s296
        %p298 = pneg %p45
        %p299 = pneg %p42
        %p300 = pneg %p66
        %p301 = pneg %p63
        %p302 = pneg %p87
        %p303 = pneg %p84
        %p304 = pneg %p108
        %p305 = pneg %p105
        %p306 = pneg %p129
        %p307 = pneg %p126
        %p308 = pneg %p150
        %p309 = pneg %p147
        %p310 = pneg %p171
        %p311 = pneg %p168
        %p312 = pneg %p192
        %p313 = pneg %p189
        %p314 = pneg %p213
        %p315 = pneg %p210
        %p316 = pneg %p239
        %p317 = pneg %p236
        %s318 = sand.u32 %s226, 1
        %s319 = scalar_lea.sflag [#allocation5], %s318
        %s320 = sand.u32 %s226, 1
        %s321 = scalar_lea.vmem [#allocation4], %s320
        %p322 = scmp.lt.s32.totalorder %s24, 1
        %s323 = scalar_select %p322, %s24, 1
        %s324 = scalar_lea.vmem %s0, %s323
        %v325 = vld [vmem:[%s3] sm:$0xff]
        %v326 = vld [vmem:[%s3 + $0x8] sm:$0xff]
        %v327 = vld [vmem:[%s3 + $0x10] sm:$0xff]
        %v328 = vld [vmem:[%s3 + $0x18] sm:$0xff]
        %v329 = vld [vmem:[%s3 + $0x20] sm:$0xff]
        %v330 = vld [vmem:[%s3 + $0x28] sm:$0xff]
        %v331 = vld [vmem:[%s3 + $0x30] sm:$0xff]
        %v332 = vld [vmem:[%s3 + $0x38] sm:$0xff]
        %v333 = vld [vmem:[%s4] sm:$0xff]
        %v334 = vld [vmem:[%s4 + $0x8] sm:$0xff]
        %v335 = vld [vmem:[%s4 + $0x10] sm:$0xff]
        %v336 = vld [vmem:[%s4 + $0x18] sm:$0xff]
        %v337 = vld [vmem:[%s4 + $0x20] sm:$0xff]
        %v338 = vld [vmem:[%s4 + $0x28] sm:$0xff]
        %v339 = vld [vmem:[%s4 + $0x30] sm:$0xff]
        %v340 = vld [vmem:[%s4 + $0x38] sm:$0xff]
        %v341 = vld [vmem:[%s5] sm:$0xff]
        %v342 = vld [vmem:[%s5 + $0x8] sm:$0xff]
        %v343 = vld [vmem:[%s5 + $0x10] sm:$0xff]
        %v344 = vld [vmem:[%s5 + $0x18] sm:$0xff]
        %v345 = vld [vmem:[%s5 + $0x20] sm:$0xff]
        %v346 = vld [vmem:[%s5 + $0x28] sm:$0xff]
        %v347 = vld [vmem:[%s5 + $0x30] sm:$0xff]
        %v348 = vld [vmem:[%s5 + $0x38] sm:$0xff]
        %v349 = vld [vmem:[%s5 + $0x40] sm:$0xff]
        %v350 = vld [vmem:[%s5 + $0x48] sm:$0xff]
        %v351 = vld [vmem:[%s5 + $0x50] sm:$0xff]
        %v352 = vld [vmem:[%s5 + $0x58] sm:$0xff]
        %v353 = vld [vmem:[%s5 + $0x60] sm:$0xff]
        %v354 = vld [vmem:[%s5 + $0x68] sm:$0xff]
        %v355 = vld [vmem:[%s5 + $0x70] sm:$0xff]
        %v356 = vld [vmem:[%s5 + $0x78] sm:$0xff]
        %v357 = vld [vmem:[%s6] sm:$0xff]
        %v358 = vld [vmem:[%s6 + $0x8] sm:$0xff]
        %v359 = vld [vmem:[%s6 + $0x10] sm:$0xff]
        %v360 = vld [vmem:[%s6 + $0x18] sm:$0xff]
        %v361 = vld [vmem:[%s6 + $0x20] sm:$0xff]
        %v362 = vld [vmem:[%s6 + $0x28] sm:$0xff]
        %v363 = vld [vmem:[%s6 + $0x30] sm:$0xff]
        %v364 = vld [vmem:[%s6 + $0x38] sm:$0xff]
        %v365 = vld [vmem:[%s7] sm:$0x7]
        %s366 = sld [smem:[#allocation3]]
        %v367 = vld [vmem:[%s1] sm:$0x1]
        %v368 = vld [vmem:[%s2] sm:$0x1]
        %v369 = vld [vmem:[%s324] sm:$0x1]
        %370 = vrot.lane.b32.xlu0 %v369, 1
        %v371 = vpop.permute.xlu0 %370
        %v372 = vmul.f32 %v371, %v367
        %374 = vset.pattern.permute.xlu0 0
        %375 = vperm.xlu0 %374, %v325
        %v376 = vpop.permute.xlu0 %375
        %379 = vset.pattern.permute.xlu0 0
        %380 = vperm.xlu0 %379, %v326
        %v381 = vpop.permute.xlu0 %380
        %384 = vset.pattern.permute.xlu0 0
        %385 = vperm.xlu0 %384, %v327
        %v386 = vpop.permute.xlu0 %385
        %389 = vset.pattern.permute.xlu0 0
        %390 = vperm.xlu0 %389, %v328
        %v391 = vpop.permute.xlu0 %390
        %394 = vset.pattern.permute.xlu0 0
        %395 = vperm.xlu0 %394, %v329
        %v396 = vpop.permute.xlu0 %395
        %399 = vset.pattern.permute.xlu0 0
        %400 = vperm.xlu0 %399, %v330
        %v401 = vpop.permute.xlu0 %400
        %404 = vset.pattern.permute.xlu0 0
        %405 = vperm.xlu0 %404, %v331
        %v406 = vpop.permute.xlu0 %405
        %409 = vset.pattern.permute.xlu0 0
        %410 = vperm.xlu0 %409, %v332
        %v411 = vpop.permute.xlu0 %410
        %v413 = vlaneseq
        %v414 = vshrl.u32 %v413, 7
        %v415 = vsub.s32 0, %v414
        %v416 = vrot.slane %v372, %v415
        %v417 = vmul.f32 %v376, %v416
        %v418 = vmul.f32 %v381, %v416
        %v419 = vmul.f32 %v386, %v416
        %v420 = vmul.f32 %v391, %v416
        %v421 = vmul.f32 %v396, %v416
        %v422 = vmul.f32 %v401, %v416
        %v423 = vmul.f32 %v406, %v416
        %v424 = vmul.f32 %v411, %v416
        %425 = vset.pattern.permute.xlu0 1
        %426 = vperm.xlu0 %425, %v325
        %v427 = vpop.permute.xlu0 %426
        %429 = vset.pattern.permute.xlu0 1
        %430 = vperm.xlu0 %429, %v326
        %v431 = vpop.permute.xlu0 %430
        %433 = vset.pattern.permute.xlu0 1
        %434 = vperm.xlu0 %433, %v327
        %v435 = vpop.permute.xlu0 %434
        %437 = vset.pattern.permute.xlu0 1
        %438 = vperm.xlu0 %437, %v328
        %v439 = vpop.permute.xlu0 %438
        %441 = vset.pattern.permute.xlu0 1
        %442 = vperm.xlu0 %441, %v329
        %v443 = vpop.permute.xlu0 %442
        %445 = vset.pattern.permute.xlu0 1
        %446 = vperm.xlu0 %445, %v330
        %v447 = vpop.permute.xlu0 %446
        %449 = vset.pattern.permute.xlu0 1
        %450 = vperm.xlu0 %449, %v331
        %v451 = vpop.permute.xlu0 %450
        %453 = vset.pattern.permute.xlu0 1
        %454 = vperm.xlu0 %453, %v332
        %v455 = vpop.permute.xlu0 %454
        %v458 = vlaneseq
        %v459 = vshrl.u32 %v458, 7
        %v460 = vsub.s32 0, %v459
        %v461 = vrot.slane %v369, %v460
        %v463 = vmul.f32 %v427, %v461
        %v464 = vmul.f32 %v431, %v461
        %v465 = vmul.f32 %v435, %v461
        %v466 = vmul.f32 %v439, %v461
        %v467 = vmul.f32 %v443, %v461
        %v468 = vmul.f32 %v447, %v461
        %v469 = vmul.f32 %v451, %v461
        %v470 = vmul.f32 %v455, %v461
        %v471 = vadd.f32 %v417, %v463
        %v472 = vadd.f32 %v418, %v464
        %v473 = vadd.f32 %v419, %v465
        %v474 = vadd.f32 %v420, %v466
        %v475 = vadd.f32 %v421, %v467
        %v476 = vadd.f32 %v422, %v468
        %v477 = vadd.f32 %v423, %v469
        %v478 = vadd.f32 %v424, %v470
        %479 = vrot.lane.b32.xlu0 %v369, 127
        %v480 = vpop.permute.xlu0 %479
        %v481 = vmul.f32 %v480, %v368
        %482 = vset.pattern.permute.xlu0 2
        %483 = vperm.xlu0 %482, %v325
        %v484 = vpop.permute.xlu0 %483
        %486 = vset.pattern.permute.xlu0 2
        %487 = vperm.xlu0 %486, %v326
        %v488 = vpop.permute.xlu0 %487
        %490 = vset.pattern.permute.xlu0 2
        %491 = vperm.xlu0 %490, %v327
        %v492 = vpop.permute.xlu0 %491
        %494 = vset.pattern.permute.xlu0 2
        %495 = vperm.xlu0 %494, %v328
        %v496 = vpop.permute.xlu0 %495
        %498 = vset.pattern.permute.xlu0 2
        %499 = vperm.xlu0 %498, %v329
        %v500 = vpop.permute.xlu0 %499
        %502 = vset.pattern.permute.xlu0 2
        %503 = vperm.xlu0 %502, %v330
        %v504 = vpop.permute.xlu0 %503
        %506 = vset.pattern.permute.xlu0 2
        %507 = vperm.xlu0 %506, %v331
        %v508 = vpop.permute.xlu0 %507
        %510 = vset.pattern.permute.xlu0 2
        %511 = vperm.xlu0 %510, %v332
        %v512 = vpop.permute.xlu0 %511
        %v514 = vlaneseq
        %v515 = vshrl.u32 %v514, 7
        %v516 = vsub.s32 0, %v515
        %v517 = vrot.slane %v481, %v516
        %v518 = vmul.f32 %v484, %v517
        %v519 = vmul.f32 %v488, %v517
        %v520 = vmul.f32 %v492, %v517
        %v521 = vmul.f32 %v496, %v517
        %v522 = vmul.f32 %v500, %v517
        %v523 = vmul.f32 %v504, %v517
        %v524 = vmul.f32 %v508, %v517
        %v525 = vmul.f32 %v512, %v517
        %v526 = vadd.f32 %v471, %v518
        %v527 = vadd.f32 %v472, %v519
        %v528 = vadd.f32 %v473, %v520
        %v529 = vadd.f32 %v474, %v521
        %v530 = vadd.f32 %v475, %v522
        %v531 = vadd.f32 %v476, %v523
        %v532 = vadd.f32 %v477, %v524
        %v533 = vadd.f32 %v478, %v525
        %535 = vset.pattern.permute.xlu0 0
        %536 = vperm.xlu0 %535, %v333
        %v537 = vpop.permute.xlu0 %536
        %540 = vset.pattern.permute.xlu0 0
        %541 = vperm.xlu0 %540, %v334
        %v542 = vpop.permute.xlu0 %541
        %545 = vset.pattern.permute.xlu0 0
        %546 = vperm.xlu0 %545, %v335
        %v547 = vpop.permute.xlu0 %546
        %550 = vset.pattern.permute.xlu0 0
        %551 = vperm.xlu0 %550, %v336
        %v552 = vpop.permute.xlu0 %551
        %555 = vset.pattern.permute.xlu0 0
        %556 = vperm.xlu0 %555, %v337
        %v557 = vpop.permute.xlu0 %556
        %560 = vset.pattern.permute.xlu0 0
        %561 = vperm.xlu0 %560, %v338
        %v562 = vpop.permute.xlu0 %561
        %565 = vset.pattern.permute.xlu0 0
        %566 = vperm.xlu0 %565, %v339
        %v567 = vpop.permute.xlu0 %566
        %570 = vset.pattern.permute.xlu0 0
        %571 = vperm.xlu0 %570, %v340
        %v572 = vpop.permute.xlu0 %571
        %v574 = vadd.f32 %v526, %v537
        %v575 = vadd.f32 %v527, %v542
        %v576 = vadd.f32 %v528, %v547
        %v577 = vadd.f32 %v529, %v552
        %v578 = vadd.f32 %v530, %v557
        %v579 = vadd.f32 %v531, %v562
        %v580 = vadd.f32 %v532, %v567
        %v581 = vadd.f32 %v533, %v572
        %v582 = vmax.f32 %v574, 0.0
        %v583 = vmax.f32 %v575, 0.0
        %v584 = vmax.f32 %v576, 0.0
        %v585 = vmax.f32 %v577, 0.0
        %v586 = vmax.f32 %v578, 0.0
        %v587 = vmax.f32 %v579, 0.0
        %v588 = vmax.f32 %v580, 0.0
        %v589 = vmax.f32 %v581, 0.0
        %590 = vrot.lane.b32.xlu0 %v582, 1
        %v591 = vpop.permute.xlu0 %590
        %592 = vrot.lane.b32.xlu0 %v583, 1
        %v593 = vpop.permute.xlu0 %592
        %594 = vrot.lane.b32.xlu0 %v584, 1
        %v595 = vpop.permute.xlu0 %594
        %596 = vrot.lane.b32.xlu0 %v585, 1
        %v597 = vpop.permute.xlu0 %596
        %598 = vrot.lane.b32.xlu0 %v586, 1
        %v599 = vpop.permute.xlu0 %598
        %600 = vrot.lane.b32.xlu0 %v587, 1
        %v601 = vpop.permute.xlu0 %600
        %602 = vrot.lane.b32.xlu0 %v588, 1
        %v603 = vpop.permute.xlu0 %602
        %604 = vrot.lane.b32.xlu0 %v589, 1
        %v605 = vpop.permute.xlu0 %604
        %v607 = vlaneseq
        %v608 = vshrl.u32 %v607, 7
        %v609 = vsub.s32 0, %v608
        %v610 = vrot.slane %v367, %v609
        %v612 = vmul.f32 %v591, %v610
        %v613 = vmul.f32 %v593, %v610
        %v614 = vmul.f32 %v595, %v610
        %v615 = vmul.f32 %v597, %v610
        %v616 = vmul.f32 %v599, %v610
        %v617 = vmul.f32 %v601, %v610
        %v618 = vmul.f32 %v603, %v610
        %v619 = vmul.f32 %v605, %v610
        %620 = vst [vmem:[#allocation2] sm:$0xff] %v612
        %621 = vst [vmem:[#allocation2 + $0x8] sm:$0xff] %v613
        %622 = vst [vmem:[#allocation2 + $0x10] sm:$0xff] %v614
        %623 = vst [vmem:[#allocation2 + $0x18] sm:$0xff] %v615
        %624 = vst [vmem:[#allocation2 + $0x20] sm:$0xff] %v616
        %625 = vst [vmem:[#allocation2 + $0x28] sm:$0xff] %v617
        %626 = vst [vmem:[#allocation2 + $0x30] sm:$0xff] %v618
        %627 = vst [vmem:[#allocation2 + $0x38] sm:$0xff] %v619
        %628 = vst [vmem:[#allocation2 + $0x40] sm:$0xff] %v582
        %629 = vst [vmem:[#allocation2 + $0x48] sm:$0xff] %v583
        %630 = vst [vmem:[#allocation2 + $0x50] sm:$0xff] %v584
        %631 = vst [vmem:[#allocation2 + $0x58] sm:$0xff] %v585
        %632 = vst [vmem:[#allocation2 + $0x60] sm:$0xff] %v586
        %633 = vst [vmem:[#allocation2 + $0x68] sm:$0xff] %v587
        %634 = vst [vmem:[#allocation2 + $0x70] sm:$0xff] %v588
        %635 = vst [vmem:[#allocation2 + $0x78] sm:$0xff] %v589
        %636 = vrot.lane.b32.xlu0 %v582, 127
        %v637 = vpop.permute.xlu0 %636
        %638 = vrot.lane.b32.xlu0 %v583, 127
        %v639 = vpop.permute.xlu0 %638
        %640 = vrot.lane.b32.xlu0 %v584, 127
        %v641 = vpop.permute.xlu0 %640
        %642 = vrot.lane.b32.xlu0 %v585, 127
        %v643 = vpop.permute.xlu0 %642
        %644 = vrot.lane.b32.xlu0 %v586, 127
        %v645 = vpop.permute.xlu0 %644
        %646 = vrot.lane.b32.xlu0 %v587, 127
        %v647 = vpop.permute.xlu0 %646
        %648 = vrot.lane.b32.xlu0 %v588, 127
        %v649 = vpop.permute.xlu0 %648
        %650 = vrot.lane.b32.xlu0 %v589, 127
        %v651 = vpop.permute.xlu0 %650
        %v653 = vlaneseq
        %v654 = vshrl.u32 %v653, 7
        %v655 = vsub.s32 0, %v654
        %v656 = vrot.slane %v368, %v655
        %v658 = vmul.f32 %v637, %v656
        %v659 = vmul.f32 %v639, %v656
        %v660 = vmul.f32 %v641, %v656
        %v661 = vmul.f32 %v643, %v656
        %v662 = vmul.f32 %v645, %v656
        %v663 = vmul.f32 %v647, %v656
        %v664 = vmul.f32 %v649, %v656
        %v665 = vmul.f32 %v651, %v656
        %666 = vst [vmem:[#allocation2 + $0x80] sm:$0xff] %v658
        %667 = vst [vmem:[#allocation2 + $0x88] sm:$0xff] %v659
        %668 = vst [vmem:[#allocation2 + $0x90] sm:$0xff] %v660
        %669 = vst [vmem:[#allocation2 + $0x98] sm:$0xff] %v661
        %670 = vst [vmem:[#allocation2 + $0xa0] sm:$0xff] %v662
        %671 = vst [vmem:[#allocation2 + $0xa8] sm:$0xff] %v663
        %672 = vst [vmem:[#allocation2 + $0xb0] sm:$0xff] %v664
        %673 = vst [vmem:[#allocation2 + $0xb8] sm:$0xff] %v665
        %v674 = vld [vmem:[#allocation2] sm:$0xff]
        %v675 = vld [vmem:[#allocation2 + $0x8] sm:$0xff]
        %v676 = vld [vmem:[#allocation2 + $0x10] sm:$0xff]
        %v677 = vld [vmem:[#allocation2 + $0x18] sm:$0xff]
        %v678 = vld [vmem:[#allocation2 + $0x20] sm:$0xff]
        %v679 = vld [vmem:[#allocation2 + $0x28] sm:$0xff]
        %v680 = vld [vmem:[#allocation2 + $0x30] sm:$0xff]
        %v681 = vld [vmem:[#allocation2 + $0x38] sm:$0xff]
        %v682 = vld [vmem:[#allocation2 + $0x40] sm:$0xff]
        %v683 = vld [vmem:[#allocation2 + $0x48] sm:$0xff]
        %v684 = vld [vmem:[#allocation2 + $0x50] sm:$0xff]
        %v685 = vld [vmem:[#allocation2 + $0x58] sm:$0xff]
        %v686 = vld [vmem:[#allocation2 + $0x60] sm:$0xff]
        %v687 = vld [vmem:[#allocation2 + $0x68] sm:$0xff]
        %v688 = vld [vmem:[#allocation2 + $0x70] sm:$0xff]
        %v689 = vld [vmem:[#allocation2 + $0x78] sm:$0xff]
        %v690 = vld [vmem:[#allocation2 + $0x80] sm:$0xff]
        %v691 = vld [vmem:[#allocation2 + $0x88] sm:$0xff]
        %v692 = vld [vmem:[#allocation2 + $0x90] sm:$0xff]
        %v693 = vld [vmem:[#allocation2 + $0x98] sm:$0xff]
        %v694 = vld [vmem:[#allocation2 + $0xa0] sm:$0xff]
        %v695 = vld [vmem:[#allocation2 + $0xa8] sm:$0xff]
        %v696 = vld [vmem:[#allocation2 + $0xb0] sm:$0xff]
        %v697 = vld [vmem:[#allocation2 + $0xb8] sm:$0xff]
        %699 = vset.pattern.permute.xlu0 0
        %700 = vperm.xlu0 %699, %v357
        %v701 = vpop.permute.xlu0 %700
        %704 = vset.pattern.permute.xlu0 0
        %705 = vperm.xlu0 %704, %v358
        %v706 = vpop.permute.xlu0 %705
        %709 = vset.pattern.permute.xlu0 0
        %710 = vperm.xlu0 %709, %v359
        %v711 = vpop.permute.xlu0 %710
        %714 = vset.pattern.permute.xlu0 0
        %715 = vperm.xlu0 %714, %v360
        %v716 = vpop.permute.xlu0 %715
        %719 = vset.pattern.permute.xlu0 0
        %720 = vperm.xlu0 %719, %v361
        %v721 = vpop.permute.xlu0 %720
        %724 = vset.pattern.permute.xlu0 0
        %725 = vperm.xlu0 %724, %v362
        %v726 = vpop.permute.xlu0 %725
        %729 = vset.pattern.permute.xlu0 0
        %730 = vperm.xlu0 %729, %v363
        %v731 = vpop.permute.xlu0 %730
        %734 = vset.pattern.permute.xlu0 0
        %735 = vperm.xlu0 %734, %v364
        %v736 = vpop.permute.xlu0 %735
        %vm738 = vcmask 523264
        %v740 = vsel %vm738, %v342, 0
        %v743 = vsel %vm738, %v344, 0
        %v746 = vsel %vm738, %v346, 0
        %v749 = vsel %vm738, %v348, 0
        %v752 = vsel %vm738, %v350, 0
        %v755 = vsel %vm738, %v352, 0
        %v758 = vsel %vm738, %v354, 0
        %v761 = vsel %vm738, %v356, 0
        %763 = vmatprep.subr.mxu0 0.0
        %764 = vmatpush1.msra.mxu0 %v674
        %765 = vmatprep.subr.mxu0 0.0
        %766 = vmatpush1.msra.mxu0 %v675
        %767 = vmatprep.subr.mxu0 0.0
        %768 = vmatpush1.msra.mxu0 %v676
        %769 = vmatprep.subr.mxu0 0.0
        %770 = vmatpush1.msra.mxu0 %v677
        %771 = vmatprep.subr.mxu0 0.0
        %772 = vmatpush1.msra.mxu0 %v678
        %773 = vmatprep.subr.mxu0 0.0
        %774 = vmatpush1.msra.mxu0 %v679
        %775 = vmatprep.subr.mxu0 0.0
        %776 = vmatpush1.msra.mxu0 %v680
        %777 = vmatprep.subr.mxu0 0.0
        %778 = vmatpush1.msra.mxu0 %v681
        %779 = vmatprep.subr.mxu0 0.0
        %780 = vmatpush1.msra.mxu0 %v682
        %781 = vmatprep.subr.mxu0 0.0
        %782 = vmatpush1.msra.mxu0 %v683
        %783 = vmatprep.subr.mxu0 0.0
        %784 = vmatpush1.msra.mxu0 %v684
        %785 = vmatprep.subr.mxu0 0.0
        %786 = vmatpush1.msra.mxu0 %v685
        %787 = vmatprep.subr.mxu0 0.0
        %788 = vmatpush1.msra.mxu0 %v686
        %789 = vmatprep.subr.mxu0 0.0
        %790 = vmatpush1.msra.mxu0 %v687
        %791 = vmatprep.subr.mxu0 0.0
        %792 = vmatpush1.msra.mxu0 %v688
        %793 = vmatprep.subr.mxu0 0.0
        %794 = vmatpush1.msra.mxu0 %v689
        %795 = vmatprep.subr.mxu0 0.0
        %796 = vmatpush1.msra.mxu0 %v690
        %797 = vmatprep.subr.mxu0 0.0
        %798 = vmatpush1.msra.mxu0 %v691
        %799 = vmatprep.subr.mxu0 0.0
        %800 = vmatpush1.msra.mxu0 %v692
        %801 = vmatprep.subr.mxu0 0.0
        %802 = vmatpush1.msra.mxu0 %v693
        %803 = vmatprep.subr.mxu0 0.0
        %804 = vmatpush1.msra.mxu0 %v694
        %805 = vmatprep.subr.mxu0 0.0
        %806 = vmatpush1.msra.mxu0 %v695
        %807 = vmatprep.subr.mxu0 0.0
        %808 = vmatpush1.msra.mxu0 %v696
        %809 = vmatprep.subr.mxu0 0.0
        %810 = vmatpush1.msra.mxu0 %v697
        %811 = vmatprep.subr.mxu0 0.0
        %812 = vmatpush1.msra.mxu0 0.0
        %813 = vmatprep.subr.mxu0 0.0
        %814 = vmatpush1.msra.mxu0 0.0
        %815 = vmatprep.subr.mxu0 0.0
        %816 = vmatpush1.msra.mxu0 0.0
        %817 = vmatprep.subr.mxu0 0.0
        %818 = vmatpush1.msra.mxu0 0.0
        %819 = vmatprep.subr.mxu0 0.0
        %820 = vmatpush1.msra.mxu0 0.0
        %821 = vmatprep.subr.mxu0 0.0
        %822 = vmatpush1.msra.mxu0 0.0
        %823 = vmatprep.subr.mxu0 0.0
        %824 = vmatpush1.msra.mxu0 0.0
        %825 = vmatprep.subr.mxu0 0.0
        %826 = vmatpush1.msra.mxu0 0.0
        %827 = vmatprep.mubr.f32.mxu0 %v740
        %828 = vmatmul.mubr.f32.gmra.mrb[0].mxu0 %v341
        %v829 = vpop.f32.mrb[0].mxu0
        %v830 = vadd.f32 %v701, %v829
        %v831 = vpop.f32.mrb[0].mxu0
        %832 = vmatprep.mubr.f32.mxu0 %v743
        %833 = vmatmul.mubr.f32.gmra.mrb[0].mxu0 %v343
        %v834 = vpop.f32.mrb[0].mxu0
        %v835 = vadd.f32 %v706, %v834
        %v836 = vpop.f32.mrb[0].mxu0
        %837 = vmatprep.mubr.f32.mxu0 %v746
        %838 = vmatmul.mubr.f32.gmra.mrb[0].mxu0 %v345
        %v839 = vpop.f32.mrb[0].mxu0
        %v840 = vadd.f32 %v711, %v839
        %v841 = vpop.f32.mrb[0].mxu0
        %842 = vmatprep.mubr.f32.mxu0 %v749
        %843 = vmatmul.mubr.f32.gmra.mrb[0].mxu0 %v347
        %v844 = vpop.f32.mrb[0].mxu0
        %v845 = vadd.f32 %v716, %v844
        %v846 = vpop.f32.mrb[0].mxu0
        %847 = vmatprep.mubr.f32.mxu0 %v752
        %848 = vmatmul.mubr.f32.gmra.mrb[0].mxu0 %v349
        %v849 = vpop.f32.mrb[0].mxu0
        %v850 = vadd.f32 %v721, %v849
        %v851 = vpop.f32.mrb[0].mxu0
        %852 = vmatprep.mubr.f32.mxu0 %v755
        %853 = vmatmul.mubr.f32.gmra.mrb[0].mxu0 %v351
        %v854 = vpop.f32.mrb[0].mxu0
        %v855 = vadd.f32 %v726, %v854
        %v856 = vpop.f32.mrb[0].mxu0
        %857 = vmatprep.mubr.f32.mxu0 %v758
        %858 = vmatmul.mubr.f32.gmra.mrb[0].mxu0 %v353
        %v859 = vpop.f32.mrb[0].mxu0
        %v860 = vadd.f32 %v731, %v859
        %v861 = vpop.f32.mrb[0].mxu0
        %862 = vmatprep.mubr.f32.mxu0 %v761
        %863 = vmatmul.mubr.f32.gmra.mrb[0].mxu0 %v355
        %v864 = vpop.f32.mrb[0].mxu0
        %v865 = vadd.f32 %v736, %v864
        %v866 = vpop.f32.mrb[0].mxu0
        %867 = vdwg.mxu0
        %v868 = vmax.f32 %v830, 0.0
        %v869 = vmax.f32 %v835, 0.0
        %v870 = vmax.f32 %v840, 0.0
        %v871 = vmax.f32 %v845, 0.0
        %v872 = vmax.f32 %v850, 0.0
        %v873 = vmax.f32 %v855, 0.0
        %v874 = vmax.f32 %v860, 0.0
        %v875 = vmax.f32 %v865, 0.0
        %v877 = vsel %vm738, %v365, 0
        %879 = vmatprep.subr.mxu0 0.0
        %880 = vmatpush1.msra.mxu0 %v868
        %881 = vmatprep.subr.mxu0 0.0
        %882 = vmatpush1.msra.mxu0 %v869
        %883 = vmatprep.subr.mxu0 0.0
        %884 = vmatpush1.msra.mxu0 %v870
        %885 = vmatprep.subr.mxu0 0.0
        %886 = vmatpush1.msra.mxu0 %v871
        %887 = vmatprep.subr.mxu0 0.0
        %888 = vmatpush1.msra.mxu0 %v872
        %889 = vmatprep.subr.mxu0 0.0
        %890 = vmatpush1.msra.mxu0 %v873
        %891 = vmatprep.subr.mxu0 0.0
        %892 = vmatpush1.msra.mxu0 %v874
        %893 = vmatprep.subr.mxu0 0.0
        %894 = vmatpush1.msra.mxu0 %v875
        %895 = vmatprep.subr.mxu0 0.0
        %896 = vmatpush1.msra.mxu0 0.0
        %897 = vmatprep.subr.mxu0 0.0
        %898 = vmatpush1.msra.mxu0 0.0
        %899 = vmatprep.subr.mxu0 0.0
        %900 = vmatpush1.msra.mxu0 0.0
        %901 = vmatprep.subr.mxu0 0.0
        %902 = vmatpush1.msra.mxu0 0.0
        %903 = vmatprep.subr.mxu0 0.0
        %904 = vmatpush1.msra.mxu0 0.0
        %905 = vmatprep.subr.mxu0 0.0
        %906 = vmatpush1.msra.mxu0 0.0
        %907 = vmatprep.subr.mxu0 0.0
        %908 = vmatpush1.msra.mxu0 0.0
        %909 = vmatprep.subr.mxu0 0.0
        %910 = vmatpush1.msra.mxu0 0.0
        %911 = vmatprep.subr.mxu0 0.0
        %912 = vmatpush1.msra.mxu0 0.0
        %913 = vmatprep.subr.mxu0 0.0
        %914 = vmatpush1.msra.mxu0 0.0
        %915 = vmatprep.subr.mxu0 0.0
        %916 = vmatpush1.msra.mxu0 0.0
        %917 = vmatprep.subr.mxu0 0.0
        %918 = vmatpush1.msra.mxu0 0.0
        %919 = vmatprep.subr.mxu0 0.0
        %920 = vmatpush1.msra.mxu0 0.0
        %921 = vmatprep.subr.mxu0 0.0
        %922 = vmatpush1.msra.mxu0 0.0
        %923 = vmatprep.subr.mxu0 0.0
        %924 = vmatpush1.msra.mxu0 0.0
        %925 = vmatprep.subr.mxu0 0.0
        %926 = vmatpush1.msra.mxu0 0.0
        %927 = vmatprep.subr.mxu0 0.0
        %928 = vmatpush1.msra.mxu0 0.0
        %929 = vmatprep.subr.mxu0 0.0
        %930 = vmatpush1.msra.mxu0 0.0
        %931 = vmatprep.subr.mxu0 0.0
        %932 = vmatpush1.msra.mxu0 0.0
        %933 = vmatprep.subr.mxu0 0.0
        %934 = vmatpush1.msra.mxu0 0.0
        %935 = vmatprep.subr.mxu0 0.0
        %936 = vmatpush1.msra.mxu0 0.0
        %937 = vmatprep.subr.mxu0 0.0
        %938 = vmatpush1.msra.mxu0 0.0
        %939 = vmatprep.subr.mxu0 0.0
        %940 = vmatpush1.msra.mxu0 0.0
        %941 = vmatprep.subr.mxu0 0.0
        %942 = vmatpush1.msra.mxu0 0.0
        %943 = vmatprep.mubr.f32.mxu0 0.0
        %944 = vmatmul.mubr.f32.gmra.mrb[0].mxu0 %v877
        %v945 = vpop.f32.mrb[0].mxu0
        %v946 = vadd.f32 0.0, %v945
        %v947 = vpop.f32.mrb[0].mxu0
        %948 = vdwg.mxu0
        %949 = vrot.lane.b32.xlu0 %v946, 1
        %v950 = vpop.permute.xlu0 %949
        %v951 = vmul.f32 %v950, %v367
        %v953 = vrot.slane %v946, 1
        %v955 = vadd.f32 %v951, %v953
        %v956 = vrot.slane %v946, 2
        %958 = vrot.lane.b32.xlu0 %v956, 127
        %v959 = vpop.permute.xlu0 %958
        %v960 = vmul.f32 %v959, %v368
        %v961 = vadd.f32 %v955, %v960
        %v962 = vstv %s366
        %v963 = vadd.f32 %v961, %v962
        %964 = vst [vmem:[%s321] sm:$0x1] %v963
        %s965 = sand.u32 %s226, 1
        %s966 = scalar_lea.sflag [#allocation5], %s965
        %s967 = sand.u32 %s226, 1
        %s968 = scalar_lea.vmem [#allocation4], %s967
        // Predicated region
        $region57: #{tpu_custom_call.1} parent=55 // pred_check
          %p969 = pneg %p236
        $region58: #{tpu_custom_call.1} parent=55 // pred_check_branch
          %971 = sbr.rel (%p969) target = $region60
        $region59: #{tpu_custom_call.1} parent=55 // pred_region
          %s973 = ssub.s32 16, 16
          %974 = vsyncadd %s966, %s973
          %s975 = smul.addr %s24, 16
          %s976 = scalar_lea.hbm %s9, %s975
          %s978 = sshll.u32 %s968, 4
          %s979 = int_to_ptr.vmem [resolvable:$true] %s978
          %981 = dma.vmem_to_hbm [thread:$0]  %s979, 16, %s976, %s966
        $region60: #{tpu_custom_call.1} parent=55 // pred_fallthru
          _
      $region56: #{tpu_custom_call.1} parent=5 // pred_fallthru
        _
      %p982 = scmp.le.s32.totalorder 2, %s19
      // Predicated region
      $region61: #{tpu_custom_call.1} parent=5 // pred_check
        %p983 = pneg %p982
      $region62: #{tpu_custom_call.1} parent=5 // pred_check_branch
        %985 = sbr.rel (%p983) target = $region64
      $region63: #{tpu_custom_call.1} parent=5 // pred_region
        %s986 = ssub.s32 %s19, 2
        // Predicated region
        $region65: #{tpu_custom_call.1} parent=63 // pred_check
          %p987 = pneg %p242
        $region66: #{tpu_custom_call.1} parent=63 // pred_check_branch
          %989 = sbr.rel (%p987) target = $region68
        $region67: #{tpu_custom_call.1} parent=63 // pred_region
          %s990 = sand.u32 %s227, 1
          %s991 = scalar_lea.sflag [#allocation5], %s990
          %s992 = sand.u32 %s227, 1
          %s993 = scalar_lea.vmem [#allocation4], %s992
          %994 = dma.done %s991, 16
        $region68: #{tpu_custom_call.1} parent=63 // pred_fallthru
          _
      $region64: #{tpu_custom_call.1} parent=5 // pred_fallthru
        _
    $region6: #{tpu_custom_call.1} parent=1 // loop_footer
      %s23 = sadd.s32 1, %s19
    $region7: #{tpu_custom_call.1} parent=1 // loop_footer_branch
      %18 = sbr.rel target = $region3
    $region8: #{tpu_custom_call.1} parent=1 // loop_exit
      _
    %995 = vsyncpa [#allocation5], 1
    %s996 = scalar_lea.sflag [#allocation5], 1
    %997 = vsyncpa %s996, 1

</llo_original>
